<compile_context>
chip_gen: v7x
topology: tpu7x:2x2x1
jax: 0.10.0
libtpu: 0.0.40
codegen_flags: <defaults>
</compile_context>

<pallas_src>
import jax
import jax.numpy as jnp
from jax import lax
from jax.experimental import pallas as pl
from jax.experimental.pallas import tpu as pltpu


# ----------------------------- fused forward kernel -----------------------------
def make_fused_kernel(num_layers, T, Bp, H):
    """kernel(emb, [w_ih_l, w_hh_l, b_l]*L, w_out, b_out, out, gbuf, hbuf, h_sc, c_sc)."""

    def kernel(*refs):
        emb_ref = refs[0]
        layer_refs = refs[1:1 + 3 * num_layers]
        w_out_ref = refs[1 + 3 * num_layers]
        b_out_ref = refs[2 + 3 * num_layers]
        out_ref = refs[3 + 3 * num_layers]
        gbuf_ref, hbuf_ref, h_sc, c_sc = refs[4 + 3 * num_layers:]

        # layer-0 input: (T*Bp, E), time-major, batch padded to a sublane multiple
        x_prev = emb_ref[...].reshape(T * Bp, emb_ref.shape[-1])

        for l in range(num_layers):
            w_ih_ref, w_hh_ref, b_ref = layer_refs[3 * l:3 * l + 3]

            # Hoisted input projection (+ bias) for ALL timesteps at once: one big MXU
            # matmul instead of T tiny ones inside the serial recurrence.
            gbuf_ref[...] = (
                jnp.dot(x_prev, w_ih_ref[...], preferred_element_type=jnp.float32)
                + b_ref[...])

            h_sc[...] = jnp.zeros_like(h_sc)
            c_sc[...] = jnp.zeros_like(c_sc)
            w_hh = w_hh_ref[...]  # hoisted load, reused every step

            def step(t, carry, w_hh=w_hh):
                row = pl.multiple_of(t * Bp, Bp)
                gates = (gbuf_ref[pl.ds(row, Bp), :]
                         + jnp.dot(h_sc[...], w_hh,
                                   preferred_element_type=jnp.float32))
                # gate layout (i, f, o, g): one sigmoid over 3H lanes, one tanh over H
                sig = jax.nn.sigmoid(gates[:, :3 * H])
                g_g = jnp.tanh(gates[:, 3 * H:])
                i_g = sig[:, :H]
                f_g = sig[:, H:2 * H]
                o_g = sig[:, 2 * H:3 * H]
                c_new = f_g * c_sc[...] + i_g * g_g
                h_new = o_g * jnp.tanh(c_new)
                c_sc[...] = c_new
                h_sc[...] = h_new
                hbuf_ref[pl.ds(row, Bp), :] = h_new
                return carry

            # short fixed trip-count: fully unrolled for LLO scheduler visibility
            lax.fori_loop(0, T, step, 0, unroll=True)

            if l + 1 < num_layers:
                x_prev = hbuf_ref[...]  # (T*Bp, H): input for next layer's projection

        # Dropout is identity in inference mode; project last-timestep hidden state.
        # TODO(synk): for realistic vocab sizes, tile this projection over V with a grid
        # instead of loading the full (H, V) w_out into VMEM (v7x has only 64 MiB VMEM).
        out_ref[...] = (jnp.dot(h_sc[...], w_out_ref[...],
                                preferred_element_type=jnp.float32)
                        + b_out_ref[...]).astype(out_ref.dtype)

    return kernel


# ----------------------------- wrapper -----------------------------
@jax.jit
def lstm_lm_forward(kparams, tokens):
    """kparams: kernel-layout params (gate order i,f,o,g). tokens: (B, T) int32."""
    B, T = tokens.shape
    E = kparams["embedding"].shape[1]
    H = kparams["lstm"][0]["w_hh"].shape[0]
    V = kparams["w_out"].shape[1]
    L = len(kparams["lstm"])

    # glue: embedding gather + time-major layout + sublane (batch) zero-padding
    emb = jnp.take(kparams["embedding"], tokens, axis=0)        # (B, T, E)
    x = jnp.transpose(emb, (1, 0, 2)).astype(jnp.float32)       # (T, B, E)
    Bp = ((B + 7) // 8) * 8
    if Bp != B:
        x = jnp.pad(x, ((0, 0), (0, Bp - B), (0, 0)))

    inputs = [x]
    in_specs = [pl.BlockSpec((T, Bp, E), lambda i: (0, 0, 0))]
    for layer in kparams["lstm"]:
        for name in ("w_ih", "w_hh", "bias"):
            w = layer[name]
            inputs.append(w)
            in_specs.append(pl.BlockSpec(w.shape, lambda i, nd=w.ndim: (0,) * nd))
    for w in (kparams["w_out"], kparams["b_out"]):
        inputs.append(w)
        in_specs.append(pl.BlockSpec(w.shape, lambda i, nd=w.ndim: (0,) * nd))

    kernel = make_fused_kernel(L, T, Bp, H)
    logits_p = pl.pallas_call(
        kernel,
        out_shape=jax.ShapeDtypeStruct((Bp, V), jnp.float32),
        grid_spec=pltpu.PrefetchScalarGridSpec(
            num_scalar_prefetch=0,
            grid=(1,),  # whole forward in a single kernel invocation
            in_specs=in_specs,
            out_specs=pl.BlockSpec((Bp, V), lambda i: (0, 0)),
            scratch_shapes=[
                pltpu.VMEM((T * Bp, 4 * H), jnp.float32),   # all-timestep gate pre-activations
                pltpu.VMEM((T * Bp, H), jnp.float32),       # all-timestep layer outputs
                pltpu.VMEM((Bp, H), jnp.float32),           # hidden-state carry
                pltpu.VMEM((Bp, H), jnp.float32),           # cell-state carry
            ]),
        compiler_params=pltpu.CompilerParams(
            dimension_semantics=("arbitrary",)),
    )(*inputs)
    return logits_p[:B]


# ----------------------------- gate reordering (PyTorch ifgo -> kernel ifog) ---------------
def _reorder_gates(w, H):
    return jnp.concatenate(
        [w[..., :H], w[..., H:2 * H], w[..., 3 * H:4 * H], w[..., 2 * H:3 * H]], axis=-1)


def prepare_kernel_params(params, H):
    layers = []
    for layer in params["lstm"]:
        layers.append({
            "w_ih": _reorder_gates(layer["w_ih"], H),
            "w_hh": _reorder_gates(layer["w_hh"], H),
            "bias": _reorder_gates(layer["bias"], H),
        })
    return {"embedding": params["embedding"], "lstm": layers,
            "w_out": params["w_out"], "b_out": params["b_out"].reshape(1, -1)}


# ----------------------------- Pure-JAX reference (PyTorch gate order i,f,g,o) -------------
def lstm_layer_ref(x_tbe, w_ih, w_hh, bias):
    H = w_hh.shape[0]

    def step(carry, x_t):
        h, c = carry
        gates = x_t @ w_ih + h @ w_hh + bias[0]
        i = jax.nn.sigmoid(gates[:, :H])
        f = jax.nn.sigmoid(gates[:, H:2 * H])
        g = jnp.tanh(gates[:, 2 * H:3 * H])
        o = jax.nn.sigmoid(gates[:, 3 * H:])
        c = f * c + i * g
        h = o * jnp.tanh(c)
        return (h, c), h

    B = x_tbe.shape[1]
    init = (jnp.zeros((B, H), jnp.float32), jnp.zeros((B, H), jnp.float32))
    _, ys = jax.lax.scan(step, init, x_tbe)
    return ys


def forward_ref(params, tokens):
    emb = jnp.take(params["embedding"], tokens, axis=0)
    x = jnp.transpose(emb, (1, 0, 2))
    for layer in params["lstm"]:
        x = lstm_layer_ref(x, layer["w_ih"], layer["w_hh"], layer["bias"])
    h_last = x[-1]
    return h_last @ params["w_out"] + params["b_out"]


# ----------------------------- Deterministic parameter construction -----------------------------
def init_params(key, vocab_size, embedding_dim, lstm_layers, lstm_dim, padding_idx):
    keys = jax.random.split(key, 3 + 4 * lstm_layers)
    scale = 0.1
    embedding = jax.random.uniform(keys[0], (vocab_size, embedding_dim),
                                   jnp.float32, -scale, scale)
    embedding = embedding.at[padding_idx].set(0.0)  # padding_idx row is zero

    layers = []
    for l in range(lstm_layers):
        in_dim = embedding_dim if l == 0 else lstm_dim
        k0, k1, k2, k3 = keys[1 + 4 * l: 5 + 4 * l]
        w_ih = jax.random.uniform(k0, (in_dim, 4 * lstm_dim), jnp.float32, -scale, scale)
        w_hh = jax.random.uniform(k1, (lstm_dim, 4 * lstm_dim), jnp.float32, -scale, scale)
        b_ih = jax.random.uniform(k2, (4 * lstm_dim,), jnp.float32, -scale, scale)
        b_hh = jax.random.uniform(k3, (4 * lstm_dim,), jnp.float32, -scale, scale)
        layers.append({"w_ih": w_ih, "w_hh": w_hh,
                       "bias": (b_ih + b_hh).reshape(1, 4 * lstm_dim)})

    w_out = jax.random.uniform(keys[-2], (lstm_dim, vocab_size), jnp.float32, -scale, scale)
    b_out = jax.random.uniform(keys[-1], (vocab_size,), jnp.float32, -scale, scale)
    return {"embedding": embedding, "lstm": layers, "w_out": w_out, "b_out": b_out}


if __name__ == "__main__":
    # Small config consistent with the module's constructor
    vocab_size = 128
    embedding_dim = 32
    lstm_layers = 2
    lstm_dim = 32
    padding_idx = 0
    batch = 2
    seq_len = 8

    key = jax.random.PRNGKey(0)
    pkey, tkey = jax.random.split(key)
    params = init_params(pkey, vocab_size, embedding_dim, lstm_layers, lstm_dim, padding_idx)
    tokens = jax.random.randint(tkey, (batch, seq_len), 0, vocab_size, dtype=jnp.int32)

    kparams = prepare_kernel_params(params, lstm_dim)   # reorder gates (i,f,g,o)->(i,f,o,g)
    logits = jax.block_until_ready(lstm_lm_forward(kparams, tokens))
    assert logits.shape == (batch, vocab_size)

    ref = jax.block_until_ready(forward_ref(params, tokens))
    assert jnp.allclose(logits, ref, atol=1e-4, rtol=1e-4), "mismatch vs pure-JAX reference"

    print("KERNEL_OK")
</pallas_src>

<mosaic_0001>
module attributes {stable_mosaic.version = 11 : i64} {
  func.func @kernel(%arg0: i32, %arg1: memref<8x8x32xf32, #tpu.memory_space<vmem>>, %arg2: memref<32x128xf32, #tpu.memory_space<vmem>>, %arg3: memref<32x128xf32, #tpu.memory_space<vmem>>, %arg4: memref<1x128xf32, #tpu.memory_space<vmem>>, %arg5: memref<32x128xf32, #tpu.memory_space<vmem>>, %arg6: memref<32x128xf32, #tpu.memory_space<vmem>>, %arg7: memref<1x128xf32, #tpu.memory_space<vmem>>, %arg8: memref<32x128xf32, #tpu.memory_space<vmem>>, %arg9: memref<1x128xf32, #tpu.memory_space<vmem>>, %arg10: memref<8x128xf32, #tpu.memory_space<vmem>>, %arg11: memref<64x128xf32, #tpu.memory_space<vmem>>, %arg12: memref<64x32xf32, #tpu.memory_space<vmem>>, %arg13: memref<8x32xf32, #tpu.memory_space<vmem>>, %arg14: memref<8x32xf32, #tpu.memory_space<vmem>>) attributes {dimension_semantics = [#tpu.dimension_semantics<arbitrary>], iteration_bounds = array<i64: 1>, scalar_prefetch = 0 : i64, scratch_operands = 4 : i64, tpu.core_type = #tpu.core_type<tc>, window_params = [{pipeline_mode = #tpu.pipeline_mode<synchronous>, transform_indices = @transform_0, window_bounds = array<i64: 8, 8, 32>}, {pipeline_mode = #tpu.pipeline_mode<synchronous>, transform_indices = @transform_1, window_bounds = array<i64: 32, 128>}, {pipeline_mode = #tpu.pipeline_mode<synchronous>, transform_indices = @transform_2, window_bounds = array<i64: 32, 128>}, {pipeline_mode = #tpu.pipeline_mode<synchronous>, transform_indices = @transform_3, window_bounds = array<i64: 1, 128>}, {pipeline_mode = #tpu.pipeline_mode<synchronous>, transform_indices = @transform_4, window_bounds = array<i64: 32, 128>}, {pipeline_mode = #tpu.pipeline_mode<synchronous>, transform_indices = @transform_5, window_bounds = array<i64: 32, 128>}, {pipeline_mode = #tpu.pipeline_mode<synchronous>, transform_indices = @transform_6, window_bounds = array<i64: 1, 128>}, {pipeline_mode = #tpu.pipeline_mode<synchronous>, transform_indices = @transform_7, window_bounds = array<i64: 32, 128>}, {pipeline_mode = #tpu.pipeline_mode<synchronous>, transform_indices = @transform_8, window_bounds = array<i64: 1, 128>}, {pipeline_mode = #tpu.pipeline_mode<synchronous>, transform_indices = @transform_9, window_bounds = array<i64: 8, 128>}]} {
    %c0 = arith.constant 0 : index
    %c0_0 = arith.constant 0 : index
    %c0_1 = arith.constant 0 : index
    %0 = vector.load %arg1[%c0, %c0_0, %c0_1] : memref<8x8x32xf32, #tpu.memory_space<vmem>>, vector<8x8x32xf32>
    %1 = vector.shape_cast %0 : vector<8x8x32xf32> to vector<64x32xf32>
    %c0_2 = arith.constant 0 : index
    %c0_3 = arith.constant 0 : index
    %2 = vector.load %arg2[%c0_2, %c0_3] : memref<32x128xf32, #tpu.memory_space<vmem>>, vector<32x128xf32>
    %cst = arith.constant dense<0.000000e+00> : vector<64x128xf32>
    %3 = tpu.matmul %1, %2, %cst {dimension_numbers = #tpu.dot_dimension_numbers<[1], [0], [0], [1], [0, 0, 1, 1], [], []>} : vector<64x32xf32>, vector<32x128xf32>, vector<64x128xf32> -> vector<64x128xf32>
    %c0_4 = arith.constant 0 : index
    %c0_5 = arith.constant 0 : index
    %4 = vector.load %arg4[%c0_4, %c0_5] : memref<1x128xf32, #tpu.memory_space<vmem>>, vector<1x128xf32>
    %5 = vector.broadcast %4 : vector<1x128xf32> to vector<64x128xf32>
    %6 = arith.addf %3, %5 : vector<64x128xf32>
    %c0_6 = arith.constant 0 : index
    %c0_7 = arith.constant 0 : index
    %7 = vector.load %arg11[%c0_6, %c0_7] : memref<64x128xf32, #tpu.memory_space<vmem>>, vector<64x128xf32>
    tpu.vector_store %arg11[%c0_6, %c0_7], %6 {strides = array<i32>} : memref<64x128xf32, #tpu.memory_space<vmem>>, vector<64x128xf32>,
    %cst_8 = arith.constant 0.000000e+00 : f32
    %8 = vector.broadcast %cst_8 : f32 to vector<8x32xf32>
    %c0_9 = arith.constant 0 : index
    %c0_10 = arith.constant 0 : index
    %9 = vector.load %arg13[%c0_9, %c0_10] : memref<8x32xf32, #tpu.memory_space<vmem>>, vector<8x32xf32>
    tpu.vector_store %arg13[%c0_9, %c0_10], %8 {strides = array<i32>} : memref<8x32xf32, #tpu.memory_space<vmem>>, vector<8x32xf32>,
    %cst_11 = arith.constant 0.000000e+00 : f32
    %10 = vector.broadcast %cst_11 : f32 to vector<8x32xf32>
    %c0_12 = arith.constant 0 : index
    %c0_13 = arith.constant 0 : index
    %11 = vector.load %arg14[%c0_12, %c0_13] : memref<8x32xf32, #tpu.memory_space<vmem>>, vector<8x32xf32>
    tpu.vector_store %arg14[%c0_12, %c0_13], %10 {strides = array<i32>} : memref<8x32xf32, #tpu.memory_space<vmem>>, vector<8x32xf32>,
    %c0_14 = arith.constant 0 : index
    %c0_15 = arith.constant 0 : index
    %12 = vector.load %arg3[%c0_14, %c0_15] : memref<32x128xf32, #tpu.memory_space<vmem>>, vector<32x128xf32>
    %c0_i32 = arith.constant 0 : i32
    %c8_i32 = arith.constant 8 : i32
    %13 = arith.muli %c0_i32, %c8_i32 : i32
    %14 = tpu.assume_multiple %13, 8 : i32
    %15 = arith.index_cast %14 : i32 to index
    %c0_16 = arith.constant 0 : index
    %16 = vector.load %arg11[%15, %c0_16] : memref<64x128xf32, #tpu.memory_space<vmem>>, vector<8x128xf32>
    %c0_17 = arith.constant 0 : index
    %c0_18 = arith.constant 0 : index
    %17 = vector.load %arg13[%c0_17, %c0_18] : memref<8x32xf32, #tpu.memory_space<vmem>>, vector<8x32xf32>
    %cst_19 = arith.constant dense<0.000000e+00> : vector<8x128xf32>
    %18 = tpu.matmul %17, %12, %cst_19 {dimension_numbers = #tpu.dot_dimension_numbers<[1], [0], [0], [1], [0, 0, 1, 1], [], []>} : vector<8x32xf32>, vector<32x128xf32>, vector<8x128xf32> -> vector<8x128xf32>
    %19 = arith.addf %16, %18 : vector<8x128xf32>
    %20 = vector.extract_strided_slice %19 {offsets = [0, 0], sizes = [8, 96], strides = [1, 1]} : vector<8x128xf32> to vector<8x96xf32>
    %21 = arith.negf %20 : vector<8x96xf32>
    %22 = math.exp %21 : vector<8x96xf32>
    %cst_20 = arith.constant 1.000000e+00 : f32
    %23 = vector.broadcast %cst_20 : f32 to vector<8x96xf32>
    %24 = arith.addf %23, %22 : vector<8x96xf32>
    %25 = arith.divf %23, %24 : vector<8x96xf32>
    %26 = vector.extract_strided_slice %19 {offsets = [0, 96], sizes = [8, 32], strides = [1, 1]} : vector<8x128xf32> to vector<8x32xf32>
    %27 = math.tanh %26 : vector<8x32xf32>
    %28 = vector.extract_strided_slice %25 {offsets = [0, 0], sizes = [8, 32], strides = [1, 1]} : vector<8x96xf32> to vector<8x32xf32>
    %29 = vector.extract_strided_slice %25 {offsets = [0, 32], sizes = [8, 32], strides = [1, 1]} : vector<8x96xf32> to vector<8x32xf32>
    %30 = vector.extract_strided_slice %25 {offsets = [0, 64], sizes = [8, 32], strides = [1, 1]} : vector<8x96xf32> to vector<8x32xf32>
    %c0_21 = arith.constant 0 : index
    %c0_22 = arith.constant 0 : index
    %31 = vector.load %arg14[%c0_21, %c0_22] : memref<8x32xf32, #tpu.memory_space<vmem>>, vector<8x32xf32>
    %32 = arith.mulf %29, %31 : vector<8x32xf32>
    %33 = arith.mulf %28, %27 : vector<8x32xf32>
    %34 = arith.addf %32, %33 : vector<8x32xf32>
    %35 = math.tanh %34 : vector<8x32xf32>
    %36 = arith.mulf %30, %35 : vector<8x32xf32>
    %c0_23 = arith.constant 0 : index
    %c0_24 = arith.constant 0 : index
    %37 = vector.load %arg14[%c0_23, %c0_24] : memref<8x32xf32, #tpu.memory_space<vmem>>, vector<8x32xf32>
    tpu.vector_store %arg14[%c0_23, %c0_24], %34 {strides = array<i32>} : memref<8x32xf32, #tpu.memory_space<vmem>>, vector<8x32xf32>,
    %c0_25 = arith.constant 0 : index
    %c0_26 = arith.constant 0 : index
    %38 = vector.load %arg13[%c0_25, %c0_26] : memref<8x32xf32, #tpu.memory_space<vmem>>, vector<8x32xf32>
    tpu.vector_store %arg13[%c0_25, %c0_26], %36 {strides = array<i32>} : memref<8x32xf32, #tpu.memory_space<vmem>>, vector<8x32xf32>,
    %39 = arith.index_cast %14 : i32 to index
    %c0_27 = arith.constant 0 : index
    %40 = vector.load %arg12[%39, %c0_27] : memref<64x32xf32, #tpu.memory_space<vmem>>, vector<8x32xf32>
    tpu.vector_store %arg12[%39, %c0_27], %36 {strides = array<i32>} : memref<64x32xf32, #tpu.memory_space<vmem>>, vector<8x32xf32>,
    %c1_i32 = arith.constant 1 : i32
    %c8_i32_28 = arith.constant 8 : i32
    %41 = arith.muli %c1_i32, %c8_i32_28 : i32
    %42 = tpu.assume_multiple %41, 8 : i32
    %43 = arith.index_cast %42 : i32 to index
    %c0_29 = arith.constant 0 : index
    %44 = vector.load %arg11[%43, %c0_29] : memref<64x128xf32, #tpu.memory_space<vmem>>, vector<8x128xf32>
    %c0_30 = arith.constant 0 : index
    %c0_31 = arith.constant 0 : index
    %45 = vector.load %arg13[%c0_30, %c0_31] : memref<8x32xf32, #tpu.memory_space<vmem>>, vector<8x32xf32>
    %cst_32 = arith.constant dense<0.000000e+00> : vector<8x128xf32>
    %46 = tpu.matmul %45, %12, %cst_32 {dimension_numbers = #tpu.dot_dimension_numbers<[1], [0], [0], [1], [0, 0, 1, 1], [], []>} : vector<8x32xf32>, vector<32x128xf32>, vector<8x128xf32> -> vector<8x128xf32>
    %47 = arith.addf %44, %46 : vector<8x128xf32>
    %48 = vector.extract_strided_slice %47 {offsets = [0, 0], sizes = [8, 96], strides = [1, 1]} : vector<8x128xf32> to vector<8x96xf32>
    %49 = arith.negf %48 : vector<8x96xf32>
    %50 = math.exp %49 : vector<8x96xf32>
    %cst_33 = arith.constant 1.000000e+00 : f32
    %51 = vector.broadcast %cst_33 : f32 to vector<8x96xf32>
    %52 = arith.addf %51, %50 : vector<8x96xf32>
    %53 = arith.divf %51, %52 : vector<8x96xf32>
    %54 = vector.extract_strided_slice %47 {offsets = [0, 96], sizes = [8, 32], strides = [1, 1]} : vector<8x128xf32> to vector<8x32xf32>
    %55 = math.tanh %54 : vector<8x32xf32>
    %56 = vector.extract_strided_slice %53 {offsets = [0, 0], sizes = [8, 32], strides = [1, 1]} : vector<8x96xf32> to vector<8x32xf32>
    %57 = vector.extract_strided_slice %53 {offsets = [0, 32], sizes = [8, 32], strides = [1, 1]} : vector<8x96xf32> to vector<8x32xf32>
    %58 = vector.extract_strided_slice %53 {offsets = [0, 64], sizes = [8, 32], strides = [1, 1]} : vector<8x96xf32> to vector<8x32xf32>
    %c0_34 = arith.constant 0 : index
    %c0_35 = arith.constant 0 : index
    %59 = vector.load %arg14[%c0_34, %c0_35] : memref<8x32xf32, #tpu.memory_space<vmem>>, vector<8x32xf32>
    %60 = arith.mulf %57, %59 : vector<8x32xf32>
    %61 = arith.mulf %56, %55 : vector<8x32xf32>
    %62 = arith.addf %60, %61 : vector<8x32xf32>
    %63 = math.tanh %62 : vector<8x32xf32>
    %64 = arith.mulf %58, %63 : vector<8x32xf32>
    %c0_36 = arith.constant 0 : index
    %c0_37 = arith.constant 0 : index
    %65 = vector.load %arg14[%c0_36, %c0_37] : memref<8x32xf32, #tpu.memory_space<vmem>>, vector<8x32xf32>
    tpu.vector_store %arg14[%c0_36, %c0_37], %62 {strides = array<i32>} : memref<8x32xf32, #tpu.memory_space<vmem>>, vector<8x32xf32>,
    %c0_38 = arith.constant 0 : index
    %c0_39 = arith.constant 0 : index
    %66 = vector.load %arg13[%c0_38, %c0_39] : memref<8x32xf32, #tpu.memory_space<vmem>>, vector<8x32xf32>
    tpu.vector_store %arg13[%c0_38, %c0_39], %64 {strides = array<i32>} : memref<8x32xf32, #tpu.memory_space<vmem>>, vector<8x32xf32>,
    %67 = arith.index_cast %42 : i32 to index
    %c0_40 = arith.constant 0 : index
    %68 = vector.load %arg12[%67, %c0_40] : memref<64x32xf32, #tpu.memory_space<vmem>>, vector<8x32xf32>
    tpu.vector_store %arg12[%67, %c0_40], %64 {strides = array<i32>} : memref<64x32xf32, #tpu.memory_space<vmem>>, vector<8x32xf32>,
    %c2_i32 = arith.constant 2 : i32
    %c8_i32_41 = arith.constant 8 : i32
    %69 = arith.muli %c2_i32, %c8_i32_41 : i32
    %70 = tpu.assume_multiple %69, 8 : i32
    %71 = arith.index_cast %70 : i32 to index
    %c0_42 = arith.constant 0 : index
    %72 = vector.load %arg11[%71, %c0_42] : memref<64x128xf32, #tpu.memory_space<vmem>>, vector<8x128xf32>
    %c0_43 = arith.constant 0 : index
    %c0_44 = arith.constant 0 : index
    %73 = vector.load %arg13[%c0_43, %c0_44] : memref<8x32xf32, #tpu.memory_space<vmem>>, vector<8x32xf32>
    %cst_45 = arith.constant dense<0.000000e+00> : vector<8x128xf32>
    %74 = tpu.matmul %73, %12, %cst_45 {dimension_numbers = #tpu.dot_dimension_numbers<[1], [0], [0], [1], [0, 0, 1, 1], [], []>} : vector<8x32xf32>, vector<32x128xf32>, vector<8x128xf32> -> vector<8x128xf32>
    %75 = arith.addf %72, %74 : vector<8x128xf32>
    %76 = vector.extract_strided_slice %75 {offsets = [0, 0], sizes = [8, 96], strides = [1, 1]} : vector<8x128xf32> to vector<8x96xf32>
    %77 = arith.negf %76 : vector<8x96xf32>
    %78 = math.exp %77 : vector<8x96xf32>
    %cst_46 = arith.constant 1.000000e+00 : f32
    %79 = vector.broadcast %cst_46 : f32 to vector<8x96xf32>
    %80 = arith.addf %79, %78 : vector<8x96xf32>
    %81 = arith.divf %79, %80 : vector<8x96xf32>
    %82 = vector.extract_strided_slice %75 {offsets = [0, 96], sizes = [8, 32], strides = [1, 1]} : vector<8x128xf32> to vector<8x32xf32>
    %83 = math.tanh %82 : vector<8x32xf32>
    %84 = vector.extract_strided_slice %81 {offsets = [0, 0], sizes = [8, 32], strides = [1, 1]} : vector<8x96xf32> to vector<8x32xf32>
    %85 = vector.extract_strided_slice %81 {offsets = [0, 32], sizes = [8, 32], strides = [1, 1]} : vector<8x96xf32> to vector<8x32xf32>
    %86 = vector.extract_strided_slice %81 {offsets = [0, 64], sizes = [8, 32], strides = [1, 1]} : vector<8x96xf32> to vector<8x32xf32>
    %c0_47 = arith.constant 0 : index
    %c0_48 = arith.constant 0 : index
    %87 = vector.load %arg14[%c0_47, %c0_48] : memref<8x32xf32, #tpu.memory_space<vmem>>, vector<8x32xf32>
    %88 = arith.mulf %85, %87 : vector<8x32xf32>
    %89 = arith.mulf %84, %83 : vector<8x32xf32>
    %90 = arith.addf %88, %89 : vector<8x32xf32>
    %91 = math.tanh %90 : vector<8x32xf32>
    %92 = arith.mulf %86, %91 : vector<8x32xf32>
    %c0_49 = arith.constant 0 : index
    %c0_50 = arith.constant 0 : index
    %93 = vector.load %arg14[%c0_49, %c0_50] : memref<8x32xf32, #tpu.memory_space<vmem>>, vector<8x32xf32>
    tpu.vector_store %arg14[%c0_49, %c0_50], %90 {strides = array<i32>} : memref<8x32xf32, #tpu.memory_space<vmem>>, vector<8x32xf32>,
    %c0_51 = arith.constant 0 : index
    %c0_52 = arith.constant 0 : index
    %94 = vector.load %arg13[%c0_51, %c0_52] : memref<8x32xf32, #tpu.memory_space<vmem>>, vector<8x32xf32>
    tpu.vector_store %arg13[%c0_51, %c0_52], %92 {strides = array<i32>} : memref<8x32xf32, #tpu.memory_space<vmem>>, vector<8x32xf32>,
    %95 = arith.index_cast %70 : i32 to index
    %c0_53 = arith.constant 0 : index
    %96 = vector.load %arg12[%95, %c0_53] : memref<64x32xf32, #tpu.memory_space<vmem>>, vector<8x32xf32>
    tpu.vector_store %arg12[%95, %c0_53], %92 {strides = array<i32>} : memref<64x32xf32, #tpu.memory_space<vmem>>, vector<8x32xf32>,
    %c3_i32 = arith.constant 3 : i32
    %c8_i32_54 = arith.constant 8 : i32
    %97 = arith.muli %c3_i32, %c8_i32_54 : i32
    %98 = tpu.assume_multiple %97, 8 : i32
    %99 = arith.index_cast %98 : i32 to index
    %c0_55 = arith.constant 0 : index
    %100 = vector.load %arg11[%99, %c0_55] : memref<64x128xf32, #tpu.memory_space<vmem>>, vector<8x128xf32>
    %c0_56 = arith.constant 0 : index
    %c0_57 = arith.constant 0 : index
    %101 = vector.load %arg13[%c0_56, %c0_57] : memref<8x32xf32, #tpu.memory_space<vmem>>, vector<8x32xf32>
    %cst_58 = arith.constant dense<0.000000e+00> : vector<8x128xf32>
    %102 = tpu.matmul %101, %12, %cst_58 {dimension_numbers = #tpu.dot_dimension_numbers<[1], [0], [0], [1], [0, 0, 1, 1], [], []>} : vector<8x32xf32>, vector<32x128xf32>, vector<8x128xf32> -> vector<8x128xf32>
    %103 = arith.addf %100, %102 : vector<8x128xf32>
    %104 = vector.extract_strided_slice %103 {offsets = [0, 0], sizes = [8, 96], strides = [1, 1]} : vector<8x128xf32> to vector<8x96xf32>
    %105 = arith.negf %104 : vector<8x96xf32>
    %106 = math.exp %105 : vector<8x96xf32>
    %cst_59 = arith.constant 1.000000e+00 : f32
    %107 = vector.broadcast %cst_59 : f32 to vector<8x96xf32>
    %108 = arith.addf %107, %106 : vector<8x96xf32>
    %109 = arith.divf %107, %108 : vector<8x96xf32>
    %110 = vector.extract_strided_slice %103 {offsets = [0, 96], sizes = [8, 32], strides = [1, 1]} : vector<8x128xf32> to vector<8x32xf32>
    %111 = math.tanh %110 : vector<8x32xf32>
    %112 = vector.extract_strided_slice %109 {offsets = [0, 0], sizes = [8, 32], strides = [1, 1]} : vector<8x96xf32> to vector<8x32xf32>
    %113 = vector.extract_strided_slice %109 {offsets = [0, 32], sizes = [8, 32], strides = [1, 1]} : vector<8x96xf32> to vector<8x32xf32>
    %114 = vector.extract_strided_slice %109 {offsets = [0, 64], sizes = [8, 32], strides = [1, 1]} : vector<8x96xf32> to vector<8x32xf32>
    %c0_60 = arith.constant 0 : index
    %c0_61 = arith.constant 0 : index
    %115 = vector.load %arg14[%c0_60, %c0_61] : memref<8x32xf32, #tpu.memory_space<vmem>>, vector<8x32xf32>
    %116 = arith.mulf %113, %115 : vector<8x32xf32>
    %117 = arith.mulf %112, %111 : vector<8x32xf32>
    %118 = arith.addf %116, %117 : vector<8x32xf32>
    %119 = math.tanh %118 : vector<8x32xf32>
    %120 = arith.mulf %114, %119 : vector<8x32xf32>
    %c0_62 = arith.constant 0 : index
    %c0_63 = arith.constant 0 : index
    %121 = vector.load %arg14[%c0_62, %c0_63] : memref<8x32xf32, #tpu.memory_space<vmem>>, vector<8x32xf32>
    tpu.vector_store %arg14[%c0_62, %c0_63], %118 {strides = array<i32>} : memref<8x32xf32, #tpu.memory_space<vmem>>, vector<8x32xf32>,
    %c0_64 = arith.constant 0 : index
    %c0_65 = arith.constant 0 : index
    %122 = vector.load %arg13[%c0_64, %c0_65] : memref<8x32xf32, #tpu.memory_space<vmem>>, vector<8x32xf32>
    tpu.vector_store %arg13[%c0_64, %c0_65], %120 {strides = array<i32>} : memref<8x32xf32, #tpu.memory_space<vmem>>, vector<8x32xf32>,
    %123 = arith.index_cast %98 : i32 to index
    %c0_66 = arith.constant 0 : index
    %124 = vector.load %arg12[%123, %c0_66] : memref<64x32xf32, #tpu.memory_space<vmem>>, vector<8x32xf32>
    tpu.vector_store %arg12[%123, %c0_66], %120 {strides = array<i32>} : memref<64x32xf32, #tpu.memory_space<vmem>>, vector<8x32xf32>,
    %c4_i32 = arith.constant 4 : i32
    %c8_i32_67 = arith.constant 8 : i32
    %125 = arith.muli %c4_i32, %c8_i32_67 : i32
    %126 = tpu.assume_multiple %125, 8 : i32
    %127 = arith.index_cast %126 : i32 to index
    %c0_68 = arith.constant 0 : index
    %128 = vector.load %arg11[%127, %c0_68] : memref<64x128xf32, #tpu.memory_space<vmem>>, vector<8x128xf32>
    %c0_69 = arith.constant 0 : index
    %c0_70 = arith.constant 0 : index
    %129 = vector.load %arg13[%c0_69, %c0_70] : memref<8x32xf32, #tpu.memory_space<vmem>>, vector<8x32xf32>
    %cst_71 = arith.constant dense<0.000000e+00> : vector<8x128xf32>
    %130 = tpu.matmul %129, %12, %cst_71 {dimension_numbers = #tpu.dot_dimension_numbers<[1], [0], [0], [1], [0, 0, 1, 1], [], []>} : vector<8x32xf32>, vector<32x128xf32>, vector<8x128xf32> -> vector<8x128xf32>
    %131 = arith.addf %128, %130 : vector<8x128xf32>
    %132 = vector.extract_strided_slice %131 {offsets = [0, 0], sizes = [8, 96], strides = [1, 1]} : vector<8x128xf32> to vector<8x96xf32>
    %133 = arith.negf %132 : vector<8x96xf32>
    %134 = math.exp %133 : vector<8x96xf32>
    %cst_72 = arith.constant 1.000000e+00 : f32
    %135 = vector.broadcast %cst_72 : f32 to vector<8x96xf32>
    %136 = arith.addf %135, %134 : vector<8x96xf32>
    %137 = arith.divf %135, %136 : vector<8x96xf32>
    %138 = vector.extract_strided_slice %131 {offsets = [0, 96], sizes = [8, 32], strides = [1, 1]} : vector<8x128xf32> to vector<8x32xf32>
    %139 = math.tanh %138 : vector<8x32xf32>
    %140 = vector.extract_strided_slice %137 {offsets = [0, 0], sizes = [8, 32], strides = [1, 1]} : vector<8x96xf32> to vector<8x32xf32>
    %141 = vector.extract_strided_slice %137 {offsets = [0, 32], sizes = [8, 32], strides = [1, 1]} : vector<8x96xf32> to vector<8x32xf32>
    %142 = vector.extract_strided_slice %137 {offsets = [0, 64], sizes = [8, 32], strides = [1, 1]} : vector<8x96xf32> to vector<8x32xf32>
    %c0_73 = arith.constant 0 : index
    %c0_74 = arith.constant 0 : index
    %143 = vector.load %arg14[%c0_73, %c0_74] : memref<8x32xf32, #tpu.memory_space<vmem>>, vector<8x32xf32>
    %144 = arith.mulf %141, %143 : vector<8x32xf32>
    %145 = arith.mulf %140, %139 : vector<8x32xf32>
    %146 = arith.addf %144, %145 : vector<8x32xf32>
    %147 = math.tanh %146 : vector<8x32xf32>
    %148 = arith.mulf %142, %147 : vector<8x32xf32>
    %c0_75 = arith.constant 0 : index
    %c0_76 = arith.constant 0 : index
    %149 = vector.load %arg14[%c0_75, %c0_76] : memref<8x32xf32, #tpu.memory_space<vmem>>, vector<8x32xf32>
    tpu.vector_store %arg14[%c0_75, %c0_76], %146 {strides = array<i32>} : memref<8x32xf32, #tpu.memory_space<vmem>>, vector<8x32xf32>,
    %c0_77 = arith.constant 0 : index
    %c0_78 = arith.constant 0 : index
    %150 = vector.load %arg13[%c0_77, %c0_78] : memref<8x32xf32, #tpu.memory_space<vmem>>, vector<8x32xf32>
    tpu.vector_store %arg13[%c0_77, %c0_78], %148 {strides = array<i32>} : memref<8x32xf32, #tpu.memory_space<vmem>>, vector<8x32xf32>,
    %151 = arith.index_cast %126 : i32 to index
    %c0_79 = arith.constant 0 : index
    %152 = vector.load %arg12[%151, %c0_79] : memref<64x32xf32, #tpu.memory_space<vmem>>, vector<8x32xf32>
    tpu.vector_store %arg12[%151, %c0_79], %148 {strides = array<i32>} : memref<64x32xf32, #tpu.memory_space<vmem>>, vector<8x32xf32>,
    %c5_i32 = arith.constant 5 : i32
    %c8_i32_80 = arith.constant 8 : i32
    %153 = arith.muli %c5_i32, %c8_i32_80 : i32
    %154 = tpu.assume_multiple %153, 8 : i32
    %155 = arith.index_cast %154 : i32 to index
    %c0_81 = arith.constant 0 : index
    %156 = vector.load %arg11[%155, %c0_81] : memref<64x128xf32, #tpu.memory_space<vmem>>, vector<8x128xf32>
    %c0_82 = arith.constant 0 : index
    %c0_83 = arith.constant 0 : index
    %157 = vector.load %arg13[%c0_82, %c0_83] : memref<8x32xf32, #tpu.memory_space<vmem>>, vector<8x32xf32>
    %cst_84 = arith.constant dense<0.000000e+00> : vector<8x128xf32>
    %158 = tpu.matmul %157, %12, %cst_84 {dimension_numbers = #tpu.dot_dimension_numbers<[1], [0], [0], [1], [0, 0, 1, 1], [], []>} : vector<8x32xf32>, vector<32x128xf32>, vector<8x128xf32> -> vector<8x128xf32>
    %159 = arith.addf %156, %158 : vector<8x128xf32>
    %160 = vector.extract_strided_slice %159 {offsets = [0, 0], sizes = [8, 96], strides = [1, 1]} : vector<8x128xf32> to vector<8x96xf32>
    %161 = arith.negf %160 : vector<8x96xf32>
    %162 = math.exp %161 : vector<8x96xf32>
    %cst_85 = arith.constant 1.000000e+00 : f32
    %163 = vector.broadcast %cst_85 : f32 to vector<8x96xf32>
    %164 = arith.addf %163, %162 : vector<8x96xf32>
    %165 = arith.divf %163, %164 : vector<8x96xf32>
    %166 = vector.extract_strided_slice %159 {offsets = [0, 96], sizes = [8, 32], strides = [1, 1]} : vector<8x128xf32> to vector<8x32xf32>
    %167 = math.tanh %166 : vector<8x32xf32>
    %168 = vector.extract_strided_slice %165 {offsets = [0, 0], sizes = [8, 32], strides = [1, 1]} : vector<8x96xf32> to vector<8x32xf32>
    %169 = vector.extract_strided_slice %165 {offsets = [0, 32], sizes = [8, 32], strides = [1, 1]} : vector<8x96xf32> to vector<8x32xf32>
    %170 = vector.extract_strided_slice %165 {offsets = [0, 64], sizes = [8, 32], strides = [1, 1]} : vector<8x96xf32> to vector<8x32xf32>
    %c0_86 = arith.constant 0 : index
    %c0_87 = arith.constant 0 : index
    %171 = vector.load %arg14[%c0_86, %c0_87] : memref<8x32xf32, #tpu.memory_space<vmem>>, vector<8x32xf32>
    %172 = arith.mulf %169, %171 : vector<8x32xf32>
    %173 = arith.mulf %168, %167 : vector<8x32xf32>
    %174 = arith.addf %172, %173 : vector<8x32xf32>
    %175 = math.tanh %174 : vector<8x32xf32>
    %176 = arith.mulf %170, %175 : vector<8x32xf32>
    %c0_88 = arith.constant 0 : index
    %c0_89 = arith.constant 0 : index
    %177 = vector.load %arg14[%c0_88, %c0_89] : memref<8x32xf32, #tpu.memory_space<vmem>>, vector<8x32xf32>
    tpu.vector_store %arg14[%c0_88, %c0_89], %174 {strides = array<i32>} : memref<8x32xf32, #tpu.memory_space<vmem>>, vector<8x32xf32>,
    %c0_90 = arith.constant 0 : index
    %c0_91 = arith.constant 0 : index
    %178 = vector.load %arg13[%c0_90, %c0_91] : memref<8x32xf32, #tpu.memory_space<vmem>>, vector<8x32xf32>
    tpu.vector_store %arg13[%c0_90, %c0_91], %176 {strides = array<i32>} : memref<8x32xf32, #tpu.memory_space<vmem>>, vector<8x32xf32>,
    %179 = arith.index_cast %154 : i32 to index
    %c0_92 = arith.constant 0 : index
    %180 = vector.load %arg12[%179, %c0_92] : memref<64x32xf32, #tpu.memory_space<vmem>>, vector<8x32xf32>
    tpu.vector_store %arg12[%179, %c0_92], %176 {strides = array<i32>} : memref<64x32xf32, #tpu.memory_space<vmem>>, vector<8x32xf32>,
    %c6_i32 = arith.constant 6 : i32
    %c8_i32_93 = arith.constant 8 : i32
    %181 = arith.muli %c6_i32, %c8_i32_93 : i32
    %182 = tpu.assume_multiple %181, 8 : i32
    %183 = arith.index_cast %182 : i32 to index
    %c0_94 = arith.constant 0 : index
    %184 = vector.load %arg11[%183, %c0_94] : memref<64x128xf32, #tpu.memory_space<vmem>>, vector<8x128xf32>
    %c0_95 = arith.constant 0 : index
    %c0_96 = arith.constant 0 : index
    %185 = vector.load %arg13[%c0_95, %c0_96] : memref<8x32xf32, #tpu.memory_space<vmem>>, vector<8x32xf32>
    %cst_97 = arith.constant dense<0.000000e+00> : vector<8x128xf32>
    %186 = tpu.matmul %185, %12, %cst_97 {dimension_numbers = #tpu.dot_dimension_numbers<[1], [0], [0], [1], [0, 0, 1, 1], [], []>} : vector<8x32xf32>, vector<32x128xf32>, vector<8x128xf32> -> vector<8x128xf32>
    %187 = arith.addf %184, %186 : vector<8x128xf32>
    %188 = vector.extract_strided_slice %187 {offsets = [0, 0], sizes = [8, 96], strides = [1, 1]} : vector<8x128xf32> to vector<8x96xf32>
    %189 = arith.negf %188 : vector<8x96xf32>
    %190 = math.exp %189 : vector<8x96xf32>
    %cst_98 = arith.constant 1.000000e+00 : f32
    %191 = vector.broadcast %cst_98 : f32 to vector<8x96xf32>
    %192 = arith.addf %191, %190 : vector<8x96xf32>
    %193 = arith.divf %191, %192 : vector<8x96xf32>
    %194 = vector.extract_strided_slice %187 {offsets = [0, 96], sizes = [8, 32], strides = [1, 1]} : vector<8x128xf32> to vector<8x32xf32>
    %195 = math.tanh %194 : vector<8x32xf32>
    %196 = vector.extract_strided_slice %193 {offsets = [0, 0], sizes = [8, 32], strides = [1, 1]} : vector<8x96xf32> to vector<8x32xf32>
    %197 = vector.extract_strided_slice %193 {offsets = [0, 32], sizes = [8, 32], strides = [1, 1]} : vector<8x96xf32> to vector<8x32xf32>
    %198 = vector.extract_strided_slice %193 {offsets = [0, 64], sizes = [8, 32], strides = [1, 1]} : vector<8x96xf32> to vector<8x32xf32>
    %c0_99 = arith.constant 0 : index
    %c0_100 = arith.constant 0 : index
    %199 = vector.load %arg14[%c0_99, %c0_100] : memref<8x32xf32, #tpu.memory_space<vmem>>, vector<8x32xf32>
    %200 = arith.mulf %197, %199 : vector<8x32xf32>
    %201 = arith.mulf %196, %195 : vector<8x32xf32>
    %202 = arith.addf %200, %201 : vector<8x32xf32>
    %203 = math.tanh %202 : vector<8x32xf32>
    %204 = arith.mulf %198, %203 : vector<8x32xf32>
    %c0_101 = arith.constant 0 : index
    %c0_102 = arith.constant 0 : index
    %205 = vector.load %arg14[%c0_101, %c0_102] : memref<8x32xf32, #tpu.memory_space<vmem>>, vector<8x32xf32>
    tpu.vector_store %arg14[%c0_101, %c0_102], %202 {strides = array<i32>} : memref<8x32xf32, #tpu.memory_space<vmem>>, vector<8x32xf32>,
    %c0_103 = arith.constant 0 : index
    %c0_104 = arith.constant 0 : index
    %206 = vector.load %arg13[%c0_103, %c0_104] : memref<8x32xf32, #tpu.memory_space<vmem>>, vector<8x32xf32>
    tpu.vector_store %arg13[%c0_103, %c0_104], %204 {strides = array<i32>} : memref<8x32xf32, #tpu.memory_space<vmem>>, vector<8x32xf32>,
    %207 = arith.index_cast %182 : i32 to index
    %c0_105 = arith.constant 0 : index
    %208 = vector.load %arg12[%207, %c0_105] : memref<64x32xf32, #tpu.memory_space<vmem>>, vector<8x32xf32>
    tpu.vector_store %arg12[%207, %c0_105], %204 {strides = array<i32>} : memref<64x32xf32, #tpu.memory_space<vmem>>, vector<8x32xf32>,
    %c7_i32 = arith.constant 7 : i32
    %c8_i32_106 = arith.constant 8 : i32
    %209 = arith.muli %c7_i32, %c8_i32_106 : i32
    %210 = tpu.assume_multiple %209, 8 : i32
    %211 = arith.index_cast %210 : i32 to index
    %c0_107 = arith.constant 0 : index
    %212 = vector.load %arg11[%211, %c0_107] : memref<64x128xf32, #tpu.memory_space<vmem>>, vector<8x128xf32>
    %c0_108 = arith.constant 0 : index
    %c0_109 = arith.constant 0 : index
    %213 = vector.load %arg13[%c0_108, %c0_109] : memref<8x32xf32, #tpu.memory_space<vmem>>, vector<8x32xf32>
    %cst_110 = arith.constant dense<0.000000e+00> : vector<8x128xf32>
    %214 = tpu.matmul %213, %12, %cst_110 {dimension_numbers = #tpu.dot_dimension_numbers<[1], [0], [0], [1], [0, 0, 1, 1], [], []>} : vector<8x32xf32>, vector<32x128xf32>, vector<8x128xf32> -> vector<8x128xf32>
    %215 = arith.addf %212, %214 : vector<8x128xf32>
    %216 = vector.extract_strided_slice %215 {offsets = [0, 0], sizes = [8, 96], strides = [1, 1]} : vector<8x128xf32> to vector<8x96xf32>
    %217 = arith.negf %216 : vector<8x96xf32>
    %218 = math.exp %217 : vector<8x96xf32>
    %cst_111 = arith.constant 1.000000e+00 : f32
    %219 = vector.broadcast %cst_111 : f32 to vector<8x96xf32>
    %220 = arith.addf %219, %218 : vector<8x96xf32>
    %221 = arith.divf %219, %220 : vector<8x96xf32>
    %222 = vector.extract_strided_slice %215 {offsets = [0, 96], sizes = [8, 32], strides = [1, 1]} : vector<8x128xf32> to vector<8x32xf32>
    %223 = math.tanh %222 : vector<8x32xf32>
    %224 = vector.extract_strided_slice %221 {offsets = [0, 0], sizes = [8, 32], strides = [1, 1]} : vector<8x96xf32> to vector<8x32xf32>
    %225 = vector.extract_strided_slice %221 {offsets = [0, 32], sizes = [8, 32], strides = [1, 1]} : vector<8x96xf32> to vector<8x32xf32>
    %226 = vector.extract_strided_slice %221 {offsets = [0, 64], sizes = [8, 32], strides = [1, 1]} : vector<8x96xf32> to vector<8x32xf32>
    %c0_112 = arith.constant 0 : index
    %c0_113 = arith.constant 0 : index
    %227 = vector.load %arg14[%c0_112, %c0_113] : memref<8x32xf32, #tpu.memory_space<vmem>>, vector<8x32xf32>
    %228 = arith.mulf %225, %227 : vector<8x32xf32>
    %229 = arith.mulf %224, %223 : vector<8x32xf32>
    %230 = arith.addf %228, %229 : vector<8x32xf32>
    %231 = math.tanh %230 : vector<8x32xf32>
    %232 = arith.mulf %226, %231 : vector<8x32xf32>
    %c0_114 = arith.constant 0 : index
    %c0_115 = arith.constant 0 : index
    %233 = vector.load %arg14[%c0_114, %c0_115] : memref<8x32xf32, #tpu.memory_space<vmem>>, vector<8x32xf32>
    tpu.vector_store %arg14[%c0_114, %c0_115], %230 {strides = array<i32>} : memref<8x32xf32, #tpu.memory_space<vmem>>, vector<8x32xf32>,
    %c0_116 = arith.constant 0 : index
    %c0_117 = arith.constant 0 : index
    %234 = vector.load %arg13[%c0_116, %c0_117] : memref<8x32xf32, #tpu.memory_space<vmem>>, vector<8x32xf32>
    tpu.vector_store %arg13[%c0_116, %c0_117], %232 {strides = array<i32>} : memref<8x32xf32, #tpu.memory_space<vmem>>, vector<8x32xf32>,
    %235 = arith.index_cast %210 : i32 to index
    %c0_118 = arith.constant 0 : index
    %236 = vector.load %arg12[%235, %c0_118] : memref<64x32xf32, #tpu.memory_space<vmem>>, vector<8x32xf32>
    tpu.vector_store %arg12[%235, %c0_118], %232 {strides = array<i32>} : memref<64x32xf32, #tpu.memory_space<vmem>>, vector<8x32xf32>,
    %c8_i32_119 = arith.constant 8 : i32
    %c0_120 = arith.constant 0 : index
    %c0_121 = arith.constant 0 : index
    %237 = vector.load %arg12[%c0_120, %c0_121] : memref<64x32xf32, #tpu.memory_space<vmem>>, vector<64x32xf32>
    %c0_122 = arith.constant 0 : index
    %c0_123 = arith.constant 0 : index
    %238 = vector.load %arg5[%c0_122, %c0_123] : memref<32x128xf32, #tpu.memory_space<vmem>>, vector<32x128xf32>
    %cst_124 = arith.constant dense<0.000000e+00> : vector<64x128xf32>
    %239 = tpu.matmul %237, %238, %cst_124 {dimension_numbers = #tpu.dot_dimension_numbers<[1], [0], [0], [1], [0, 0, 1, 1], [], []>} : vector<64x32xf32>, vector<32x128xf32>, vector<64x128xf32> -> vector<64x128xf32>
    %c0_125 = arith.constant 0 : index
    %c0_126 = arith.constant 0 : index
    %240 = vector.load %arg7[%c0_125, %c0_126] : memref<1x128xf32, #tpu.memory_space<vmem>>, vector<1x128xf32>
    %241 = vector.broadcast %240 : vector<1x128xf32> to vector<64x128xf32>
    %242 = arith.addf %239, %241 : vector<64x128xf32>
    %c0_127 = arith.constant 0 : index
    %c0_128 = arith.constant 0 : index
    %243 = vector.load %arg11[%c0_127, %c0_128] : memref<64x128xf32, #tpu.memory_space<vmem>>, vector<64x128xf32>
    tpu.vector_store %arg11[%c0_127, %c0_128], %242 {strides = array<i32>} : memref<64x128xf32, #tpu.memory_space<vmem>>, vector<64x128xf32>,
    %cst_129 = arith.constant 0.000000e+00 : f32
    %244 = vector.broadcast %cst_129 : f32 to vector<8x32xf32>
    %c0_130 = arith.constant 0 : index
    %c0_131 = arith.constant 0 : index
    %245 = vector.load %arg13[%c0_130, %c0_131] : memref<8x32xf32, #tpu.memory_space<vmem>>, vector<8x32xf32>
    tpu.vector_store %arg13[%c0_130, %c0_131], %244 {strides = array<i32>} : memref<8x32xf32, #tpu.memory_space<vmem>>, vector<8x32xf32>,
    %cst_132 = arith.constant 0.000000e+00 : f32
    %246 = vector.broadcast %cst_132 : f32 to vector<8x32xf32>
    %c0_133 = arith.constant 0 : index
    %c0_134 = arith.constant 0 : index
    %247 = vector.load %arg14[%c0_133, %c0_134] : memref<8x32xf32, #tpu.memory_space<vmem>>, vector<8x32xf32>
    tpu.vector_store %arg14[%c0_133, %c0_134], %246 {strides = array<i32>} : memref<8x32xf32, #tpu.memory_space<vmem>>, vector<8x32xf32>,
    %c0_135 = arith.constant 0 : index
    %c0_136 = arith.constant 0 : index
    %248 = vector.load %arg6[%c0_135, %c0_136] : memref<32x128xf32, #tpu.memory_space<vmem>>, vector<32x128xf32>
    %c0_i32_137 = arith.constant 0 : i32
    %c8_i32_138 = arith.constant 8 : i32
    %249 = arith.muli %c0_i32_137, %c8_i32_138 : i32
    %250 = tpu.assume_multiple %249, 8 : i32
    %251 = arith.index_cast %250 : i32 to index
    %c0_139 = arith.constant 0 : index
    %252 = vector.load %arg11[%251, %c0_139] : memref<64x128xf32, #tpu.memory_space<vmem>>, vector<8x128xf32>
    %c0_140 = arith.constant 0 : index
    %c0_141 = arith.constant 0 : index
    %253 = vector.load %arg13[%c0_140, %c0_141] : memref<8x32xf32, #tpu.memory_space<vmem>>, vector<8x32xf32>
    %cst_142 = arith.constant dense<0.000000e+00> : vector<8x128xf32>
    %254 = tpu.matmul %253, %248, %cst_142 {dimension_numbers = #tpu.dot_dimension_numbers<[1], [0], [0], [1], [0, 0, 1, 1], [], []>} : vector<8x32xf32>, vector<32x128xf32>, vector<8x128xf32> -> vector<8x128xf32>
    %255 = arith.addf %252, %254 : vector<8x128xf32>
    %256 = vector.extract_strided_slice %255 {offsets = [0, 0], sizes = [8, 96], strides = [1, 1]} : vector<8x128xf32> to vector<8x96xf32>
    %257 = arith.negf %256 : vector<8x96xf32>
    %258 = math.exp %257 : vector<8x96xf32>
    %cst_143 = arith.constant 1.000000e+00 : f32
    %259 = vector.broadcast %cst_143 : f32 to vector<8x96xf32>
    %260 = arith.addf %259, %258 : vector<8x96xf32>
    %261 = arith.divf %259, %260 : vector<8x96xf32>
    %262 = vector.extract_strided_slice %255 {offsets = [0, 96], sizes = [8, 32], strides = [1, 1]} : vector<8x128xf32> to vector<8x32xf32>
    %263 = math.tanh %262 : vector<8x32xf32>
    %264 = vector.extract_strided_slice %261 {offsets = [0, 0], sizes = [8, 32], strides = [1, 1]} : vector<8x96xf32> to vector<8x32xf32>
    %265 = vector.extract_strided_slice %261 {offsets = [0, 32], sizes = [8, 32], strides = [1, 1]} : vector<8x96xf32> to vector<8x32xf32>
    %266 = vector.extract_strided_slice %261 {offsets = [0, 64], sizes = [8, 32], strides = [1, 1]} : vector<8x96xf32> to vector<8x32xf32>
    %c0_144 = arith.constant 0 : index
    %c0_145 = arith.constant 0 : index
    %267 = vector.load %arg14[%c0_144, %c0_145] : memref<8x32xf32, #tpu.memory_space<vmem>>, vector<8x32xf32>
    %268 = arith.mulf %265, %267 : vector<8x32xf32>
    %269 = arith.mulf %264, %263 : vector<8x32xf32>
    %270 = arith.addf %268, %269 : vector<8x32xf32>
    %271 = math.tanh %270 : vector<8x32xf32>
    %272 = arith.mulf %266, %271 : vector<8x32xf32>
    %c0_146 = arith.constant 0 : index
    %c0_147 = arith.constant 0 : index
    %273 = vector.load %arg14[%c0_146, %c0_147] : memref<8x32xf32, #tpu.memory_space<vmem>>, vector<8x32xf32>
    tpu.vector_store %arg14[%c0_146, %c0_147], %270 {strides = array<i32>} : memref<8x32xf32, #tpu.memory_space<vmem>>, vector<8x32xf32>,
    %c0_148 = arith.constant 0 : index
    %c0_149 = arith.constant 0 : index
    %274 = vector.load %arg13[%c0_148, %c0_149] : memref<8x32xf32, #tpu.memory_space<vmem>>, vector<8x32xf32>
    tpu.vector_store %arg13[%c0_148, %c0_149], %272 {strides = array<i32>} : memref<8x32xf32, #tpu.memory_space<vmem>>, vector<8x32xf32>,
    %275 = arith.index_cast %250 : i32 to index
    %c0_150 = arith.constant 0 : index
    %276 = vector.load %arg12[%275, %c0_150] : memref<64x32xf32, #tpu.memory_space<vmem>>, vector<8x32xf32>
    tpu.vector_store %arg12[%275, %c0_150], %272 {strides = array<i32>} : memref<64x32xf32, #tpu.memory_space<vmem>>, vector<8x32xf32>,
    %c1_i32_151 = arith.constant 1 : i32
    %c8_i32_152 = arith.constant 8 : i32
    %277 = arith.muli %c1_i32_151, %c8_i32_152 : i32
    %278 = tpu.assume_multiple %277, 8 : i32
    %279 = arith.index_cast %278 : i32 to index
    %c0_153 = arith.constant 0 : index
    %280 = vector.load %arg11[%279, %c0_153] : memref<64x128xf32, #tpu.memory_space<vmem>>, vector<8x128xf32>
    %c0_154 = arith.constant 0 : index
    %c0_155 = arith.constant 0 : index
    %281 = vector.load %arg13[%c0_154, %c0_155] : memref<8x32xf32, #tpu.memory_space<vmem>>, vector<8x32xf32>
    %cst_156 = arith.constant dense<0.000000e+00> : vector<8x128xf32>
    %282 = tpu.matmul %281, %248, %cst_156 {dimension_numbers = #tpu.dot_dimension_numbers<[1], [0], [0], [1], [0, 0, 1, 1], [], []>} : vector<8x32xf32>, vector<32x128xf32>, vector<8x128xf32> -> vector<8x128xf32>
    %283 = arith.addf %280, %282 : vector<8x128xf32>
    %284 = vector.extract_strided_slice %283 {offsets = [0, 0], sizes = [8, 96], strides = [1, 1]} : vector<8x128xf32> to vector<8x96xf32>
    %285 = arith.negf %284 : vector<8x96xf32>
    %286 = math.exp %285 : vector<8x96xf32>
    %cst_157 = arith.constant 1.000000e+00 : f32
    %287 = vector.broadcast %cst_157 : f32 to vector<8x96xf32>
    %288 = arith.addf %287, %286 : vector<8x96xf32>
    %289 = arith.divf %287, %288 : vector<8x96xf32>
    %290 = vector.extract_strided_slice %283 {offsets = [0, 96], sizes = [8, 32], strides = [1, 1]} : vector<8x128xf32> to vector<8x32xf32>
    %291 = math.tanh %290 : vector<8x32xf32>
    %292 = vector.extract_strided_slice %289 {offsets = [0, 0], sizes = [8, 32], strides = [1, 1]} : vector<8x96xf32> to vector<8x32xf32>
    %293 = vector.extract_strided_slice %289 {offsets = [0, 32], sizes = [8, 32], strides = [1, 1]} : vector<8x96xf32> to vector<8x32xf32>
    %294 = vector.extract_strided_slice %289 {offsets = [0, 64], sizes = [8, 32], strides = [1, 1]} : vector<8x96xf32> to vector<8x32xf32>
    %c0_158 = arith.constant 0 : index
    %c0_159 = arith.constant 0 : index
    %295 = vector.load %arg14[%c0_158, %c0_159] : memref<8x32xf32, #tpu.memory_space<vmem>>, vector<8x32xf32>
    %296 = arith.mulf %293, %295 : vector<8x32xf32>
    %297 = arith.mulf %292, %291 : vector<8x32xf32>
    %298 = arith.addf %296, %297 : vector<8x32xf32>
    %299 = math.tanh %298 : vector<8x32xf32>
    %300 = arith.mulf %294, %299 : vector<8x32xf32>
    %c0_160 = arith.constant 0 : index
    %c0_161 = arith.constant 0 : index
    %301 = vector.load %arg14[%c0_160, %c0_161] : memref<8x32xf32, #tpu.memory_space<vmem>>, vector<8x32xf32>
    tpu.vector_store %arg14[%c0_160, %c0_161], %298 {strides = array<i32>} : memref<8x32xf32, #tpu.memory_space<vmem>>, vector<8x32xf32>,
    %c0_162 = arith.constant 0 : index
    %c0_163 = arith.constant 0 : index
    %302 = vector.load %arg13[%c0_162, %c0_163] : memref<8x32xf32, #tpu.memory_space<vmem>>, vector<8x32xf32>
    tpu.vector_store %arg13[%c0_162, %c0_163], %300 {strides = array<i32>} : memref<8x32xf32, #tpu.memory_space<vmem>>, vector<8x32xf32>,
    %303 = arith.index_cast %278 : i32 to index
    %c0_164 = arith.constant 0 : index
    %304 = vector.load %arg12[%303, %c0_164] : memref<64x32xf32, #tpu.memory_space<vmem>>, vector<8x32xf32>
    tpu.vector_store %arg12[%303, %c0_164], %300 {strides = array<i32>} : memref<64x32xf32, #tpu.memory_space<vmem>>, vector<8x32xf32>,
    %c2_i32_165 = arith.constant 2 : i32
    %c8_i32_166 = arith.constant 8 : i32
    %305 = arith.muli %c2_i32_165, %c8_i32_166 : i32
    %306 = tpu.assume_multiple %305, 8 : i32
    %307 = arith.index_cast %306 : i32 to index
    %c0_167 = arith.constant 0 : index
    %308 = vector.load %arg11[%307, %c0_167] : memref<64x128xf32, #tpu.memory_space<vmem>>, vector<8x128xf32>
    %c0_168 = arith.constant 0 : index
    %c0_169 = arith.constant 0 : index
    %309 = vector.load %arg13[%c0_168, %c0_169] : memref<8x32xf32, #tpu.memory_space<vmem>>, vector<8x32xf32>
    %cst_170 = arith.constant dense<0.000000e+00> : vector<8x128xf32>
    %310 = tpu.matmul %309, %248, %cst_170 {dimension_numbers = #tpu.dot_dimension_numbers<[1], [0], [0], [1], [0, 0, 1, 1], [], []>} : vector<8x32xf32>, vector<32x128xf32>, vector<8x128xf32> -> vector<8x128xf32>
    %311 = arith.addf %308, %310 : vector<8x128xf32>
    %312 = vector.extract_strided_slice %311 {offsets = [0, 0], sizes = [8, 96], strides = [1, 1]} : vector<8x128xf32> to vector<8x96xf32>
    %313 = arith.negf %312 : vector<8x96xf32>
    %314 = math.exp %313 : vector<8x96xf32>
    %cst_171 = arith.constant 1.000000e+00 : f32
    %315 = vector.broadcast %cst_171 : f32 to vector<8x96xf32>
    %316 = arith.addf %315, %314 : vector<8x96xf32>
    %317 = arith.divf %315, %316 : vector<8x96xf32>
    %318 = vector.extract_strided_slice %311 {offsets = [0, 96], sizes = [8, 32], strides = [1, 1]} : vector<8x128xf32> to vector<8x32xf32>
    %319 = math.tanh %318 : vector<8x32xf32>
    %320 = vector.extract_strided_slice %317 {offsets = [0, 0], sizes = [8, 32], strides = [1, 1]} : vector<8x96xf32> to vector<8x32xf32>
    %321 = vector.extract_strided_slice %317 {offsets = [0, 32], sizes = [8, 32], strides = [1, 1]} : vector<8x96xf32> to vector<8x32xf32>
    %322 = vector.extract_strided_slice %317 {offsets = [0, 64], sizes = [8, 32], strides = [1, 1]} : vector<8x96xf32> to vector<8x32xf32>
    %c0_172 = arith.constant 0 : index
    %c0_173 = arith.constant 0 : index
    %323 = vector.load %arg14[%c0_172, %c0_173] : memref<8x32xf32, #tpu.memory_space<vmem>>, vector<8x32xf32>
    %324 = arith.mulf %321, %323 : vector<8x32xf32>
    %325 = arith.mulf %320, %319 : vector<8x32xf32>
    %326 = arith.addf %324, %325 : vector<8x32xf32>
    %327 = math.tanh %326 : vector<8x32xf32>
    %328 = arith.mulf %322, %327 : vector<8x32xf32>
    %c0_174 = arith.constant 0 : index
    %c0_175 = arith.constant 0 : index
    %329 = vector.load %arg14[%c0_174, %c0_175] : memref<8x32xf32, #tpu.memory_space<vmem>>, vector<8x32xf32>
    tpu.vector_store %arg14[%c0_174, %c0_175], %326 {strides = array<i32>} : memref<8x32xf32, #tpu.memory_space<vmem>>, vector<8x32xf32>,
    %c0_176 = arith.constant 0 : index
    %c0_177 = arith.constant 0 : index
    %330 = vector.load %arg13[%c0_176, %c0_177] : memref<8x32xf32, #tpu.memory_space<vmem>>, vector<8x32xf32>
    tpu.vector_store %arg13[%c0_176, %c0_177], %328 {strides = array<i32>} : memref<8x32xf32, #tpu.memory_space<vmem>>, vector<8x32xf32>,
    %331 = arith.index_cast %306 : i32 to index
    %c0_178 = arith.constant 0 : index
    %332 = vector.load %arg12[%331, %c0_178] : memref<64x32xf32, #tpu.memory_space<vmem>>, vector<8x32xf32>
    tpu.vector_store %arg12[%331, %c0_178], %328 {strides = array<i32>} : memref<64x32xf32, #tpu.memory_space<vmem>>, vector<8x32xf32>,
    %c3_i32_179 = arith.constant 3 : i32
    %c8_i32_180 = arith.constant 8 : i32
    %333 = arith.muli %c3_i32_179, %c8_i32_180 : i32
    %334 = tpu.assume_multiple %333, 8 : i32
    %335 = arith.index_cast %334 : i32 to index
    %c0_181 = arith.constant 0 : index
    %336 = vector.load %arg11[%335, %c0_181] : memref<64x128xf32, #tpu.memory_space<vmem>>, vector<8x128xf32>
    %c0_182 = arith.constant 0 : index
    %c0_183 = arith.constant 0 : index
    %337 = vector.load %arg13[%c0_182, %c0_183] : memref<8x32xf32, #tpu.memory_space<vmem>>, vector<8x32xf32>
    %cst_184 = arith.constant dense<0.000000e+00> : vector<8x128xf32>
    %338 = tpu.matmul %337, %248, %cst_184 {dimension_numbers = #tpu.dot_dimension_numbers<[1], [0], [0], [1], [0, 0, 1, 1], [], []>} : vector<8x32xf32>, vector<32x128xf32>, vector<8x128xf32> -> vector<8x128xf32>
    %339 = arith.addf %336, %338 : vector<8x128xf32>
    %340 = vector.extract_strided_slice %339 {offsets = [0, 0], sizes = [8, 96], strides = [1, 1]} : vector<8x128xf32> to vector<8x96xf32>
    %341 = arith.negf %340 : vector<8x96xf32>
    %342 = math.exp %341 : vector<8x96xf32>
    %cst_185 = arith.constant 1.000000e+00 : f32
    %343 = vector.broadcast %cst_185 : f32 to vector<8x96xf32>
    %344 = arith.addf %343, %342 : vector<8x96xf32>
    %345 = arith.divf %343, %344 : vector<8x96xf32>
    %346 = vector.extract_strided_slice %339 {offsets = [0, 96], sizes = [8, 32], strides = [1, 1]} : vector<8x128xf32> to vector<8x32xf32>
    %347 = math.tanh %346 : vector<8x32xf32>
    %348 = vector.extract_strided_slice %345 {offsets = [0, 0], sizes = [8, 32], strides = [1, 1]} : vector<8x96xf32> to vector<8x32xf32>
    %349 = vector.extract_strided_slice %345 {offsets = [0, 32], sizes = [8, 32], strides = [1, 1]} : vector<8x96xf32> to vector<8x32xf32>
    %350 = vector.extract_strided_slice %345 {offsets = [0, 64], sizes = [8, 32], strides = [1, 1]} : vector<8x96xf32> to vector<8x32xf32>
    %c0_186 = arith.constant 0 : index
    %c0_187 = arith.constant 0 : index
    %351 = vector.load %arg14[%c0_186, %c0_187] : memref<8x32xf32, #tpu.memory_space<vmem>>, vector<8x32xf32>
    %352 = arith.mulf %349, %351 : vector<8x32xf32>
    %353 = arith.mulf %348, %347 : vector<8x32xf32>
    %354 = arith.addf %352, %353 : vector<8x32xf32>
    %355 = math.tanh %354 : vector<8x32xf32>
    %356 = arith.mulf %350, %355 : vector<8x32xf32>
    %c0_188 = arith.constant 0 : index
    %c0_189 = arith.constant 0 : index
    %357 = vector.load %arg14[%c0_188, %c0_189] : memref<8x32xf32, #tpu.memory_space<vmem>>, vector<8x32xf32>
    tpu.vector_store %arg14[%c0_188, %c0_189], %354 {strides = array<i32>} : memref<8x32xf32, #tpu.memory_space<vmem>>, vector<8x32xf32>,
    %c0_190 = arith.constant 0 : index
    %c0_191 = arith.constant 0 : index
    %358 = vector.load %arg13[%c0_190, %c0_191] : memref<8x32xf32, #tpu.memory_space<vmem>>, vector<8x32xf32>
    tpu.vector_store %arg13[%c0_190, %c0_191], %356 {strides = array<i32>} : memref<8x32xf32, #tpu.memory_space<vmem>>, vector<8x32xf32>,
    %359 = arith.index_cast %334 : i32 to index
    %c0_192 = arith.constant 0 : index
    %360 = vector.load %arg12[%359, %c0_192] : memref<64x32xf32, #tpu.memory_space<vmem>>, vector<8x32xf32>
    tpu.vector_store %arg12[%359, %c0_192], %356 {strides = array<i32>} : memref<64x32xf32, #tpu.memory_space<vmem>>, vector<8x32xf32>,
    %c4_i32_193 = arith.constant 4 : i32
    %c8_i32_194 = arith.constant 8 : i32
    %361 = arith.muli %c4_i32_193, %c8_i32_194 : i32
    %362 = tpu.assume_multiple %361, 8 : i32
    %363 = arith.index_cast %362 : i32 to index
    %c0_195 = arith.constant 0 : index
    %364 = vector.load %arg11[%363, %c0_195] : memref<64x128xf32, #tpu.memory_space<vmem>>, vector<8x128xf32>
    %c0_196 = arith.constant 0 : index
    %c0_197 = arith.constant 0 : index
    %365 = vector.load %arg13[%c0_196, %c0_197] : memref<8x32xf32, #tpu.memory_space<vmem>>, vector<8x32xf32>
    %cst_198 = arith.constant dense<0.000000e+00> : vector<8x128xf32>
    %366 = tpu.matmul %365, %248, %cst_198 {dimension_numbers = #tpu.dot_dimension_numbers<[1], [0], [0], [1], [0, 0, 1, 1], [], []>} : vector<8x32xf32>, vector<32x128xf32>, vector<8x128xf32> -> vector<8x128xf32>
    %367 = arith.addf %364, %366 : vector<8x128xf32>
    %368 = vector.extract_strided_slice %367 {offsets = [0, 0], sizes = [8, 96], strides = [1, 1]} : vector<8x128xf32> to vector<8x96xf32>
    %369 = arith.negf %368 : vector<8x96xf32>
    %370 = math.exp %369 : vector<8x96xf32>
    %cst_199 = arith.constant 1.000000e+00 : f32
    %371 = vector.broadcast %cst_199 : f32 to vector<8x96xf32>
    %372 = arith.addf %371, %370 : vector<8x96xf32>
    %373 = arith.divf %371, %372 : vector<8x96xf32>
    %374 = vector.extract_strided_slice %367 {offsets = [0, 96], sizes = [8, 32], strides = [1, 1]} : vector<8x128xf32> to vector<8x32xf32>
    %375 = math.tanh %374 : vector<8x32xf32>
    %376 = vector.extract_strided_slice %373 {offsets = [0, 0], sizes = [8, 32], strides = [1, 1]} : vector<8x96xf32> to vector<8x32xf32>
    %377 = vector.extract_strided_slice %373 {offsets = [0, 32], sizes = [8, 32], strides = [1, 1]} : vector<8x96xf32> to vector<8x32xf32>
    %378 = vector.extract_strided_slice %373 {offsets = [0, 64], sizes = [8, 32], strides = [1, 1]} : vector<8x96xf32> to vector<8x32xf32>
    %c0_200 = arith.constant 0 : index
    %c0_201 = arith.constant 0 : index
    %379 = vector.load %arg14[%c0_200, %c0_201] : memref<8x32xf32, #tpu.memory_space<vmem>>, vector<8x32xf32>
    %380 = arith.mulf %377, %379 : vector<8x32xf32>
    %381 = arith.mulf %376, %375 : vector<8x32xf32>
    %382 = arith.addf %380, %381 : vector<8x32xf32>
    %383 = math.tanh %382 : vector<8x32xf32>
    %384 = arith.mulf %378, %383 : vector<8x32xf32>
    %c0_202 = arith.constant 0 : index
    %c0_203 = arith.constant 0 : index
    %385 = vector.load %arg14[%c0_202, %c0_203] : memref<8x32xf32, #tpu.memory_space<vmem>>, vector<8x32xf32>
    tpu.vector_store %arg14[%c0_202, %c0_203], %382 {strides = array<i32>} : memref<8x32xf32, #tpu.memory_space<vmem>>, vector<8x32xf32>,
    %c0_204 = arith.constant 0 : index
    %c0_205 = arith.constant 0 : index
    %386 = vector.load %arg13[%c0_204, %c0_205] : memref<8x32xf32, #tpu.memory_space<vmem>>, vector<8x32xf32>
    tpu.vector_store %arg13[%c0_204, %c0_205], %384 {strides = array<i32>} : memref<8x32xf32, #tpu.memory_space<vmem>>, vector<8x32xf32>,
    %387 = arith.index_cast %362 : i32 to index
    %c0_206 = arith.constant 0 : index
    %388 = vector.load %arg12[%387, %c0_206] : memref<64x32xf32, #tpu.memory_space<vmem>>, vector<8x32xf32>
    tpu.vector_store %arg12[%387, %c0_206], %384 {strides = array<i32>} : memref<64x32xf32, #tpu.memory_space<vmem>>, vector<8x32xf32>,
    %c5_i32_207 = arith.constant 5 : i32
    %c8_i32_208 = arith.constant 8 : i32
    %389 = arith.muli %c5_i32_207, %c8_i32_208 : i32
    %390 = tpu.assume_multiple %389, 8 : i32
    %391 = arith.index_cast %390 : i32 to index
    %c0_209 = arith.constant 0 : index
    %392 = vector.load %arg11[%391, %c0_209] : memref<64x128xf32, #tpu.memory_space<vmem>>, vector<8x128xf32>
    %c0_210 = arith.constant 0 : index
    %c0_211 = arith.constant 0 : index
    %393 = vector.load %arg13[%c0_210, %c0_211] : memref<8x32xf32, #tpu.memory_space<vmem>>, vector<8x32xf32>
    %cst_212 = arith.constant dense<0.000000e+00> : vector<8x128xf32>
    %394 = tpu.matmul %393, %248, %cst_212 {dimension_numbers = #tpu.dot_dimension_numbers<[1], [0], [0], [1], [0, 0, 1, 1], [], []>} : vector<8x32xf32>, vector<32x128xf32>, vector<8x128xf32> -> vector<8x128xf32>
    %395 = arith.addf %392, %394 : vector<8x128xf32>
    %396 = vector.extract_strided_slice %395 {offsets = [0, 0], sizes = [8, 96], strides = [1, 1]} : vector<8x128xf32> to vector<8x96xf32>
    %397 = arith.negf %396 : vector<8x96xf32>
    %398 = math.exp %397 : vector<8x96xf32>
    %cst_213 = arith.constant 1.000000e+00 : f32
    %399 = vector.broadcast %cst_213 : f32 to vector<8x96xf32>
    %400 = arith.addf %399, %398 : vector<8x96xf32>
    %401 = arith.divf %399, %400 : vector<8x96xf32>
    %402 = vector.extract_strided_slice %395 {offsets = [0, 96], sizes = [8, 32], strides = [1, 1]} : vector<8x128xf32> to vector<8x32xf32>
    %403 = math.tanh %402 : vector<8x32xf32>
    %404 = vector.extract_strided_slice %401 {offsets = [0, 0], sizes = [8, 32], strides = [1, 1]} : vector<8x96xf32> to vector<8x32xf32>
    %405 = vector.extract_strided_slice %401 {offsets = [0, 32], sizes = [8, 32], strides = [1, 1]} : vector<8x96xf32> to vector<8x32xf32>
    %406 = vector.extract_strided_slice %401 {offsets = [0, 64], sizes = [8, 32], strides = [1, 1]} : vector<8x96xf32> to vector<8x32xf32>
    %c0_214 = arith.constant 0 : index
    %c0_215 = arith.constant 0 : index
    %407 = vector.load %arg14[%c0_214, %c0_215] : memref<8x32xf32, #tpu.memory_space<vmem>>, vector<8x32xf32>
    %408 = arith.mulf %405, %407 : vector<8x32xf32>
    %409 = arith.mulf %404, %403 : vector<8x32xf32>
    %410 = arith.addf %408, %409 : vector<8x32xf32>
    %411 = math.tanh %410 : vector<8x32xf32>
    %412 = arith.mulf %406, %411 : vector<8x32xf32>
    %c0_216 = arith.constant 0 : index
    %c0_217 = arith.constant 0 : index
    %413 = vector.load %arg14[%c0_216, %c0_217] : memref<8x32xf32, #tpu.memory_space<vmem>>, vector<8x32xf32>
    tpu.vector_store %arg14[%c0_216, %c0_217], %410 {strides = array<i32>} : memref<8x32xf32, #tpu.memory_space<vmem>>, vector<8x32xf32>,
    %c0_218 = arith.constant 0 : index
    %c0_219 = arith.constant 0 : index
    %414 = vector.load %arg13[%c0_218, %c0_219] : memref<8x32xf32, #tpu.memory_space<vmem>>, vector<8x32xf32>
    tpu.vector_store %arg13[%c0_218, %c0_219], %412 {strides = array<i32>} : memref<8x32xf32, #tpu.memory_space<vmem>>, vector<8x32xf32>,
    %415 = arith.index_cast %390 : i32 to index
    %c0_220 = arith.constant 0 : index
    %416 = vector.load %arg12[%415, %c0_220] : memref<64x32xf32, #tpu.memory_space<vmem>>, vector<8x32xf32>
    tpu.vector_store %arg12[%415, %c0_220], %412 {strides = array<i32>} : memref<64x32xf32, #tpu.memory_space<vmem>>, vector<8x32xf32>,
    %c6_i32_221 = arith.constant 6 : i32
    %c8_i32_222 = arith.constant 8 : i32
    %417 = arith.muli %c6_i32_221, %c8_i32_222 : i32
    %418 = tpu.assume_multiple %417, 8 : i32
    %419 = arith.index_cast %418 : i32 to index
    %c0_223 = arith.constant 0 : index
    %420 = vector.load %arg11[%419, %c0_223] : memref<64x128xf32, #tpu.memory_space<vmem>>, vector<8x128xf32>
    %c0_224 = arith.constant 0 : index
    %c0_225 = arith.constant 0 : index
    %421 = vector.load %arg13[%c0_224, %c0_225] : memref<8x32xf32, #tpu.memory_space<vmem>>, vector<8x32xf32>
    %cst_226 = arith.constant dense<0.000000e+00> : vector<8x128xf32>
    %422 = tpu.matmul %421, %248, %cst_226 {dimension_numbers = #tpu.dot_dimension_numbers<[1], [0], [0], [1], [0, 0, 1, 1], [], []>} : vector<8x32xf32>, vector<32x128xf32>, vector<8x128xf32> -> vector<8x128xf32>
    %423 = arith.addf %420, %422 : vector<8x128xf32>
    %424 = vector.extract_strided_slice %423 {offsets = [0, 0], sizes = [8, 96], strides = [1, 1]} : vector<8x128xf32> to vector<8x96xf32>
    %425 = arith.negf %424 : vector<8x96xf32>
    %426 = math.exp %425 : vector<8x96xf32>
    %cst_227 = arith.constant 1.000000e+00 : f32
    %427 = vector.broadcast %cst_227 : f32 to vector<8x96xf32>
    %428 = arith.addf %427, %426 : vector<8x96xf32>
    %429 = arith.divf %427, %428 : vector<8x96xf32>
    %430 = vector.extract_strided_slice %423 {offsets = [0, 96], sizes = [8, 32], strides = [1, 1]} : vector<8x128xf32> to vector<8x32xf32>
    %431 = math.tanh %430 : vector<8x32xf32>
    %432 = vector.extract_strided_slice %429 {offsets = [0, 0], sizes = [8, 32], strides = [1, 1]} : vector<8x96xf32> to vector<8x32xf32>
    %433 = vector.extract_strided_slice %429 {offsets = [0, 32], sizes = [8, 32], strides = [1, 1]} : vector<8x96xf32> to vector<8x32xf32>
    %434 = vector.extract_strided_slice %429 {offsets = [0, 64], sizes = [8, 32], strides = [1, 1]} : vector<8x96xf32> to vector<8x32xf32>
    %c0_228 = arith.constant 0 : index
    %c0_229 = arith.constant 0 : index
    %435 = vector.load %arg14[%c0_228, %c0_229] : memref<8x32xf32, #tpu.memory_space<vmem>>, vector<8x32xf32>
    %436 = arith.mulf %433, %435 : vector<8x32xf32>
    %437 = arith.mulf %432, %431 : vector<8x32xf32>
    %438 = arith.addf %436, %437 : vector<8x32xf32>
    %439 = math.tanh %438 : vector<8x32xf32>
    %440 = arith.mulf %434, %439 : vector<8x32xf32>
    %c0_230 = arith.constant 0 : index
    %c0_231 = arith.constant 0 : index
    %441 = vector.load %arg14[%c0_230, %c0_231] : memref<8x32xf32, #tpu.memory_space<vmem>>, vector<8x32xf32>
    tpu.vector_store %arg14[%c0_230, %c0_231], %438 {strides = array<i32>} : memref<8x32xf32, #tpu.memory_space<vmem>>, vector<8x32xf32>,
    %c0_232 = arith.constant 0 : index
    %c0_233 = arith.constant 0 : index
    %442 = vector.load %arg13[%c0_232, %c0_233] : memref<8x32xf32, #tpu.memory_space<vmem>>, vector<8x32xf32>
    tpu.vector_store %arg13[%c0_232, %c0_233], %440 {strides = array<i32>} : memref<8x32xf32, #tpu.memory_space<vmem>>, vector<8x32xf32>,
    %443 = arith.index_cast %418 : i32 to index
    %c0_234 = arith.constant 0 : index
    %444 = vector.load %arg12[%443, %c0_234] : memref<64x32xf32, #tpu.memory_space<vmem>>, vector<8x32xf32>
    tpu.vector_store %arg12[%443, %c0_234], %440 {strides = array<i32>} : memref<64x32xf32, #tpu.memory_space<vmem>>, vector<8x32xf32>,
    %c7_i32_235 = arith.constant 7 : i32
    %c8_i32_236 = arith.constant 8 : i32
    %445 = arith.muli %c7_i32_235, %c8_i32_236 : i32
    %446 = tpu.assume_multiple %445, 8 : i32
    %447 = arith.index_cast %446 : i32 to index
    %c0_237 = arith.constant 0 : index
    %448 = vector.load %arg11[%447, %c0_237] : memref<64x128xf32, #tpu.memory_space<vmem>>, vector<8x128xf32>
    %c0_238 = arith.constant 0 : index
    %c0_239 = arith.constant 0 : index
    %449 = vector.load %arg13[%c0_238, %c0_239] : memref<8x32xf32, #tpu.memory_space<vmem>>, vector<8x32xf32>
    %cst_240 = arith.constant dense<0.000000e+00> : vector<8x128xf32>
    %450 = tpu.matmul %449, %248, %cst_240 {dimension_numbers = #tpu.dot_dimension_numbers<[1], [0], [0], [1], [0, 0, 1, 1], [], []>} : vector<8x32xf32>, vector<32x128xf32>, vector<8x128xf32> -> vector<8x128xf32>
    %451 = arith.addf %448, %450 : vector<8x128xf32>
    %452 = vector.extract_strided_slice %451 {offsets = [0, 0], sizes = [8, 96], strides = [1, 1]} : vector<8x128xf32> to vector<8x96xf32>
    %453 = arith.negf %452 : vector<8x96xf32>
    %454 = math.exp %453 : vector<8x96xf32>
    %cst_241 = arith.constant 1.000000e+00 : f32
    %455 = vector.broadcast %cst_241 : f32 to vector<8x96xf32>
    %456 = arith.addf %455, %454 : vector<8x96xf32>
    %457 = arith.divf %455, %456 : vector<8x96xf32>
    %458 = vector.extract_strided_slice %451 {offsets = [0, 96], sizes = [8, 32], strides = [1, 1]} : vector<8x128xf32> to vector<8x32xf32>
    %459 = math.tanh %458 : vector<8x32xf32>
    %460 = vector.extract_strided_slice %457 {offsets = [0, 0], sizes = [8, 32], strides = [1, 1]} : vector<8x96xf32> to vector<8x32xf32>
    %461 = vector.extract_strided_slice %457 {offsets = [0, 32], sizes = [8, 32], strides = [1, 1]} : vector<8x96xf32> to vector<8x32xf32>
    %462 = vector.extract_strided_slice %457 {offsets = [0, 64], sizes = [8, 32], strides = [1, 1]} : vector<8x96xf32> to vector<8x32xf32>
    %c0_242 = arith.constant 0 : index
    %c0_243 = arith.constant 0 : index
    %463 = vector.load %arg14[%c0_242, %c0_243] : memref<8x32xf32, #tpu.memory_space<vmem>>, vector<8x32xf32>
    %464 = arith.mulf %461, %463 : vector<8x32xf32>
    %465 = arith.mulf %460, %459 : vector<8x32xf32>
    %466 = arith.addf %464, %465 : vector<8x32xf32>
    %467 = math.tanh %466 : vector<8x32xf32>
    %468 = arith.mulf %462, %467 : vector<8x32xf32>
    %c0_244 = arith.constant 0 : index
    %c0_245 = arith.constant 0 : index
    %469 = vector.load %arg14[%c0_244, %c0_245] : memref<8x32xf32, #tpu.memory_space<vmem>>, vector<8x32xf32>
    tpu.vector_store %arg14[%c0_244, %c0_245], %466 {strides = array<i32>} : memref<8x32xf32, #tpu.memory_space<vmem>>, vector<8x32xf32>,
    %c0_246 = arith.constant 0 : index
    %c0_247 = arith.constant 0 : index
    %470 = vector.load %arg13[%c0_246, %c0_247] : memref<8x32xf32, #tpu.memory_space<vmem>>, vector<8x32xf32>
    tpu.vector_store %arg13[%c0_246, %c0_247], %468 {strides = array<i32>} : memref<8x32xf32, #tpu.memory_space<vmem>>, vector<8x32xf32>,
    %471 = arith.index_cast %446 : i32 to index
    %c0_248 = arith.constant 0 : index
    %472 = vector.load %arg12[%471, %c0_248] : memref<64x32xf32, #tpu.memory_space<vmem>>, vector<8x32xf32>
    tpu.vector_store %arg12[%471, %c0_248], %468 {strides = array<i32>} : memref<64x32xf32, #tpu.memory_space<vmem>>, vector<8x32xf32>,
    %c8_i32_249 = arith.constant 8 : i32
    %c0_250 = arith.constant 0 : index
    %c0_251 = arith.constant 0 : index
    %473 = vector.load %arg13[%c0_250, %c0_251] : memref<8x32xf32, #tpu.memory_space<vmem>>, vector<8x32xf32>
    %c0_252 = arith.constant 0 : index
    %c0_253 = arith.constant 0 : index
    %474 = vector.load %arg8[%c0_252, %c0_253] : memref<32x128xf32, #tpu.memory_space<vmem>>, vector<32x128xf32>
    %cst_254 = arith.constant dense<0.000000e+00> : vector<8x128xf32>
    %475 = tpu.matmul %473, %474, %cst_254 {dimension_numbers = #tpu.dot_dimension_numbers<[1], [0], [0], [1], [0, 0, 1, 1], [], []>} : vector<8x32xf32>, vector<32x128xf32>, vector<8x128xf32> -> vector<8x128xf32>
    %c0_255 = arith.constant 0 : index
    %c0_256 = arith.constant 0 : index
    %476 = vector.load %arg9[%c0_255, %c0_256] : memref<1x128xf32, #tpu.memory_space<vmem>>, vector<1x128xf32>
    %477 = vector.broadcast %476 : vector<1x128xf32> to vector<8x128xf32>
    %478 = arith.addf %475, %477 : vector<8x128xf32>
    %c0_257 = arith.constant 0 : index
    %c0_258 = arith.constant 0 : index
    %479 = vector.load %arg10[%c0_257, %c0_258] : memref<8x128xf32, #tpu.memory_space<vmem>>, vector<8x128xf32>
    tpu.vector_store %arg10[%c0_257, %c0_258], %478 {strides = array<i32>} : memref<8x128xf32, #tpu.memory_space<vmem>>, vector<8x128xf32>,
    return
  }
  func.func @transform_0(%arg0: i32) -> (i32, i32, i32) {
    %c0_i32 = arith.constant 0 : i32
    %c0_i32_0 = arith.constant 0 : i32
    %c0_i32_1 = arith.constant 0 : i32
    %c0_i32_2 = arith.constant 0 : i32
    return %c0_i32, %c0_i32_0, %c0_i32_1 : i32, i32, i32
  }
  func.func @transform_1(%arg0: i32) -> (i32, i32) {
    %c0_i32 = arith.constant 0 : i32
    %c0_i32_0 = arith.constant 0 : i32
    %c0_i32_1 = arith.constant 0 : i32
    return %c0_i32, %c0_i32_0 : i32, i32
  }
  func.func @transform_2(%arg0: i32) -> (i32, i32) {
    %c0_i32 = arith.constant 0 : i32
    %c0_i32_0 = arith.constant 0 : i32
    %c0_i32_1 = arith.constant 0 : i32
    return %c0_i32, %c0_i32_0 : i32, i32
  }
  func.func @transform_3(%arg0: i32) -> (i32, i32) {
    %c0_i32 = arith.constant 0 : i32
    %c0_i32_0 = arith.constant 0 : i32
    %c0_i32_1 = arith.constant 0 : i32
    return %c0_i32, %c0_i32_0 : i32, i32
  }
  func.func @transform_4(%arg0: i32) -> (i32, i32) {
    %c0_i32 = arith.constant 0 : i32
    %c0_i32_0 = arith.constant 0 : i32
    %c0_i32_1 = arith.constant 0 : i32
    return %c0_i32, %c0_i32_0 : i32, i32
  }
  func.func @transform_5(%arg0: i32) -> (i32, i32) {
    %c0_i32 = arith.constant 0 : i32
    %c0_i32_0 = arith.constant 0 : i32
    %c0_i32_1 = arith.constant 0 : i32
    return %c0_i32, %c0_i32_0 : i32, i32
  }
  func.func @transform_6(%arg0: i32) -> (i32, i32) {
    %c0_i32 = arith.constant 0 : i32
    %c0_i32_0 = arith.constant 0 : i32
    %c0_i32_1 = arith.constant 0 : i32
    return %c0_i32, %c0_i32_0 : i32, i32
  }
  func.func @transform_7(%arg0: i32) -> (i32, i32) {
    %c0_i32 = arith.constant 0 : i32
    %c0_i32_0 = arith.constant 0 : i32
    %c0_i32_1 = arith.constant 0 : i32
    return %c0_i32, %c0_i32_0 : i32, i32
  }
  func.func @transform_8(%arg0: i32) -> (i32, i32) {
    %c0_i32 = arith.constant 0 : i32
    %c0_i32_0 = arith.constant 0 : i32
    %c0_i32_1 = arith.constant 0 : i32
    return %c0_i32, %c0_i32_0 : i32, i32
  }
  func.func @transform_9(%arg0: i32) -> (i32, i32) {
    %c0_i32 = arith.constant 0 : i32
    %c0_i32_0 = arith.constant 0 : i32
    %c0_i32_1 = arith.constant 0 : i32
    return %c0_i32, %c0_i32_0 : i32, i32
  }
}

</mosaic_0001>

<llo_original>
// kernel: lstm_lm_forward.1
$region0: #{lstm_lm_forward.1}
  #allocation0 [shape = 'u32[]', space=smem, size = 0x4, offset = 0x4, fixed_abs, tag = 'smem constant byte address 0x4 - core index']
  #allocation1 [shape = 'u32[144,128]{1,0:T(1,128)}', space=vmem, size = 0x12000, scoped, tag = 'internal scratch']
  #allocation2 [shape = 'f32[64,128]{1,0:T(8,128)}', space=vmem, size = 0x8000, scoped, tag = 'scratch operand']
  #allocation3 [shape = 'f32[64,32]{1,0:T(8,128)}', space=vmem, size = 0x8000, scoped, tag = 'scratch operand']
  #allocation4 [shape = 'f32[8,32]{1,0:T(8,128)}', space=vmem, size = 0x1000, scoped, tag = 'scratch operand']
  #allocation5 [shape = 'f32[8,32]{1,0:T(8,128)}', space=vmem, size = 0x1000, scoped, tag = 'scratch operand']
  %s0 = inlined_call_operand.vmem [shape: f32[8,8,32], index: 0, kind: input, shape index: {}]
  %s1 = inlined_call_operand.vmem [shape: f32[32,128], index: 1, kind: input, shape index: {}]
  %s2 = inlined_call_operand.vmem [shape: f32[32,128], index: 2, kind: input, shape index: {}]
  %s3 = inlined_call_operand.vmem [shape: f32[1,128], index: 3, kind: input, shape index: {}]
  %s4 = inlined_call_operand.vmem [shape: f32[32,128], index: 4, kind: input, shape index: {}]
  %s5 = inlined_call_operand.vmem [shape: f32[32,128], index: 5, kind: input, shape index: {}]
  %s6 = inlined_call_operand.vmem [shape: f32[1,128], index: 6, kind: input, shape index: {}]
  %s7 = inlined_call_operand.vmem [shape: f32[32,128], index: 7, kind: input, shape index: {}]
  %s8 = inlined_call_operand.vmem [shape: f32[1,128], index: 8, kind: input, shape index: {}]
  %s9 = inlined_call_operand.vmem [shape: f32[8,128], index: 9, kind: output, shape index: {}]
  %s10 = sld [smem:[#allocation0]]
  $region46: #{lstm_lm_forward.1} parent=0
    _
  %s12 = ssub.s32 1, %s10
  %s13 = scalar_select 0, %s12, %s10
  // Predicated region
  $region2: #{lstm_lm_forward.1} parent=0 // pred_check
    _
  $region3: #{lstm_lm_forward.1} parent=0 // pred_check_branch
    %15 = sbr.rel (0) target = $region5
  $region4: #{lstm_lm_forward.1} parent=0 // pred_region
    _
  $region5: #{lstm_lm_forward.1} parent=0 // pred_fallthru
    _
  // Predicated region
  $region6: #{lstm_lm_forward.1} parent=0 // pred_check
    _
  $region7: #{lstm_lm_forward.1} parent=0 // pred_check_branch
    %17 = sbr.rel (0) target = $region9
  $region8: #{lstm_lm_forward.1} parent=0 // pred_region
    _
  $region9: #{lstm_lm_forward.1} parent=0 // pred_fallthru
    _
  // Predicated region
  $region10: #{lstm_lm_forward.1} parent=0 // pred_check
    _
  $region11: #{lstm_lm_forward.1} parent=0 // pred_check_branch
    %19 = sbr.rel (0) target = $region13
  $region12: #{lstm_lm_forward.1} parent=0 // pred_region
    _
  $region13: #{lstm_lm_forward.1} parent=0 // pred_fallthru
    _
  // Predicated region
  $region14: #{lstm_lm_forward.1} parent=0 // pred_check
    _
  $region15: #{lstm_lm_forward.1} parent=0 // pred_check_branch
    %21 = sbr.rel (0) target = $region17
  $region16: #{lstm_lm_forward.1} parent=0 // pred_region
    _
  $region17: #{lstm_lm_forward.1} parent=0 // pred_fallthru
    _
  // Predicated region
  $region18: #{lstm_lm_forward.1} parent=0 // pred_check
    _
  $region19: #{lstm_lm_forward.1} parent=0 // pred_check_branch
    %23 = sbr.rel (0) target = $region21
  $region20: #{lstm_lm_forward.1} parent=0 // pred_region
    _
  $region21: #{lstm_lm_forward.1} parent=0 // pred_fallthru
    _
  // Predicated region
  $region22: #{lstm_lm_forward.1} parent=0 // pred_check
    _
  $region23: #{lstm_lm_forward.1} parent=0 // pred_check_branch
    %25 = sbr.rel (0) target = $region25
  $region24: #{lstm_lm_forward.1} parent=0 // pred_region
    _
  $region25: #{lstm_lm_forward.1} parent=0 // pred_fallthru
    _
  // Predicated region
  $region26: #{lstm_lm_forward.1} parent=0 // pred_check
    _
  $region27: #{lstm_lm_forward.1} parent=0 // pred_check_branch
    %27 = sbr.rel (0) target = $region29
  $region28: #{lstm_lm_forward.1} parent=0 // pred_region
    _
  $region29: #{lstm_lm_forward.1} parent=0 // pred_fallthru
    _
  // Predicated region
  $region30: #{lstm_lm_forward.1} parent=0 // pred_check
    _
  $region31: #{lstm_lm_forward.1} parent=0 // pred_check_branch
    %29 = sbr.rel (0) target = $region33
  $region32: #{lstm_lm_forward.1} parent=0 // pred_region
    _
  $region33: #{lstm_lm_forward.1} parent=0 // pred_fallthru
    _
  // Predicated region
  $region34: #{lstm_lm_forward.1} parent=0 // pred_check
    _
  $region35: #{lstm_lm_forward.1} parent=0 // pred_check_branch
    %31 = sbr.rel (0) target = $region37
  $region36: #{lstm_lm_forward.1} parent=0 // pred_region
    _
  $region37: #{lstm_lm_forward.1} parent=0 // pred_fallthru
    _
  %v32 = vld [vmem:[%s0] sm:$0xff]
  %v33 = vld [vmem:[%s0 + $0x8] sm:$0xff]
  %v34 = vld [vmem:[%s0 + $0x10] sm:$0xff]
  %v35 = vld [vmem:[%s0 + $0x18] sm:$0xff]
  %v36 = vld [vmem:[%s0 + $0x20] sm:$0xff]
  %v37 = vld [vmem:[%s0 + $0x28] sm:$0xff]
  %v38 = vld [vmem:[%s0 + $0x30] sm:$0xff]
  %v39 = vld [vmem:[%s0 + $0x38] sm:$0xff]
  %v40 = vld [vmem:[%s1] sm:$0xff]
  %v41 = vld [vmem:[%s1 + $0x8] sm:$0xff]
  %v42 = vld [vmem:[%s1 + $0x10] sm:$0xff]
  %v43 = vld [vmem:[%s1 + $0x18] sm:$0xff]
  %v44 = vld [vmem:[%s3] sm:$0x1]
  %v46 = vlaneseq
  %v47 = vshrl.u32 %v46, 7
  %v48 = vsub.s32 0, %v47
  %v49 = vrot.slane %v44, %v48
  %vm51 = vcmask 261120
  %v53 = vsel %vm51, %v32, 0
  %v56 = vsel %vm51, %v33, 0
  %v59 = vsel %vm51, %v34, 0
  %v62 = vsel %vm51, %v35, 0
  %v65 = vsel %vm51, %v36, 0
  %v68 = vsel %vm51, %v37, 0
  %v71 = vsel %vm51, %v38, 0
  %v74 = vsel %vm51, %v39, 0
  %76 = vmatprep.subr.mxu0 0.0
  %77 = vmatpush1.msra.mxu0 %v40
  %78 = vmatprep.subr.mxu0 0.0
  %79 = vmatpush1.msra.mxu0 %v41
  %80 = vmatprep.subr.mxu0 0.0
  %81 = vmatpush1.msra.mxu0 %v42
  %82 = vmatprep.subr.mxu0 0.0
  %83 = vmatpush1.msra.mxu0 %v43
  %84 = vmatprep.subr.mxu0 0.0
  %85 = vmatpush1.msra.mxu0 0.0
  %86 = vmatprep.subr.mxu0 0.0
  %87 = vmatpush1.msra.mxu0 0.0
  %88 = vmatprep.subr.mxu0 0.0
  %89 = vmatpush1.msra.mxu0 0.0
  %90 = vmatprep.subr.mxu0 0.0
  %91 = vmatpush1.msra.mxu0 0.0
  %92 = vmatprep.subr.mxu0 0.0
  %93 = vmatpush1.msra.mxu0 0.0
  %94 = vmatprep.subr.mxu0 0.0
  %95 = vmatpush1.msra.mxu0 0.0
  %96 = vmatprep.subr.mxu0 0.0
  %97 = vmatpush1.msra.mxu0 0.0
  %98 = vmatprep.subr.mxu0 0.0
  %99 = vmatpush1.msra.mxu0 0.0
  %100 = vmatprep.subr.mxu0 0.0
  %101 = vmatpush1.msra.mxu0 0.0
  %102 = vmatprep.subr.mxu0 0.0
  %103 = vmatpush1.msra.mxu0 0.0
  %104 = vmatprep.subr.mxu0 0.0
  %105 = vmatpush1.msra.mxu0 0.0
  %106 = vmatprep.subr.mxu0 0.0
  %107 = vmatpush1.msra.mxu0 0.0
  %108 = vmatprep.subr.mxu0 0.0
  %109 = vmatpush1.msra.mxu0 0.0
  %110 = vmatprep.subr.mxu0 0.0
  %111 = vmatpush1.msra.mxu0 0.0
  %112 = vmatprep.subr.mxu0 0.0
  %113 = vmatpush1.msra.mxu0 0.0
  %114 = vmatprep.subr.mxu0 0.0
  %115 = vmatpush1.msra.mxu0 0.0
  %116 = vmatprep.subr.mxu0 0.0
  %117 = vmatpush1.msra.mxu0 0.0
  %118 = vmatprep.subr.mxu0 0.0
  %119 = vmatpush1.msra.mxu0 0.0
  %120 = vmatprep.subr.mxu0 0.0
  %121 = vmatpush1.msra.mxu0 0.0
  %122 = vmatprep.subr.mxu0 0.0
  %123 = vmatpush1.msra.mxu0 0.0
  %124 = vmatprep.subr.mxu0 0.0
  %125 = vmatpush1.msra.mxu0 0.0
  %126 = vmatprep.subr.mxu0 0.0
  %127 = vmatpush1.msra.mxu0 0.0
  %128 = vmatprep.subr.mxu0 0.0
  %129 = vmatpush1.msra.mxu0 0.0
  %130 = vmatprep.subr.mxu0 0.0
  %131 = vmatpush1.msra.mxu0 0.0
  %132 = vmatprep.subr.mxu0 0.0
  %133 = vmatpush1.msra.mxu0 0.0
  %134 = vmatprep.subr.mxu0 0.0
  %135 = vmatpush1.msra.mxu0 0.0
  %136 = vmatprep.subr.mxu0 0.0
  %137 = vmatpush1.msra.mxu0 0.0
  %138 = vmatprep.subr.mxu0 0.0
  %139 = vmatpush1.msra.mxu0 0.0
  %140 = vmatprep.mubr.f32.mxu0 0.0
  %141 = vmatmul.mubr.f32.gmra.mrb[0].mxu0 %v53
  %v142 = vpop.f32.mrb[0].mxu0
  %v143 = vadd.f32 %v49, %v142
  %v144 = vpop.f32.mrb[0].mxu0
  %145 = vmatprep.mubr.f32.mxu0 0.0
  %146 = vmatmul.mubr.f32.gmra.mrb[0].mxu0 %v56
  %v147 = vpop.f32.mrb[0].mxu0
  %v148 = vadd.f32 %v49, %v147
  %v149 = vpop.f32.mrb[0].mxu0
  %150 = vmatprep.mubr.f32.mxu0 0.0
  %151 = vmatmul.mubr.f32.gmra.mrb[0].mxu0 %v59
  %v152 = vpop.f32.mrb[0].mxu0
  %v153 = vadd.f32 %v49, %v152
  %v154 = vpop.f32.mrb[0].mxu0
  %155 = vmatprep.mubr.f32.mxu0 0.0
  %156 = vmatmul.mubr.f32.gmra.mrb[0].mxu0 %v62
  %v157 = vpop.f32.mrb[0].mxu0
  %v158 = vadd.f32 %v49, %v157
  %v159 = vpop.f32.mrb[0].mxu0
  %160 = vmatprep.mubr.f32.mxu0 0.0
  %161 = vmatmul.mubr.f32.gmra.mrb[0].mxu0 %v65
  %v162 = vpop.f32.mrb[0].mxu0
  %v163 = vadd.f32 %v49, %v162
  %v164 = vpop.f32.mrb[0].mxu0
  %165 = vmatprep.mubr.f32.mxu0 0.0
  %166 = vmatmul.mubr.f32.gmra.mrb[0].mxu0 %v68
  %v167 = vpop.f32.mrb[0].mxu0
  %v168 = vadd.f32 %v49, %v167
  %v169 = vpop.f32.mrb[0].mxu0
  %170 = vmatprep.mubr.f32.mxu0 0.0
  %171 = vmatmul.mubr.f32.gmra.mrb[0].mxu0 %v71
  %v172 = vpop.f32.mrb[0].mxu0
  %v173 = vadd.f32 %v49, %v172
  %v174 = vpop.f32.mrb[0].mxu0
  %175 = vmatprep.mubr.f32.mxu0 0.0
  %176 = vmatmul.mubr.f32.gmra.mrb[0].mxu0 %v74
  %v177 = vpop.f32.mrb[0].mxu0
  %v178 = vadd.f32 %v49, %v177
  %v179 = vpop.f32.mrb[0].mxu0
  %180 = vdwg.mxu0
  %181 = vst [vmem:[#allocation2] sm:$0xff] %v143
  %182 = vst [vmem:[#allocation2 + $0x8] sm:$0xff] %v148
  %183 = vst [vmem:[#allocation2 + $0x10] sm:$0xff] %v153
  %184 = vst [vmem:[#allocation2 + $0x18] sm:$0xff] %v158
  %185 = vst [vmem:[#allocation2 + $0x20] sm:$0xff] %v163
  %186 = vst [vmem:[#allocation2 + $0x28] sm:$0xff] %v168
  %187 = vst [vmem:[#allocation2 + $0x30] sm:$0xff] %v173
  %188 = vst [vmem:[#allocation2 + $0x38] sm:$0xff] %v178
  %189 = vst.msk [vmem:[#allocation4] sm:$0xff] %vm51, 0.0
  %190 = vst.msk [vmem:[#allocation5] sm:$0xff] %vm51, 0.0
  %v191 = vld [vmem:[%s2] sm:$0xff]
  %v192 = vld [vmem:[%s2 + $0x8] sm:$0xff]
  %v193 = vld [vmem:[%s2 + $0x10] sm:$0xff]
  %v194 = vld [vmem:[%s2 + $0x18] sm:$0xff]
  %v195 = vld [vmem:[#allocation2] sm:$0xff]
  %v196 = vld [vmem:[#allocation4] sm:$0xff]
  %v198 = vsel %vm51, %v196, 0
  %200 = vmatprep.subr.mxu0 0.0
  %201 = vmatpush1.msra.mxu0 %v191
  %202 = vmatprep.subr.mxu0 0.0
  %203 = vmatpush1.msra.mxu0 %v192
  %204 = vmatprep.subr.mxu0 0.0
  %205 = vmatpush1.msra.mxu0 %v193
  %206 = vmatprep.subr.mxu0 0.0
  %207 = vmatpush1.msra.mxu0 %v194
  %208 = vmatprep.subr.mxu0 0.0
  %209 = vmatpush1.msra.mxu0 0.0
  %210 = vmatprep.subr.mxu0 0.0
  %211 = vmatpush1.msra.mxu0 0.0
  %212 = vmatprep.subr.mxu0 0.0
  %213 = vmatpush1.msra.mxu0 0.0
  %214 = vmatprep.subr.mxu0 0.0
  %215 = vmatpush1.msra.mxu0 0.0
  %216 = vmatprep.subr.mxu0 0.0
  %217 = vmatpush1.msra.mxu0 0.0
  %218 = vmatprep.subr.mxu0 0.0
  %219 = vmatpush1.msra.mxu0 0.0
  %220 = vmatprep.subr.mxu0 0.0
  %221 = vmatpush1.msra.mxu0 0.0
  %222 = vmatprep.subr.mxu0 0.0
  %223 = vmatpush1.msra.mxu0 0.0
  %224 = vmatprep.subr.mxu0 0.0
  %225 = vmatpush1.msra.mxu0 0.0
  %226 = vmatprep.subr.mxu0 0.0
  %227 = vmatpush1.msra.mxu0 0.0
  %228 = vmatprep.subr.mxu0 0.0
  %229 = vmatpush1.msra.mxu0 0.0
  %230 = vmatprep.subr.mxu0 0.0
  %231 = vmatpush1.msra.mxu0 0.0
  %232 = vmatprep.subr.mxu0 0.0
  %233 = vmatpush1.msra.mxu0 0.0
  %234 = vmatprep.subr.mxu0 0.0
  %235 = vmatpush1.msra.mxu0 0.0
  %236 = vmatprep.subr.mxu0 0.0
  %237 = vmatpush1.msra.mxu0 0.0
  %238 = vmatprep.subr.mxu0 0.0
  %239 = vmatpush1.msra.mxu0 0.0
  %240 = vmatprep.subr.mxu0 0.0
  %241 = vmatpush1.msra.mxu0 0.0
  %242 = vmatprep.subr.mxu0 0.0
  %243 = vmatpush1.msra.mxu0 0.0
  %244 = vmatprep.subr.mxu0 0.0
  %245 = vmatpush1.msra.mxu0 0.0
  %246 = vmatprep.subr.mxu0 0.0
  %247 = vmatpush1.msra.mxu0 0.0
  %248 = vmatprep.subr.mxu0 0.0
  %249 = vmatpush1.msra.mxu0 0.0
  %250 = vmatprep.subr.mxu0 0.0
  %251 = vmatpush1.msra.mxu0 0.0
  %252 = vmatprep.subr.mxu0 0.0
  %253 = vmatpush1.msra.mxu0 0.0
  %254 = vmatprep.subr.mxu0 0.0
  %255 = vmatpush1.msra.mxu0 0.0
  %256 = vmatprep.subr.mxu0 0.0
  %257 = vmatpush1.msra.mxu0 0.0
  %258 = vmatprep.subr.mxu0 0.0
  %259 = vmatpush1.msra.mxu0 0.0
  %260 = vmatprep.subr.mxu0 0.0
  %261 = vmatpush1.msra.mxu0 0.0
  %262 = vmatprep.subr.mxu0 0.0
  %263 = vmatpush1.msra.mxu0 0.0
  %264 = vmatprep.mubr.f32.mxu0 0.0
  %265 = vmatmul.mubr.f32.gmra.mrb[0].mxu0 %v198
  %v266 = vpop.f32.mrb[0].mxu0
  %v267 = vadd.f32 0.0, %v266
  %v268 = vpop.f32.mrb[0].mxu0
  %269 = vdwg.mxu0
  %v270 = vadd.f32 %v195, %v267
  %v271 = vxor.u32 %v270, 2147483648
  %v272 = vmul.f32 %v271, 1.442695
  %v273 = vpow.pop %v272
  %v274 = vadd.f32 %v273, 1.0
  %v275 = vrcp.pop %v274
  %v276 = vmul.f32 1.0, %v275
  %v277 = vtanh.pop %v270
  %v278 = vld [vmem:[#allocation5] sm:$0xff]
  %280 = vrot.lane.b32.xlu0 %v278, 32
  %v281 = vpop.permute.xlu0 %280
  %v283 = vmul.f32 %v276, %v281
  %285 = vrot.lane.b32.xlu0 %v277, 32
  %v286 = vpop.permute.xlu0 %285
  %v288 = vmul.f32 %v276, %v286
  %290 = vrot.lane.b32.xlu0 %v288, 32
  %v291 = vpop.permute.xlu0 %290
  %v293 = vadd.f32 %v283, %v291
  %v294 = vtanh.pop %v293
  %296 = vrot.lane.b32.xlu0 %v294, 32
  %v297 = vpop.permute.xlu0 %296
  %v299 = vmul.f32 %v276, %v297
  %301 = vrot.lane.b32.xlu0 %v293, 96
  %v302 = vpop.permute.xlu0 %301
  %304 = vst.msk [vmem:[#allocation5] sm:$0xff] %vm51, %v302
  %306 = vrot.lane.b32.xlu0 %v299, 64
  %v307 = vpop.permute.xlu0 %306
  %309 = vst.msk [vmem:[#allocation4] sm:$0xff] %vm51, %v307
  %310 = vst.msk [vmem:[#allocation3] sm:$0xff] %vm51, %v307
  %s311 = scalar_lea.vmem [#allocation2], 8
  %v312 = vld [vmem:[%s311] sm:$0xff]
  %v313 = vld [vmem:[#allocation4] sm:$0xff]
  %v315 = vsel %vm51, %v313, 0
  %317 = vmatprep.subr.mxu0 0.0
  %318 = vmatpush1.msra.mxu0 %v191
  %319 = vmatprep.subr.mxu0 0.0
  %320 = vmatpush1.msra.mxu0 %v192
  %321 = vmatprep.subr.mxu0 0.0
  %322 = vmatpush1.msra.mxu0 %v193
  %323 = vmatprep.subr.mxu0 0.0
  %324 = vmatpush1.msra.mxu0 %v194
  %325 = vmatprep.subr.mxu0 0.0
  %326 = vmatpush1.msra.mxu0 0.0
  %327 = vmatprep.subr.mxu0 0.0
  %328 = vmatpush1.msra.mxu0 0.0
  %329 = vmatprep.subr.mxu0 0.0
  %330 = vmatpush1.msra.mxu0 0.0
  %331 = vmatprep.subr.mxu0 0.0
  %332 = vmatpush1.msra.mxu0 0.0
  %333 = vmatprep.subr.mxu0 0.0
  %334 = vmatpush1.msra.mxu0 0.0
  %335 = vmatprep.subr.mxu0 0.0
  %336 = vmatpush1.msra.mxu0 0.0
  %337 = vmatprep.subr.mxu0 0.0
  %338 = vmatpush1.msra.mxu0 0.0
  %339 = vmatprep.subr.mxu0 0.0
  %340 = vmatpush1.msra.mxu0 0.0
  %341 = vmatprep.subr.mxu0 0.0
  %342 = vmatpush1.msra.mxu0 0.0
  %343 = vmatprep.subr.mxu0 0.0
  %344 = vmatpush1.msra.mxu0 0.0
  %345 = vmatprep.subr.mxu0 0.0
  %346 = vmatpush1.msra.mxu0 0.0
  %347 = vmatprep.subr.mxu0 0.0
  %348 = vmatpush1.msra.mxu0 0.0
  %349 = vmatprep.subr.mxu0 0.0
  %350 = vmatpush1.msra.mxu0 0.0
  %351 = vmatprep.subr.mxu0 0.0
  %352 = vmatpush1.msra.mxu0 0.0
  %353 = vmatprep.subr.mxu0 0.0
  %354 = vmatpush1.msra.mxu0 0.0
  %355 = vmatprep.subr.mxu0 0.0
  %356 = vmatpush1.msra.mxu0 0.0
  %357 = vmatprep.subr.mxu0 0.0
  %358 = vmatpush1.msra.mxu0 0.0
  %359 = vmatprep.subr.mxu0 0.0
  %360 = vmatpush1.msra.mxu0 0.0
  %361 = vmatprep.subr.mxu0 0.0
  %362 = vmatpush1.msra.mxu0 0.0
  %363 = vmatprep.subr.mxu0 0.0
  %364 = vmatpush1.msra.mxu0 0.0
  %365 = vmatprep.subr.mxu0 0.0
  %366 = vmatpush1.msra.mxu0 0.0
  %367 = vmatprep.subr.mxu0 0.0
  %368 = vmatpush1.msra.mxu0 0.0
  %369 = vmatprep.subr.mxu0 0.0
  %370 = vmatpush1.msra.mxu0 0.0
  %371 = vmatprep.subr.mxu0 0.0
  %372 = vmatpush1.msra.mxu0 0.0
  %373 = vmatprep.subr.mxu0 0.0
  %374 = vmatpush1.msra.mxu0 0.0
  %375 = vmatprep.subr.mxu0 0.0
  %376 = vmatpush1.msra.mxu0 0.0
  %377 = vmatprep.subr.mxu0 0.0
  %378 = vmatpush1.msra.mxu0 0.0
  %379 = vmatprep.subr.mxu0 0.0
  %380 = vmatpush1.msra.mxu0 0.0
  %381 = vmatprep.mubr.f32.mxu0 0.0
  %382 = vmatmul.mubr.f32.gmra.mrb[0].mxu0 %v315
  %v383 = vpop.f32.mrb[0].mxu0
  %v384 = vadd.f32 0.0, %v383
  %v385 = vpop.f32.mrb[0].mxu0
  %386 = vdwg.mxu0
  %v387 = vadd.f32 %v312, %v384
  %v388 = vxor.u32 %v387, 2147483648
  %v389 = vmul.f32 %v388, 1.442695
  %v390 = vpow.pop %v389
  %v391 = vadd.f32 %v390, 1.0
  %v392 = vrcp.pop %v391
  %v393 = vmul.f32 1.0, %v392
  %v394 = vtanh.pop %v387
  %v395 = vld [vmem:[#allocation5] sm:$0xff]
  %397 = vrot.lane.b32.xlu0 %v395, 32
  %v398 = vpop.permute.xlu0 %397
  %v400 = vmul.f32 %v393, %v398
  %402 = vrot.lane.b32.xlu0 %v394, 32
  %v403 = vpop.permute.xlu0 %402
  %v405 = vmul.f32 %v393, %v403
  %407 = vrot.lane.b32.xlu0 %v405, 32
  %v408 = vpop.permute.xlu0 %407
  %v410 = vadd.f32 %v400, %v408
  %v411 = vtanh.pop %v410
  %413 = vrot.lane.b32.xlu0 %v411, 32
  %v414 = vpop.permute.xlu0 %413
  %v416 = vmul.f32 %v393, %v414
  %418 = vrot.lane.b32.xlu0 %v410, 96
  %v419 = vpop.permute.xlu0 %418
  %421 = vst.msk [vmem:[#allocation5] sm:$0xff] %vm51, %v419
  %423 = vrot.lane.b32.xlu0 %v416, 64
  %v424 = vpop.permute.xlu0 %423
  %426 = vst.msk [vmem:[#allocation4] sm:$0xff] %vm51, %v424
  %s427 = scalar_lea.vmem [#allocation3], 8
  %428 = vst.msk [vmem:[%s427] sm:$0xff] %vm51, %v424
  %s429 = scalar_lea.vmem [#allocation2], 16
  %v430 = vld [vmem:[%s429] sm:$0xff]
  %v431 = vld [vmem:[#allocation4] sm:$0xff]
  %v433 = vsel %vm51, %v431, 0
  %435 = vmatprep.subr.mxu0 0.0
  %436 = vmatpush1.msra.mxu0 %v191
  %437 = vmatprep.subr.mxu0 0.0
  %438 = vmatpush1.msra.mxu0 %v192
  %439 = vmatprep.subr.mxu0 0.0
  %440 = vmatpush1.msra.mxu0 %v193
  %441 = vmatprep.subr.mxu0 0.0
  %442 = vmatpush1.msra.mxu0 %v194
  %443 = vmatprep.subr.mxu0 0.0
  %444 = vmatpush1.msra.mxu0 0.0
  %445 = vmatprep.subr.mxu0 0.0
  %446 = vmatpush1.msra.mxu0 0.0
  %447 = vmatprep.subr.mxu0 0.0
  %448 = vmatpush1.msra.mxu0 0.0
  %449 = vmatprep.subr.mxu0 0.0
  %450 = vmatpush1.msra.mxu0 0.0
  %451 = vmatprep.subr.mxu0 0.0
  %452 = vmatpush1.msra.mxu0 0.0
  %453 = vmatprep.subr.mxu0 0.0
  %454 = vmatpush1.msra.mxu0 0.0
  %455 = vmatprep.subr.mxu0 0.0
  %456 = vmatpush1.msra.mxu0 0.0
  %457 = vmatprep.subr.mxu0 0.0
  %458 = vmatpush1.msra.mxu0 0.0
  %459 = vmatprep.subr.mxu0 0.0
  %460 = vmatpush1.msra.mxu0 0.0
  %461 = vmatprep.subr.mxu0 0.0
  %462 = vmatpush1.msra.mxu0 0.0
  %463 = vmatprep.subr.mxu0 0.0
  %464 = vmatpush1.msra.mxu0 0.0
  %465 = vmatprep.subr.mxu0 0.0
  %466 = vmatpush1.msra.mxu0 0.0
  %467 = vmatprep.subr.mxu0 0.0
  %468 = vmatpush1.msra.mxu0 0.0
  %469 = vmatprep.subr.mxu0 0.0
  %470 = vmatpush1.msra.mxu0 0.0
  %471 = vmatprep.subr.mxu0 0.0
  %472 = vmatpush1.msra.mxu0 0.0
  %473 = vmatprep.subr.mxu0 0.0
  %474 = vmatpush1.msra.mxu0 0.0
  %475 = vmatprep.subr.mxu0 0.0
  %476 = vmatpush1.msra.mxu0 0.0
  %477 = vmatprep.subr.mxu0 0.0
  %478 = vmatpush1.msra.mxu0 0.0
  %479 = vmatprep.subr.mxu0 0.0
  %480 = vmatpush1.msra.mxu0 0.0
  %481 = vmatprep.subr.mxu0 0.0
  %482 = vmatpush1.msra.mxu0 0.0
  %483 = vmatprep.subr.mxu0 0.0
  %484 = vmatpush1.msra.mxu0 0.0
  %485 = vmatprep.subr.mxu0 0.0
  %486 = vmatpush1.msra.mxu0 0.0
  %487 = vmatprep.subr.mxu0 0.0
  %488 = vmatpush1.msra.mxu0 0.0
  %489 = vmatprep.subr.mxu0 0.0
  %490 = vmatpush1.msra.mxu0 0.0
  %491 = vmatprep.subr.mxu0 0.0
  %492 = vmatpush1.msra.mxu0 0.0
  %493 = vmatprep.subr.mxu0 0.0
  %494 = vmatpush1.msra.mxu0 0.0
  %495 = vmatprep.subr.mxu0 0.0
  %496 = vmatpush1.msra.mxu0 0.0
  %497 = vmatprep.subr.mxu0 0.0
  %498 = vmatpush1.msra.mxu0 0.0
  %499 = vmatprep.mubr.f32.mxu0 0.0
  %500 = vmatmul.mubr.f32.gmra.mrb[0].mxu0 %v433
  %v501 = vpop.f32.mrb[0].mxu0
  %v502 = vadd.f32 0.0, %v501
  %v503 = vpop.f32.mrb[0].mxu0
  %504 = vdwg.mxu0
  %v505 = vadd.f32 %v430, %v502
  %v506 = vxor.u32 %v505, 2147483648
  %v507 = vmul.f32 %v506, 1.442695
  %v508 = vpow.pop %v507
  %v509 = vadd.f32 %v508, 1.0
  %v510 = vrcp.pop %v509
  %v511 = vmul.f32 1.0, %v510
  %v512 = vtanh.pop %v505
  %v513 = vld [vmem:[#allocation5] sm:$0xff]
  %515 = vrot.lane.b32.xlu0 %v513, 32
  %v516 = vpop.permute.xlu0 %515
  %v518 = vmul.f32 %v511, %v516
  %520 = vrot.lane.b32.xlu0 %v512, 32
  %v521 = vpop.permute.xlu0 %520
  %v523 = vmul.f32 %v511, %v521
  %525 = vrot.lane.b32.xlu0 %v523, 32
  %v526 = vpop.permute.xlu0 %525
  %v528 = vadd.f32 %v518, %v526
  %v529 = vtanh.pop %v528
  %531 = vrot.lane.b32.xlu0 %v529, 32
  %v532 = vpop.permute.xlu0 %531
  %v534 = vmul.f32 %v511, %v532
  %536 = vrot.lane.b32.xlu0 %v528, 96
  %v537 = vpop.permute.xlu0 %536
  %539 = vst.msk [vmem:[#allocation5] sm:$0xff] %vm51, %v537
  %541 = vrot.lane.b32.xlu0 %v534, 64
  %v542 = vpop.permute.xlu0 %541
  %544 = vst.msk [vmem:[#allocation4] sm:$0xff] %vm51, %v542
  %s545 = scalar_lea.vmem [#allocation3], 16
  %546 = vst.msk [vmem:[%s545] sm:$0xff] %vm51, %v542
  %s547 = scalar_lea.vmem [#allocation2], 24
  %v548 = vld [vmem:[%s547] sm:$0xff]
  %v549 = vld [vmem:[#allocation4] sm:$0xff]
  %v551 = vsel %vm51, %v549, 0
  %553 = vmatprep.subr.mxu0 0.0
  %554 = vmatpush1.msra.mxu0 %v191
  %555 = vmatprep.subr.mxu0 0.0
  %556 = vmatpush1.msra.mxu0 %v192
  %557 = vmatprep.subr.mxu0 0.0
  %558 = vmatpush1.msra.mxu0 %v193
  %559 = vmatprep.subr.mxu0 0.0
  %560 = vmatpush1.msra.mxu0 %v194
  %561 = vmatprep.subr.mxu0 0.0
  %562 = vmatpush1.msra.mxu0 0.0
  %563 = vmatprep.subr.mxu0 0.0
  %564 = vmatpush1.msra.mxu0 0.0
  %565 = vmatprep.subr.mxu0 0.0
  %566 = vmatpush1.msra.mxu0 0.0
  %567 = vmatprep.subr.mxu0 0.0
  %568 = vmatpush1.msra.mxu0 0.0
  %569 = vmatprep.subr.mxu0 0.0
  %570 = vmatpush1.msra.mxu0 0.0
  %571 = vmatprep.subr.mxu0 0.0
  %572 = vmatpush1.msra.mxu0 0.0
  %573 = vmatprep.subr.mxu0 0.0
  %574 = vmatpush1.msra.mxu0 0.0
  %575 = vmatprep.subr.mxu0 0.0
  %576 = vmatpush1.msra.mxu0 0.0
  %577 = vmatprep.subr.mxu0 0.0
  %578 = vmatpush1.msra.mxu0 0.0
  %579 = vmatprep.subr.mxu0 0.0
  %580 = vmatpush1.msra.mxu0 0.0
  %581 = vmatprep.subr.mxu0 0.0
  %582 = vmatpush1.msra.mxu0 0.0
  %583 = vmatprep.subr.mxu0 0.0
  %584 = vmatpush1.msra.mxu0 0.0
  %585 = vmatprep.subr.mxu0 0.0
  %586 = vmatpush1.msra.mxu0 0.0
  %587 = vmatprep.subr.mxu0 0.0
  %588 = vmatpush1.msra.mxu0 0.0
  %589 = vmatprep.subr.mxu0 0.0
  %590 = vmatpush1.msra.mxu0 0.0
  %591 = vmatprep.subr.mxu0 0.0
  %592 = vmatpush1.msra.mxu0 0.0
  %593 = vmatprep.subr.mxu0 0.0
  %594 = vmatpush1.msra.mxu0 0.0
  %595 = vmatprep.subr.mxu0 0.0
  %596 = vmatpush1.msra.mxu0 0.0
  %597 = vmatprep.subr.mxu0 0.0
  %598 = vmatpush1.msra.mxu0 0.0
  %599 = vmatprep.subr.mxu0 0.0
  %600 = vmatpush1.msra.mxu0 0.0
  %601 = vmatprep.subr.mxu0 0.0
  %602 = vmatpush1.msra.mxu0 0.0
  %603 = vmatprep.subr.mxu0 0.0
  %604 = vmatpush1.msra.mxu0 0.0
  %605 = vmatprep.subr.mxu0 0.0
  %606 = vmatpush1.msra.mxu0 0.0
  %607 = vmatprep.subr.mxu0 0.0
  %608 = vmatpush1.msra.mxu0 0.0
  %609 = vmatprep.subr.mxu0 0.0
  %610 = vmatpush1.msra.mxu0 0.0
  %611 = vmatprep.subr.mxu0 0.0
  %612 = vmatpush1.msra.mxu0 0.0
  %613 = vmatprep.subr.mxu0 0.0
  %614 = vmatpush1.msra.mxu0 0.0
  %615 = vmatprep.subr.mxu0 0.0
  %616 = vmatpush1.msra.mxu0 0.0
  %617 = vmatprep.mubr.f32.mxu0 0.0
  %618 = vmatmul.mubr.f32.gmra.mrb[0].mxu0 %v551
  %v619 = vpop.f32.mrb[0].mxu0
  %v620 = vadd.f32 0.0, %v619
  %v621 = vpop.f32.mrb[0].mxu0
  %622 = vdwg.mxu0
  %v623 = vadd.f32 %v548, %v620
  %v624 = vxor.u32 %v623, 2147483648
  %v625 = vmul.f32 %v624, 1.442695
  %v626 = vpow.pop %v625
  %v627 = vadd.f32 %v626, 1.0
  %v628 = vrcp.pop %v627
  %v629 = vmul.f32 1.0, %v628
  %v630 = vtanh.pop %v623
  %v631 = vld [vmem:[#allocation5] sm:$0xff]
  %633 = vrot.lane.b32.xlu0 %v631, 32
  %v634 = vpop.permute.xlu0 %633
  %v636 = vmul.f32 %v629, %v634
  %638 = vrot.lane.b32.xlu0 %v630, 32
  %v639 = vpop.permute.xlu0 %638
  %v641 = vmul.f32 %v629, %v639
  %643 = vrot.lane.b32.xlu0 %v641, 32
  %v644 = vpop.permute.xlu0 %643
  %v646 = vadd.f32 %v636, %v644
  %v647 = vtanh.pop %v646
  %649 = vrot.lane.b32.xlu0 %v647, 32
  %v650 = vpop.permute.xlu0 %649
  %v652 = vmul.f32 %v629, %v650
  %654 = vrot.lane.b32.xlu0 %v646, 96
  %v655 = vpop.permute.xlu0 %654
  %657 = vst.msk [vmem:[#allocation5] sm:$0xff] %vm51, %v655
  %659 = vrot.lane.b32.xlu0 %v652, 64
  %v660 = vpop.permute.xlu0 %659
  %662 = vst.msk [vmem:[#allocation4] sm:$0xff] %vm51, %v660
  %s663 = scalar_lea.vmem [#allocation3], 24
  %664 = vst.msk [vmem:[%s663] sm:$0xff] %vm51, %v660
  %s665 = scalar_lea.vmem [#allocation2], 32
  %v666 = vld [vmem:[%s665] sm:$0xff]
  %v667 = vld [vmem:[#allocation4] sm:$0xff]
  %v669 = vsel %vm51, %v667, 0
  %671 = vmatprep.subr.mxu0 0.0
  %672 = vmatpush1.msra.mxu0 %v191
  %673 = vmatprep.subr.mxu0 0.0
  %674 = vmatpush1.msra.mxu0 %v192
  %675 = vmatprep.subr.mxu0 0.0
  %676 = vmatpush1.msra.mxu0 %v193
  %677 = vmatprep.subr.mxu0 0.0
  %678 = vmatpush1.msra.mxu0 %v194
  %679 = vmatprep.subr.mxu0 0.0
  %680 = vmatpush1.msra.mxu0 0.0
  %681 = vmatprep.subr.mxu0 0.0
  %682 = vmatpush1.msra.mxu0 0.0
  %683 = vmatprep.subr.mxu0 0.0
  %684 = vmatpush1.msra.mxu0 0.0
  %685 = vmatprep.subr.mxu0 0.0
  %686 = vmatpush1.msra.mxu0 0.0
  %687 = vmatprep.subr.mxu0 0.0
  %688 = vmatpush1.msra.mxu0 0.0
  %689 = vmatprep.subr.mxu0 0.0
  %690 = vmatpush1.msra.mxu0 0.0
  %691 = vmatprep.subr.mxu0 0.0
  %692 = vmatpush1.msra.mxu0 0.0
  %693 = vmatprep.subr.mxu0 0.0
  %694 = vmatpush1.msra.mxu0 0.0
  %695 = vmatprep.subr.mxu0 0.0
  %696 = vmatpush1.msra.mxu0 0.0
  %697 = vmatprep.subr.mxu0 0.0
  %698 = vmatpush1.msra.mxu0 0.0
  %699 = vmatprep.subr.mxu0 0.0
  %700 = vmatpush1.msra.mxu0 0.0
  %701 = vmatprep.subr.mxu0 0.0
  %702 = vmatpush1.msra.mxu0 0.0
  %703 = vmatprep.subr.mxu0 0.0
  %704 = vmatpush1.msra.mxu0 0.0
  %705 = vmatprep.subr.mxu0 0.0
  %706 = vmatpush1.msra.mxu0 0.0
  %707 = vmatprep.subr.mxu0 0.0
  %708 = vmatpush1.msra.mxu0 0.0
  %709 = vmatprep.subr.mxu0 0.0
  %710 = vmatpush1.msra.mxu0 0.0
  %711 = vmatprep.subr.mxu0 0.0
  %712 = vmatpush1.msra.mxu0 0.0
  %713 = vmatprep.subr.mxu0 0.0
  %714 = vmatpush1.msra.mxu0 0.0
  %715 = vmatprep.subr.mxu0 0.0
  %716 = vmatpush1.msra.mxu0 0.0
  %717 = vmatprep.subr.mxu0 0.0
  %718 = vmatpush1.msra.mxu0 0.0
  %719 = vmatprep.subr.mxu0 0.0
  %720 = vmatpush1.msra.mxu0 0.0
  %721 = vmatprep.subr.mxu0 0.0
  %722 = vmatpush1.msra.mxu0 0.0
  %723 = vmatprep.subr.mxu0 0.0
  %724 = vmatpush1.msra.mxu0 0.0
  %725 = vmatprep.subr.mxu0 0.0
  %726 = vmatpush1.msra.mxu0 0.0
  %727 = vmatprep.subr.mxu0 0.0
  %728 = vmatpush1.msra.mxu0 0.0
  %729 = vmatprep.subr.mxu0 0.0
  %730 = vmatpush1.msra.mxu0 0.0
  %731 = vmatprep.subr.mxu0 0.0
  %732 = vmatpush1.msra.mxu0 0.0
  %733 = vmatprep.subr.mxu0 0.0
  %734 = vmatpush1.msra.mxu0 0.0
  %735 = vmatprep.mubr.f32.mxu0 0.0
  %736 = vmatmul.mubr.f32.gmra.mrb[0].mxu0 %v669
  %v737 = vpop.f32.mrb[0].mxu0
  %v738 = vadd.f32 0.0, %v737
  %v739 = vpop.f32.mrb[0].mxu0
  %740 = vdwg.mxu0
  %v741 = vadd.f32 %v666, %v738
  %v742 = vxor.u32 %v741, 2147483648
  %v743 = vmul.f32 %v742, 1.442695
  %v744 = vpow.pop %v743
  %v745 = vadd.f32 %v744, 1.0
  %v746 = vrcp.pop %v745
  %v747 = vmul.f32 1.0, %v746
  %v748 = vtanh.pop %v741
  %v749 = vld [vmem:[#allocation5] sm:$0xff]
  %751 = vrot.lane.b32.xlu0 %v749, 32
  %v752 = vpop.permute.xlu0 %751
  %v754 = vmul.f32 %v747, %v752
  %756 = vrot.lane.b32.xlu0 %v748, 32
  %v757 = vpop.permute.xlu0 %756
  %v759 = vmul.f32 %v747, %v757
  %761 = vrot.lane.b32.xlu0 %v759, 32
  %v762 = vpop.permute.xlu0 %761
  %v764 = vadd.f32 %v754, %v762
  %v765 = vtanh.pop %v764
  %767 = vrot.lane.b32.xlu0 %v765, 32
  %v768 = vpop.permute.xlu0 %767
  %v770 = vmul.f32 %v747, %v768
  %772 = vrot.lane.b32.xlu0 %v764, 96
  %v773 = vpop.permute.xlu0 %772
  %775 = vst.msk [vmem:[#allocation5] sm:$0xff] %vm51, %v773
  %777 = vrot.lane.b32.xlu0 %v770, 64
  %v778 = vpop.permute.xlu0 %777
  %780 = vst.msk [vmem:[#allocation4] sm:$0xff] %vm51, %v778
  %s781 = scalar_lea.vmem [#allocation3], 32
  %782 = vst.msk [vmem:[%s781] sm:$0xff] %vm51, %v778
  %s783 = scalar_lea.vmem [#allocation2], 40
  %v784 = vld [vmem:[%s783] sm:$0xff]
  %v785 = vld [vmem:[#allocation4] sm:$0xff]
  %v787 = vsel %vm51, %v785, 0
  %789 = vmatprep.subr.mxu0 0.0
  %790 = vmatpush1.msra.mxu0 %v191
  %791 = vmatprep.subr.mxu0 0.0
  %792 = vmatpush1.msra.mxu0 %v192
  %793 = vmatprep.subr.mxu0 0.0
  %794 = vmatpush1.msra.mxu0 %v193
  %795 = vmatprep.subr.mxu0 0.0
  %796 = vmatpush1.msra.mxu0 %v194
  %797 = vmatprep.subr.mxu0 0.0
  %798 = vmatpush1.msra.mxu0 0.0
  %799 = vmatprep.subr.mxu0 0.0
  %800 = vmatpush1.msra.mxu0 0.0
  %801 = vmatprep.subr.mxu0 0.0
  %802 = vmatpush1.msra.mxu0 0.0
  %803 = vmatprep.subr.mxu0 0.0
  %804 = vmatpush1.msra.mxu0 0.0
  %805 = vmatprep.subr.mxu0 0.0
  %806 = vmatpush1.msra.mxu0 0.0
  %807 = vmatprep.subr.mxu0 0.0
  %808 = vmatpush1.msra.mxu0 0.0
  %809 = vmatprep.subr.mxu0 0.0
  %810 = vmatpush1.msra.mxu0 0.0
  %811 = vmatprep.subr.mxu0 0.0
  %812 = vmatpush1.msra.mxu0 0.0
  %813 = vmatprep.subr.mxu0 0.0
  %814 = vmatpush1.msra.mxu0 0.0
  %815 = vmatprep.subr.mxu0 0.0
  %816 = vmatpush1.msra.mxu0 0.0
  %817 = vmatprep.subr.mxu0 0.0
  %818 = vmatpush1.msra.mxu0 0.0
  %819 = vmatprep.subr.mxu0 0.0
  %820 = vmatpush1.msra.mxu0 0.0
  %821 = vmatprep.subr.mxu0 0.0
  %822 = vmatpush1.msra.mxu0 0.0
  %823 = vmatprep.subr.mxu0 0.0
  %824 = vmatpush1.msra.mxu0 0.0
  %825 = vmatprep.subr.mxu0 0.0
  %826 = vmatpush1.msra.mxu0 0.0
  %827 = vmatprep.subr.mxu0 0.0
  %828 = vmatpush1.msra.mxu0 0.0
  %829 = vmatprep.subr.mxu0 0.0
  %830 = vmatpush1.msra.mxu0 0.0
  %831 = vmatprep.subr.mxu0 0.0
  %832 = vmatpush1.msra.mxu0 0.0
  %833 = vmatprep.subr.mxu0 0.0
  %834 = vmatpush1.msra.mxu0 0.0
  %835 = vmatprep.subr.mxu0 0.0
  %836 = vmatpush1.msra.mxu0 0.0
  %837 = vmatprep.subr.mxu0 0.0
  %838 = vmatpush1.msra.mxu0 0.0
  %839 = vmatprep.subr.mxu0 0.0
  %840 = vmatpush1.msra.mxu0 0.0
  %841 = vmatprep.subr.mxu0 0.0
  %842 = vmatpush1.msra.mxu0 0.0
  %843 = vmatprep.subr.mxu0 0.0
  %844 = vmatpush1.msra.mxu0 0.0
  %845 = vmatprep.subr.mxu0 0.0
  %846 = vmatpush1.msra.mxu0 0.0
  %847 = vmatprep.subr.mxu0 0.0
  %848 = vmatpush1.msra.mxu0 0.0
  %849 = vmatprep.subr.mxu0 0.0
  %850 = vmatpush1.msra.mxu0 0.0
  %851 = vmatprep.subr.mxu0 0.0
  %852 = vmatpush1.msra.mxu0 0.0
  %853 = vmatprep.mubr.f32.mxu0 0.0
  %854 = vmatmul.mubr.f32.gmra.mrb[0].mxu0 %v787
  %v855 = vpop.f32.mrb[0].mxu0
  %v856 = vadd.f32 0.0, %v855
  %v857 = vpop.f32.mrb[0].mxu0
  %858 = vdwg.mxu0
  %v859 = vadd.f32 %v784, %v856
  %v860 = vxor.u32 %v859, 2147483648
  %v861 = vmul.f32 %v860, 1.442695
  %v862 = vpow.pop %v861
  %v863 = vadd.f32 %v862, 1.0
  %v864 = vrcp.pop %v863
  %v865 = vmul.f32 1.0, %v864
  %v866 = vtanh.pop %v859
  %v867 = vld [vmem:[#allocation5] sm:$0xff]
  %869 = vrot.lane.b32.xlu0 %v867, 32
  %v870 = vpop.permute.xlu0 %869
  %v872 = vmul.f32 %v865, %v870
  %874 = vrot.lane.b32.xlu0 %v866, 32
  %v875 = vpop.permute.xlu0 %874
  %v877 = vmul.f32 %v865, %v875
  %879 = vrot.lane.b32.xlu0 %v877, 32
  %v880 = vpop.permute.xlu0 %879
  %v882 = vadd.f32 %v872, %v880
  %v883 = vtanh.pop %v882
  %885 = vrot.lane.b32.xlu0 %v883, 32
  %v886 = vpop.permute.xlu0 %885
  %v888 = vmul.f32 %v865, %v886
  %890 = vrot.lane.b32.xlu0 %v882, 96
  %v891 = vpop.permute.xlu0 %890
  %893 = vst.msk [vmem:[#allocation5] sm:$0xff] %vm51, %v891
  %895 = vrot.lane.b32.xlu0 %v888, 64
  %v896 = vpop.permute.xlu0 %895
  %898 = vst.msk [vmem:[#allocation4] sm:$0xff] %vm51, %v896
  %s899 = scalar_lea.vmem [#allocation3], 40
  %900 = vst.msk [vmem:[%s899] sm:$0xff] %vm51, %v896
  %s901 = scalar_lea.vmem [#allocation2], 48
  %v902 = vld [vmem:[%s901] sm:$0xff]
  %v903 = vld [vmem:[#allocation4] sm:$0xff]
  %v905 = vsel %vm51, %v903, 0
  %907 = vmatprep.subr.mxu0 0.0
  %908 = vmatpush1.msra.mxu0 %v191
  %909 = vmatprep.subr.mxu0 0.0
  %910 = vmatpush1.msra.mxu0 %v192
  %911 = vmatprep.subr.mxu0 0.0
  %912 = vmatpush1.msra.mxu0 %v193
  %913 = vmatprep.subr.mxu0 0.0
  %914 = vmatpush1.msra.mxu0 %v194
  %915 = vmatprep.subr.mxu0 0.0
  %916 = vmatpush1.msra.mxu0 0.0
  %917 = vmatprep.subr.mxu0 0.0
  %918 = vmatpush1.msra.mxu0 0.0
  %919 = vmatprep.subr.mxu0 0.0
  %920 = vmatpush1.msra.mxu0 0.0
  %921 = vmatprep.subr.mxu0 0.0
  %922 = vmatpush1.msra.mxu0 0.0
  %923 = vmatprep.subr.mxu0 0.0
  %924 = vmatpush1.msra.mxu0 0.0
  %925 = vmatprep.subr.mxu0 0.0
  %926 = vmatpush1.msra.mxu0 0.0
  %927 = vmatprep.subr.mxu0 0.0
  %928 = vmatpush1.msra.mxu0 0.0
  %929 = vmatprep.subr.mxu0 0.0
  %930 = vmatpush1.msra.mxu0 0.0
  %931 = vmatprep.subr.mxu0 0.0
  %932 = vmatpush1.msra.mxu0 0.0
  %933 = vmatprep.subr.mxu0 0.0
  %934 = vmatpush1.msra.mxu0 0.0
  %935 = vmatprep.subr.mxu0 0.0
  %936 = vmatpush1.msra.mxu0 0.0
  %937 = vmatprep.subr.mxu0 0.0
  %938 = vmatpush1.msra.mxu0 0.0
  %939 = vmatprep.subr.mxu0 0.0
  %940 = vmatpush1.msra.mxu0 0.0
  %941 = vmatprep.subr.mxu0 0.0
  %942 = vmatpush1.msra.mxu0 0.0
  %943 = vmatprep.subr.mxu0 0.0
  %944 = vmatpush1.msra.mxu0 0.0
  %945 = vmatprep.subr.mxu0 0.0
  %946 = vmatpush1.msra.mxu0 0.0
  %947 = vmatprep.subr.mxu0 0.0
  %948 = vmatpush1.msra.mxu0 0.0
  %949 = vmatprep.subr.mxu0 0.0
  %950 = vmatpush1.msra.mxu0 0.0
  %951 = vmatprep.subr.mxu0 0.0
  %952 = vmatpush1.msra.mxu0 0.0
  %953 = vmatprep.subr.mxu0 0.0
  %954 = vmatpush1.msra.mxu0 0.0
  %955 = vmatprep.subr.mxu0 0.0
  %956 = vmatpush1.msra.mxu0 0.0
  %957 = vmatprep.subr.mxu0 0.0
  %958 = vmatpush1.msra.mxu0 0.0
  %959 = vmatprep.subr.mxu0 0.0
  %960 = vmatpush1.msra.mxu0 0.0
  %961 = vmatprep.subr.mxu0 0.0
  %962 = vmatpush1.msra.mxu0 0.0
  %963 = vmatprep.subr.mxu0 0.0
  %964 = vmatpush1.msra.mxu0 0.0
  %965 = vmatprep.subr.mxu0 0.0
  %966 = vmatpush1.msra.mxu0 0.0
  %967 = vmatprep.subr.mxu0 0.0
  %968 = vmatpush1.msra.mxu0 0.0
  %969 = vmatprep.subr.mxu0 0.0
  %970 = vmatpush1.msra.mxu0 0.0
  %971 = vmatprep.mubr.f32.mxu0 0.0
  %972 = vmatmul.mubr.f32.gmra.mrb[0].mxu0 %v905
  %v973 = vpop.f32.mrb[0].mxu0
  %v974 = vadd.f32 0.0, %v973
  %v975 = vpop.f32.mrb[0].mxu0
  %976 = vdwg.mxu0
  %v977 = vadd.f32 %v902, %v974
  %v978 = vxor.u32 %v977, 2147483648
  %v979 = vmul.f32 %v978, 1.442695
  %v980 = vpow.pop %v979
  %v981 = vadd.f32 %v980, 1.0
  %v982 = vrcp.pop %v981
  %v983 = vmul.f32 1.0, %v982
  %v984 = vtanh.pop %v977
  %v985 = vld [vmem:[#allocation5] sm:$0xff]
  %987 = vrot.lane.b32.xlu0 %v985, 32
  %v988 = vpop.permute.xlu0 %987
  %v990 = vmul.f32 %v983, %v988
  %992 = vrot.lane.b32.xlu0 %v984, 32
  %v993 = vpop.permute.xlu0 %992
  %v995 = vmul.f32 %v983, %v993
  %997 = vrot.lane.b32.xlu0 %v995, 32
  %v998 = vpop.permute.xlu0 %997
  %v1000 = vadd.f32 %v990, %v998
  %v1001 = vtanh.pop %v1000
  %1003 = vrot.lane.b32.xlu0 %v1001, 32
  %v1004 = vpop.permute.xlu0 %1003
  %v1006 = vmul.f32 %v983, %v1004
  %1008 = vrot.lane.b32.xlu0 %v1000, 96
  %v1009 = vpop.permute.xlu0 %1008
  %1011 = vst.msk [vmem:[#allocation5] sm:$0xff] %vm51, %v1009
  %1013 = vrot.lane.b32.xlu0 %v1006, 64
  %v1014 = vpop.permute.xlu0 %1013
  %1016 = vst.msk [vmem:[#allocation4] sm:$0xff] %vm51, %v1014
  %s1017 = scalar_lea.vmem [#allocation3], 48
  %1018 = vst.msk [vmem:[%s1017] sm:$0xff] %vm51, %v1014
  %s1019 = scalar_lea.vmem [#allocation2], 56
  %v1020 = vld [vmem:[%s1019] sm:$0xff]
  %v1021 = vld [vmem:[#allocation4] sm:$0xff]
  %v1023 = vsel %vm51, %v1021, 0
  %1025 = vmatprep.subr.mxu0 0.0
  %1026 = vmatpush1.msra.mxu0 %v191
  %1027 = vmatprep.subr.mxu0 0.0
  %1028 = vmatpush1.msra.mxu0 %v192
  %1029 = vmatprep.subr.mxu0 0.0
  %1030 = vmatpush1.msra.mxu0 %v193
  %1031 = vmatprep.subr.mxu0 0.0
  %1032 = vmatpush1.msra.mxu0 %v194
  %1033 = vmatprep.subr.mxu0 0.0
  %1034 = vmatpush1.msra.mxu0 0.0
  %1035 = vmatprep.subr.mxu0 0.0
  %1036 = vmatpush1.msra.mxu0 0.0
  %1037 = vmatprep.subr.mxu0 0.0
  %1038 = vmatpush1.msra.mxu0 0.0
  %1039 = vmatprep.subr.mxu0 0.0
  %1040 = vmatpush1.msra.mxu0 0.0
  %1041 = vmatprep.subr.mxu0 0.0
  %1042 = vmatpush1.msra.mxu0 0.0
  %1043 = vmatprep.subr.mxu0 0.0
  %1044 = vmatpush1.msra.mxu0 0.0
  %1045 = vmatprep.subr.mxu0 0.0
  %1046 = vmatpush1.msra.mxu0 0.0
  %1047 = vmatprep.subr.mxu0 0.0
  %1048 = vmatpush1.msra.mxu0 0.0
  %1049 = vmatprep.subr.mxu0 0.0
  %1050 = vmatpush1.msra.mxu0 0.0
  %1051 = vmatprep.subr.mxu0 0.0
  %1052 = vmatpush1.msra.mxu0 0.0
  %1053 = vmatprep.subr.mxu0 0.0
  %1054 = vmatpush1.msra.mxu0 0.0
  %1055 = vmatprep.subr.mxu0 0.0
  %1056 = vmatpush1.msra.mxu0 0.0
  %1057 = vmatprep.subr.mxu0 0.0
  %1058 = vmatpush1.msra.mxu0 0.0
  %1059 = vmatprep.subr.mxu0 0.0
  %1060 = vmatpush1.msra.mxu0 0.0
  %1061 = vmatprep.subr.mxu0 0.0
  %1062 = vmatpush1.msra.mxu0 0.0
  %1063 = vmatprep.subr.mxu0 0.0
  %1064 = vmatpush1.msra.mxu0 0.0
  %1065 = vmatprep.subr.mxu0 0.0
  %1066 = vmatpush1.msra.mxu0 0.0
  %1067 = vmatprep.subr.mxu0 0.0
  %1068 = vmatpush1.msra.mxu0 0.0
  %1069 = vmatprep.subr.mxu0 0.0
  %1070 = vmatpush1.msra.mxu0 0.0
  %1071 = vmatprep.subr.mxu0 0.0
  %1072 = vmatpush1.msra.mxu0 0.0
  %1073 = vmatprep.subr.mxu0 0.0
  %1074 = vmatpush1.msra.mxu0 0.0
  %1075 = vmatprep.subr.mxu0 0.0
  %1076 = vmatpush1.msra.mxu0 0.0
  %1077 = vmatprep.subr.mxu0 0.0
  %1078 = vmatpush1.msra.mxu0 0.0
  %1079 = vmatprep.subr.mxu0 0.0
  %1080 = vmatpush1.msra.mxu0 0.0
  %1081 = vmatprep.subr.mxu0 0.0
  %1082 = vmatpush1.msra.mxu0 0.0
  %1083 = vmatprep.subr.mxu0 0.0
  %1084 = vmatpush1.msra.mxu0 0.0
  %1085 = vmatprep.subr.mxu0 0.0
  %1086 = vmatpush1.msra.mxu0 0.0
  %1087 = vmatprep.subr.mxu0 0.0
  %1088 = vmatpush1.msra.mxu0 0.0
  %1089 = vmatprep.mubr.f32.mxu0 0.0
  %1090 = vmatmul.mubr.f32.gmra.mrb[0].mxu0 %v1023
  %v1091 = vpop.f32.mrb[0].mxu0
  %v1092 = vadd.f32 0.0, %v1091
  %v1093 = vpop.f32.mrb[0].mxu0
  %1094 = vdwg.mxu0
  %v1095 = vadd.f32 %v1020, %v1092
  %v1096 = vxor.u32 %v1095, 2147483648
  %v1097 = vmul.f32 %v1096, 1.442695
  %v1098 = vpow.pop %v1097
  %v1099 = vadd.f32 %v1098, 1.0
  %v1100 = vrcp.pop %v1099
  %v1101 = vmul.f32 1.0, %v1100
  %v1102 = vtanh.pop %v1095
  %v1103 = vld [vmem:[#allocation5] sm:$0xff]
  %1105 = vrot.lane.b32.xlu0 %v1103, 32
  %v1106 = vpop.permute.xlu0 %1105
  %v1108 = vmul.f32 %v1101, %v1106
  %1110 = vrot.lane.b32.xlu0 %v1102, 32
  %v1111 = vpop.permute.xlu0 %1110
  %v1113 = vmul.f32 %v1101, %v1111
  %1115 = vrot.lane.b32.xlu0 %v1113, 32
  %v1116 = vpop.permute.xlu0 %1115
  %v1118 = vadd.f32 %v1108, %v1116
  %v1119 = vtanh.pop %v1118
  %1121 = vrot.lane.b32.xlu0 %v1119, 32
  %v1122 = vpop.permute.xlu0 %1121
  %v1124 = vmul.f32 %v1101, %v1122
  %1126 = vrot.lane.b32.xlu0 %v1118, 96
  %v1127 = vpop.permute.xlu0 %1126
  %1129 = vst.msk [vmem:[#allocation5] sm:$0xff] %vm51, %v1127
  %1131 = vrot.lane.b32.xlu0 %v1124, 64
  %v1132 = vpop.permute.xlu0 %1131
  %1134 = vst.msk [vmem:[#allocation4] sm:$0xff] %vm51, %v1132
  %s1135 = scalar_lea.vmem [#allocation3], 56
  %1136 = vst.msk [vmem:[%s1135] sm:$0xff] %vm51, %v1132
  %v1137 = vld [vmem:[#allocation3] sm:$0xff]
  %v1138 = vld [vmem:[#allocation3 + $0x8] sm:$0xff]
  %v1139 = vld [vmem:[#allocation3 + $0x10] sm:$0xff]
  %v1140 = vld [vmem:[#allocation3 + $0x18] sm:$0xff]
  %v1141 = vld [vmem:[#allocation3 + $0x20] sm:$0xff]
  %v1142 = vld [vmem:[#allocation3 + $0x28] sm:$0xff]
  %v1143 = vld [vmem:[#allocation3 + $0x30] sm:$0xff]
  %v1144 = vld [vmem:[#allocation3 + $0x38] sm:$0xff]
  %v1145 = vld [vmem:[%s4] sm:$0xff]
  %v1146 = vld [vmem:[%s4 + $0x8] sm:$0xff]
  %v1147 = vld [vmem:[%s4 + $0x10] sm:$0xff]
  %v1148 = vld [vmem:[%s4 + $0x18] sm:$0xff]
  %v1149 = vld [vmem:[%s6] sm:$0x1]
  %v1151 = vlaneseq
  %v1152 = vshrl.u32 %v1151, 7
  %v1153 = vsub.s32 0, %v1152
  %v1154 = vrot.slane %v1149, %v1153
  %v1157 = vsel %vm51, %v1137, 0
  %v1160 = vsel %vm51, %v1138, 0
  %v1163 = vsel %vm51, %v1139, 0
  %v1166 = vsel %vm51, %v1140, 0
  %v1169 = vsel %vm51, %v1141, 0
  %v1172 = vsel %vm51, %v1142, 0
  %v1175 = vsel %vm51, %v1143, 0
  %v1178 = vsel %vm51, %v1144, 0
  %1180 = vmatprep.subr.mxu0 0.0
  %1181 = vmatpush1.msra.mxu0 %v1145
  %1182 = vmatprep.subr.mxu0 0.0
  %1183 = vmatpush1.msra.mxu0 %v1146
  %1184 = vmatprep.subr.mxu0 0.0
  %1185 = vmatpush1.msra.mxu0 %v1147
  %1186 = vmatprep.subr.mxu0 0.0
  %1187 = vmatpush1.msra.mxu0 %v1148
  %1188 = vmatprep.subr.mxu0 0.0
  %1189 = vmatpush1.msra.mxu0 0.0
  %1190 = vmatprep.subr.mxu0 0.0
  %1191 = vmatpush1.msra.mxu0 0.0
  %1192 = vmatprep.subr.mxu0 0.0
  %1193 = vmatpush1.msra.mxu0 0.0
  %1194 = vmatprep.subr.mxu0 0.0
  %1195 = vmatpush1.msra.mxu0 0.0
  %1196 = vmatprep.subr.mxu0 0.0
  %1197 = vmatpush1.msra.mxu0 0.0
  %1198 = vmatprep.subr.mxu0 0.0
  %1199 = vmatpush1.msra.mxu0 0.0
  %1200 = vmatprep.subr.mxu0 0.0
  %1201 = vmatpush1.msra.mxu0 0.0
  %1202 = vmatprep.subr.mxu0 0.0
  %1203 = vmatpush1.msra.mxu0 0.0
  %1204 = vmatprep.subr.mxu0 0.0
  %1205 = vmatpush1.msra.mxu0 0.0
  %1206 = vmatprep.subr.mxu0 0.0
  %1207 = vmatpush1.msra.mxu0 0.0
  %1208 = vmatprep.subr.mxu0 0.0
  %1209 = vmatpush1.msra.mxu0 0.0
  %1210 = vmatprep.subr.mxu0 0.0
  %1211 = vmatpush1.msra.mxu0 0.0
  %1212 = vmatprep.subr.mxu0 0.0
  %1213 = vmatpush1.msra.mxu0 0.0
  %1214 = vmatprep.subr.mxu0 0.0
  %1215 = vmatpush1.msra.mxu0 0.0
  %1216 = vmatprep.subr.mxu0 0.0
  %1217 = vmatpush1.msra.mxu0 0.0
  %1218 = vmatprep.subr.mxu0 0.0
  %1219 = vmatpush1.msra.mxu0 0.0
  %1220 = vmatprep.subr.mxu0 0.0
  %1221 = vmatpush1.msra.mxu0 0.0
  %1222 = vmatprep.subr.mxu0 0.0
  %1223 = vmatpush1.msra.mxu0 0.0
  %1224 = vmatprep.subr.mxu0 0.0
  %1225 = vmatpush1.msra.mxu0 0.0
  %1226 = vmatprep.subr.mxu0 0.0
  %1227 = vmatpush1.msra.mxu0 0.0
  %1228 = vmatprep.subr.mxu0 0.0
  %1229 = vmatpush1.msra.mxu0 0.0
  %1230 = vmatprep.subr.mxu0 0.0
  %1231 = vmatpush1.msra.mxu0 0.0
  %1232 = vmatprep.subr.mxu0 0.0
  %1233 = vmatpush1.msra.mxu0 0.0
  %1234 = vmatprep.subr.mxu0 0.0
  %1235 = vmatpush1.msra.mxu0 0.0
  %1236 = vmatprep.subr.mxu0 0.0
  %1237 = vmatpush1.msra.mxu0 0.0
  %1238 = vmatprep.subr.mxu0 0.0
  %1239 = vmatpush1.msra.mxu0 0.0
  %1240 = vmatprep.subr.mxu0 0.0
  %1241 = vmatpush1.msra.mxu0 0.0
  %1242 = vmatprep.subr.mxu0 0.0
  %1243 = vmatpush1.msra.mxu0 0.0
  %1244 = vmatprep.mubr.f32.mxu0 0.0
  %1245 = vmatmul.mubr.f32.gmra.mrb[0].mxu0 %v1157
  %v1246 = vpop.f32.mrb[0].mxu0
  %v1247 = vadd.f32 %v1154, %v1246
  %v1248 = vpop.f32.mrb[0].mxu0
  %1249 = vmatprep.mubr.f32.mxu0 0.0
  %1250 = vmatmul.mubr.f32.gmra.mrb[0].mxu0 %v1160
  %v1251 = vpop.f32.mrb[0].mxu0
  %v1252 = vadd.f32 %v1154, %v1251
  %v1253 = vpop.f32.mrb[0].mxu0
  %1254 = vmatprep.mubr.f32.mxu0 0.0
  %1255 = vmatmul.mubr.f32.gmra.mrb[0].mxu0 %v1163
  %v1256 = vpop.f32.mrb[0].mxu0
  %v1257 = vadd.f32 %v1154, %v1256
  %v1258 = vpop.f32.mrb[0].mxu0
  %1259 = vmatprep.mubr.f32.mxu0 0.0
  %1260 = vmatmul.mubr.f32.gmra.mrb[0].mxu0 %v1166
  %v1261 = vpop.f32.mrb[0].mxu0
  %v1262 = vadd.f32 %v1154, %v1261
  %v1263 = vpop.f32.mrb[0].mxu0
  %1264 = vmatprep.mubr.f32.mxu0 0.0
  %1265 = vmatmul.mubr.f32.gmra.mrb[0].mxu0 %v1169
  %v1266 = vpop.f32.mrb[0].mxu0
  %v1267 = vadd.f32 %v1154, %v1266
  %v1268 = vpop.f32.mrb[0].mxu0
  %1269 = vmatprep.mubr.f32.mxu0 0.0
  %1270 = vmatmul.mubr.f32.gmra.mrb[0].mxu0 %v1172
  %v1271 = vpop.f32.mrb[0].mxu0
  %v1272 = vadd.f32 %v1154, %v1271
  %v1273 = vpop.f32.mrb[0].mxu0
  %1274 = vmatprep.mubr.f32.mxu0 0.0
  %1275 = vmatmul.mubr.f32.gmra.mrb[0].mxu0 %v1175
  %v1276 = vpop.f32.mrb[0].mxu0
  %v1277 = vadd.f32 %v1154, %v1276
  %v1278 = vpop.f32.mrb[0].mxu0
  %1279 = vmatprep.mubr.f32.mxu0 0.0
  %1280 = vmatmul.mubr.f32.gmra.mrb[0].mxu0 %v1178
  %v1281 = vpop.f32.mrb[0].mxu0
  %v1282 = vadd.f32 %v1154, %v1281
  %v1283 = vpop.f32.mrb[0].mxu0
  %1284 = vdwg.mxu0
  %1285 = vst [vmem:[#allocation2] sm:$0xff] %v1247
  %1286 = vst [vmem:[#allocation2 + $0x8] sm:$0xff] %v1252
  %1287 = vst [vmem:[#allocation2 + $0x10] sm:$0xff] %v1257
  %1288 = vst [vmem:[#allocation2 + $0x18] sm:$0xff] %v1262
  %1289 = vst [vmem:[#allocation2 + $0x20] sm:$0xff] %v1267
  %1290 = vst [vmem:[#allocation2 + $0x28] sm:$0xff] %v1272
  %1291 = vst [vmem:[#allocation2 + $0x30] sm:$0xff] %v1277
  %1292 = vst [vmem:[#allocation2 + $0x38] sm:$0xff] %v1282
  %1293 = vst.msk [vmem:[#allocation4] sm:$0xff] %vm51, 0.0
  %1294 = vst.msk [vmem:[#allocation5] sm:$0xff] %vm51, 0.0
  %v1295 = vld [vmem:[%s5] sm:$0xff]
  %v1296 = vld [vmem:[%s5 + $0x8] sm:$0xff]
  %v1297 = vld [vmem:[%s5 + $0x10] sm:$0xff]
  %v1298 = vld [vmem:[%s5 + $0x18] sm:$0xff]
  %v1299 = vld [vmem:[#allocation2] sm:$0xff]
  %v1300 = vld [vmem:[#allocation4] sm:$0xff]
  %v1302 = vsel %vm51, %v1300, 0
  %1304 = vmatprep.subr.mxu0 0.0
  %1305 = vmatpush1.msra.mxu0 %v1295
  %1306 = vmatprep.subr.mxu0 0.0
  %1307 = vmatpush1.msra.mxu0 %v1296
  %1308 = vmatprep.subr.mxu0 0.0
  %1309 = vmatpush1.msra.mxu0 %v1297
  %1310 = vmatprep.subr.mxu0 0.0
  %1311 = vmatpush1.msra.mxu0 %v1298
  %1312 = vmatprep.subr.mxu0 0.0
  %1313 = vmatpush1.msra.mxu0 0.0
  %1314 = vmatprep.subr.mxu0 0.0
  %1315 = vmatpush1.msra.mxu0 0.0
  %1316 = vmatprep.subr.mxu0 0.0
  %1317 = vmatpush1.msra.mxu0 0.0
  %1318 = vmatprep.subr.mxu0 0.0
  %1319 = vmatpush1.msra.mxu0 0.0
  %1320 = vmatprep.subr.mxu0 0.0
  %1321 = vmatpush1.msra.mxu0 0.0
  %1322 = vmatprep.subr.mxu0 0.0
  %1323 = vmatpush1.msra.mxu0 0.0
  %1324 = vmatprep.subr.mxu0 0.0
  %1325 = vmatpush1.msra.mxu0 0.0
  %1326 = vmatprep.subr.mxu0 0.0
  %1327 = vmatpush1.msra.mxu0 0.0
  %1328 = vmatprep.subr.mxu0 0.0
  %1329 = vmatpush1.msra.mxu0 0.0
  %1330 = vmatprep.subr.mxu0 0.0
  %1331 = vmatpush1.msra.mxu0 0.0
  %1332 = vmatprep.subr.mxu0 0.0
  %1333 = vmatpush1.msra.mxu0 0.0
  %1334 = vmatprep.subr.mxu0 0.0
  %1335 = vmatpush1.msra.mxu0 0.0
  %1336 = vmatprep.subr.mxu0 0.0
  %1337 = vmatpush1.msra.mxu0 0.0
  %1338 = vmatprep.subr.mxu0 0.0
  %1339 = vmatpush1.msra.mxu0 0.0
  %1340 = vmatprep.subr.mxu0 0.0
  %1341 = vmatpush1.msra.mxu0 0.0
  %1342 = vmatprep.subr.mxu0 0.0
  %1343 = vmatpush1.msra.mxu0 0.0
  %1344 = vmatprep.subr.mxu0 0.0
  %1345 = vmatpush1.msra.mxu0 0.0
  %1346 = vmatprep.subr.mxu0 0.0
  %1347 = vmatpush1.msra.mxu0 0.0
  %1348 = vmatprep.subr.mxu0 0.0
  %1349 = vmatpush1.msra.mxu0 0.0
  %1350 = vmatprep.subr.mxu0 0.0
  %1351 = vmatpush1.msra.mxu0 0.0
  %1352 = vmatprep.subr.mxu0 0.0
  %1353 = vmatpush1.msra.mxu0 0.0
  %1354 = vmatprep.subr.mxu0 0.0
  %1355 = vmatpush1.msra.mxu0 0.0
  %1356 = vmatprep.subr.mxu0 0.0
  %1357 = vmatpush1.msra.mxu0 0.0
  %1358 = vmatprep.subr.mxu0 0.0
  %1359 = vmatpush1.msra.mxu0 0.0
  %1360 = vmatprep.subr.mxu0 0.0
  %1361 = vmatpush1.msra.mxu0 0.0
  %1362 = vmatprep.subr.mxu0 0.0
  %1363 = vmatpush1.msra.mxu0 0.0
  %1364 = vmatprep.subr.mxu0 0.0
  %1365 = vmatpush1.msra.mxu0 0.0
  %1366 = vmatprep.subr.mxu0 0.0
  %1367 = vmatpush1.msra.mxu0 0.0
  %1368 = vmatprep.mubr.f32.mxu0 0.0
  %1369 = vmatmul.mubr.f32.gmra.mrb[0].mxu0 %v1302
  %v1370 = vpop.f32.mrb[0].mxu0
  %v1371 = vadd.f32 0.0, %v1370
  %v1372 = vpop.f32.mrb[0].mxu0
  %1373 = vdwg.mxu0
  %v1374 = vadd.f32 %v1299, %v1371
  %v1375 = vxor.u32 %v1374, 2147483648
  %v1376 = vmul.f32 %v1375, 1.442695
  %v1377 = vpow.pop %v1376
  %v1378 = vadd.f32 %v1377, 1.0
  %v1379 = vrcp.pop %v1378
  %v1380 = vmul.f32 1.0, %v1379
  %v1381 = vtanh.pop %v1374
  %v1382 = vld [vmem:[#allocation5] sm:$0xff]
  %1384 = vrot.lane.b32.xlu0 %v1382, 32
  %v1385 = vpop.permute.xlu0 %1384
  %v1387 = vmul.f32 %v1380, %v1385
  %1389 = vrot.lane.b32.xlu0 %v1381, 32
  %v1390 = vpop.permute.xlu0 %1389
  %v1392 = vmul.f32 %v1380, %v1390
  %1394 = vrot.lane.b32.xlu0 %v1392, 32
  %v1395 = vpop.permute.xlu0 %1394
  %v1397 = vadd.f32 %v1387, %v1395
  %v1398 = vtanh.pop %v1397
  %1400 = vrot.lane.b32.xlu0 %v1398, 32
  %v1401 = vpop.permute.xlu0 %1400
  %v1403 = vmul.f32 %v1380, %v1401
  %1405 = vrot.lane.b32.xlu0 %v1397, 96
  %v1406 = vpop.permute.xlu0 %1405
  %1408 = vst.msk [vmem:[#allocation5] sm:$0xff] %vm51, %v1406
  %1410 = vrot.lane.b32.xlu0 %v1403, 64
  %v1411 = vpop.permute.xlu0 %1410
  %1413 = vst.msk [vmem:[#allocation4] sm:$0xff] %vm51, %v1411
  %1414 = vst.msk [vmem:[#allocation3] sm:$0xff] %vm51, %v1411
  %v1415 = vld [vmem:[%s311] sm:$0xff]
  %v1416 = vld [vmem:[#allocation4] sm:$0xff]
  %v1418 = vsel %vm51, %v1416, 0
  %1420 = vmatprep.subr.mxu0 0.0
  %1421 = vmatpush1.msra.mxu0 %v1295
  %1422 = vmatprep.subr.mxu0 0.0
  %1423 = vmatpush1.msra.mxu0 %v1296
  %1424 = vmatprep.subr.mxu0 0.0
  %1425 = vmatpush1.msra.mxu0 %v1297
  %1426 = vmatprep.subr.mxu0 0.0
  %1427 = vmatpush1.msra.mxu0 %v1298
  %1428 = vmatprep.subr.mxu0 0.0
  %1429 = vmatpush1.msra.mxu0 0.0
  %1430 = vmatprep.subr.mxu0 0.0
  %1431 = vmatpush1.msra.mxu0 0.0
  %1432 = vmatprep.subr.mxu0 0.0
  %1433 = vmatpush1.msra.mxu0 0.0
  %1434 = vmatprep.subr.mxu0 0.0
  %1435 = vmatpush1.msra.mxu0 0.0
  %1436 = vmatprep.subr.mxu0 0.0
  %1437 = vmatpush1.msra.mxu0 0.0
  %1438 = vmatprep.subr.mxu0 0.0
  %1439 = vmatpush1.msra.mxu0 0.0
  %1440 = vmatprep.subr.mxu0 0.0
  %1441 = vmatpush1.msra.mxu0 0.0
  %1442 = vmatprep.subr.mxu0 0.0
  %1443 = vmatpush1.msra.mxu0 0.0
  %1444 = vmatprep.subr.mxu0 0.0
  %1445 = vmatpush1.msra.mxu0 0.0
  %1446 = vmatprep.subr.mxu0 0.0
  %1447 = vmatpush1.msra.mxu0 0.0
  %1448 = vmatprep.subr.mxu0 0.0
  %1449 = vmatpush1.msra.mxu0 0.0
  %1450 = vmatprep.subr.mxu0 0.0
  %1451 = vmatpush1.msra.mxu0 0.0
  %1452 = vmatprep.subr.mxu0 0.0
  %1453 = vmatpush1.msra.mxu0 0.0
  %1454 = vmatprep.subr.mxu0 0.0
  %1455 = vmatpush1.msra.mxu0 0.0
  %1456 = vmatprep.subr.mxu0 0.0
  %1457 = vmatpush1.msra.mxu0 0.0
  %1458 = vmatprep.subr.mxu0 0.0
  %1459 = vmatpush1.msra.mxu0 0.0
  %1460 = vmatprep.subr.mxu0 0.0
  %1461 = vmatpush1.msra.mxu0 0.0
  %1462 = vmatprep.subr.mxu0 0.0
  %1463 = vmatpush1.msra.mxu0 0.0
  %1464 = vmatprep.subr.mxu0 0.0
  %1465 = vmatpush1.msra.mxu0 0.0
  %1466 = vmatprep.subr.mxu0 0.0
  %1467 = vmatpush1.msra.mxu0 0.0
  %1468 = vmatprep.subr.mxu0 0.0
  %1469 = vmatpush1.msra.mxu0 0.0
  %1470 = vmatprep.subr.mxu0 0.0
  %1471 = vmatpush1.msra.mxu0 0.0
  %1472 = vmatprep.subr.mxu0 0.0
  %1473 = vmatpush1.msra.mxu0 0.0
  %1474 = vmatprep.subr.mxu0 0.0
  %1475 = vmatpush1.msra.mxu0 0.0
  %1476 = vmatprep.subr.mxu0 0.0
  %1477 = vmatpush1.msra.mxu0 0.0
  %1478 = vmatprep.subr.mxu0 0.0
  %1479 = vmatpush1.msra.mxu0 0.0
  %1480 = vmatprep.subr.mxu0 0.0
  %1481 = vmatpush1.msra.mxu0 0.0
  %1482 = vmatprep.subr.mxu0 0.0
  %1483 = vmatpush1.msra.mxu0 0.0
  %1484 = vmatprep.mubr.f32.mxu0 0.0
  %1485 = vmatmul.mubr.f32.gmra.mrb[0].mxu0 %v1418
  %v1486 = vpop.f32.mrb[0].mxu0
  %v1487 = vadd.f32 0.0, %v1486
  %v1488 = vpop.f32.mrb[0].mxu0
  %1489 = vdwg.mxu0
  %v1490 = vadd.f32 %v1415, %v1487
  %v1491 = vxor.u32 %v1490, 2147483648
  %v1492 = vmul.f32 %v1491, 1.442695
  %v1493 = vpow.pop %v1492
  %v1494 = vadd.f32 %v1493, 1.0
  %v1495 = vrcp.pop %v1494
  %v1496 = vmul.f32 1.0, %v1495
  %v1497 = vtanh.pop %v1490
  %v1498 = vld [vmem:[#allocation5] sm:$0xff]
  %1500 = vrot.lane.b32.xlu0 %v1498, 32
  %v1501 = vpop.permute.xlu0 %1500
  %v1503 = vmul.f32 %v1496, %v1501
  %1505 = vrot.lane.b32.xlu0 %v1497, 32
  %v1506 = vpop.permute.xlu0 %1505
  %v1508 = vmul.f32 %v1496, %v1506
  %1510 = vrot.lane.b32.xlu0 %v1508, 32
  %v1511 = vpop.permute.xlu0 %1510
  %v1513 = vadd.f32 %v1503, %v1511
  %v1514 = vtanh.pop %v1513
  %1516 = vrot.lane.b32.xlu0 %v1514, 32
  %v1517 = vpop.permute.xlu0 %1516
  %v1519 = vmul.f32 %v1496, %v1517
  %1521 = vrot.lane.b32.xlu0 %v1513, 96
  %v1522 = vpop.permute.xlu0 %1521
  %1524 = vst.msk [vmem:[#allocation5] sm:$0xff] %vm51, %v1522
  %1526 = vrot.lane.b32.xlu0 %v1519, 64
  %v1527 = vpop.permute.xlu0 %1526
  %1529 = vst.msk [vmem:[#allocation4] sm:$0xff] %vm51, %v1527
  %1530 = vst.msk [vmem:[%s427] sm:$0xff] %vm51, %v1527
  %v1531 = vld [vmem:[%s429] sm:$0xff]
  %v1532 = vld [vmem:[#allocation4] sm:$0xff]
  %v1534 = vsel %vm51, %v1532, 0
  %1536 = vmatprep.subr.mxu0 0.0
  %1537 = vmatpush1.msra.mxu0 %v1295
  %1538 = vmatprep.subr.mxu0 0.0
  %1539 = vmatpush1.msra.mxu0 %v1296
  %1540 = vmatprep.subr.mxu0 0.0
  %1541 = vmatpush1.msra.mxu0 %v1297
  %1542 = vmatprep.subr.mxu0 0.0
  %1543 = vmatpush1.msra.mxu0 %v1298
  %1544 = vmatprep.subr.mxu0 0.0
  %1545 = vmatpush1.msra.mxu0 0.0
  %1546 = vmatprep.subr.mxu0 0.0
  %1547 = vmatpush1.msra.mxu0 0.0
  %1548 = vmatprep.subr.mxu0 0.0
  %1549 = vmatpush1.msra.mxu0 0.0
  %1550 = vmatprep.subr.mxu0 0.0
  %1551 = vmatpush1.msra.mxu0 0.0
  %1552 = vmatprep.subr.mxu0 0.0
  %1553 = vmatpush1.msra.mxu0 0.0
  %1554 = vmatprep.subr.mxu0 0.0
  %1555 = vmatpush1.msra.mxu0 0.0
  %1556 = vmatprep.subr.mxu0 0.0
  %1557 = vmatpush1.msra.mxu0 0.0
  %1558 = vmatprep.subr.mxu0 0.0
  %1559 = vmatpush1.msra.mxu0 0.0
  %1560 = vmatprep.subr.mxu0 0.0
  %1561 = vmatpush1.msra.mxu0 0.0
  %1562 = vmatprep.subr.mxu0 0.0
  %1563 = vmatpush1.msra.mxu0 0.0
  %1564 = vmatprep.subr.mxu0 0.0
  %1565 = vmatpush1.msra.mxu0 0.0
  %1566 = vmatprep.subr.mxu0 0.0
  %1567 = vmatpush1.msra.mxu0 0.0
  %1568 = vmatprep.subr.mxu0 0.0
  %1569 = vmatpush1.msra.mxu0 0.0
  %1570 = vmatprep.subr.mxu0 0.0
  %1571 = vmatpush1.msra.mxu0 0.0
  %1572 = vmatprep.subr.mxu0 0.0
  %1573 = vmatpush1.msra.mxu0 0.0
  %1574 = vmatprep.subr.mxu0 0.0
  %1575 = vmatpush1.msra.mxu0 0.0
  %1576 = vmatprep.subr.mxu0 0.0
  %1577 = vmatpush1.msra.mxu0 0.0
  %1578 = vmatprep.subr.mxu0 0.0
  %1579 = vmatpush1.msra.mxu0 0.0
  %1580 = vmatprep.subr.mxu0 0.0
  %1581 = vmatpush1.msra.mxu0 0.0
  %1582 = vmatprep.subr.mxu0 0.0
  %1583 = vmatpush1.msra.mxu0 0.0
  %1584 = vmatprep.subr.mxu0 0.0
  %1585 = vmatpush1.msra.mxu0 0.0
  %1586 = vmatprep.subr.mxu0 0.0
  %1587 = vmatpush1.msra.mxu0 0.0
  %1588 = vmatprep.subr.mxu0 0.0
  %1589 = vmatpush1.msra.mxu0 0.0
  %1590 = vmatprep.subr.mxu0 0.0
  %1591 = vmatpush1.msra.mxu0 0.0
  %1592 = vmatprep.subr.mxu0 0.0
  %1593 = vmatpush1.msra.mxu0 0.0
  %1594 = vmatprep.subr.mxu0 0.0
  %1595 = vmatpush1.msra.mxu0 0.0
  %1596 = vmatprep.subr.mxu0 0.0
  %1597 = vmatpush1.msra.mxu0 0.0
  %1598 = vmatprep.subr.mxu0 0.0
  %1599 = vmatpush1.msra.mxu0 0.0
  %1600 = vmatprep.mubr.f32.mxu0 0.0
  %1601 = vmatmul.mubr.f32.gmra.mrb[0].mxu0 %v1534
  %v1602 = vpop.f32.mrb[0].mxu0
  %v1603 = vadd.f32 0.0, %v1602
  %v1604 = vpop.f32.mrb[0].mxu0
  %1605 = vdwg.mxu0
  %v1606 = vadd.f32 %v1531, %v1603
  %v1607 = vxor.u32 %v1606, 2147483648
  %v1608 = vmul.f32 %v1607, 1.442695
  %v1609 = vpow.pop %v1608
  %v1610 = vadd.f32 %v1609, 1.0
  %v1611 = vrcp.pop %v1610
  %v1612 = vmul.f32 1.0, %v1611
  %v1613 = vtanh.pop %v1606
  %v1614 = vld [vmem:[#allocation5] sm:$0xff]
  %1616 = vrot.lane.b32.xlu0 %v1614, 32
  %v1617 = vpop.permute.xlu0 %1616
  %v1619 = vmul.f32 %v1612, %v1617
  %1621 = vrot.lane.b32.xlu0 %v1613, 32
  %v1622 = vpop.permute.xlu0 %1621
  %v1624 = vmul.f32 %v1612, %v1622
  %1626 = vrot.lane.b32.xlu0 %v1624, 32
  %v1627 = vpop.permute.xlu0 %1626
  %v1629 = vadd.f32 %v1619, %v1627
  %v1630 = vtanh.pop %v1629
  %1632 = vrot.lane.b32.xlu0 %v1630, 32
  %v1633 = vpop.permute.xlu0 %1632
  %v1635 = vmul.f32 %v1612, %v1633
  %1637 = vrot.lane.b32.xlu0 %v1629, 96
  %v1638 = vpop.permute.xlu0 %1637
  %1640 = vst.msk [vmem:[#allocation5] sm:$0xff] %vm51, %v1638
  %1642 = vrot.lane.b32.xlu0 %v1635, 64
  %v1643 = vpop.permute.xlu0 %1642
  %1645 = vst.msk [vmem:[#allocation4] sm:$0xff] %vm51, %v1643
  %1646 = vst.msk [vmem:[%s545] sm:$0xff] %vm51, %v1643
  %v1647 = vld [vmem:[%s547] sm:$0xff]
  %v1648 = vld [vmem:[#allocation4] sm:$0xff]
  %v1650 = vsel %vm51, %v1648, 0
  %1652 = vmatprep.subr.mxu0 0.0
  %1653 = vmatpush1.msra.mxu0 %v1295
  %1654 = vmatprep.subr.mxu0 0.0
  %1655 = vmatpush1.msra.mxu0 %v1296
  %1656 = vmatprep.subr.mxu0 0.0
  %1657 = vmatpush1.msra.mxu0 %v1297
  %1658 = vmatprep.subr.mxu0 0.0
  %1659 = vmatpush1.msra.mxu0 %v1298
  %1660 = vmatprep.subr.mxu0 0.0
  %1661 = vmatpush1.msra.mxu0 0.0
  %1662 = vmatprep.subr.mxu0 0.0
  %1663 = vmatpush1.msra.mxu0 0.0
  %1664 = vmatprep.subr.mxu0 0.0
  %1665 = vmatpush1.msra.mxu0 0.0
  %1666 = vmatprep.subr.mxu0 0.0
  %1667 = vmatpush1.msra.mxu0 0.0
  %1668 = vmatprep.subr.mxu0 0.0
  %1669 = vmatpush1.msra.mxu0 0.0
  %1670 = vmatprep.subr.mxu0 0.0
  %1671 = vmatpush1.msra.mxu0 0.0
  %1672 = vmatprep.subr.mxu0 0.0
  %1673 = vmatpush1.msra.mxu0 0.0
  %1674 = vmatprep.subr.mxu0 0.0
  %1675 = vmatpush1.msra.mxu0 0.0
  %1676 = vmatprep.subr.mxu0 0.0
  %1677 = vmatpush1.msra.mxu0 0.0
  %1678 = vmatprep.subr.mxu0 0.0
  %1679 = vmatpush1.msra.mxu0 0.0
  %1680 = vmatprep.subr.mxu0 0.0
  %1681 = vmatpush1.msra.mxu0 0.0
  %1682 = vmatprep.subr.mxu0 0.0
  %1683 = vmatpush1.msra.mxu0 0.0
  %1684 = vmatprep.subr.mxu0 0.0
  %1685 = vmatpush1.msra.mxu0 0.0
  %1686 = vmatprep.subr.mxu0 0.0
  %1687 = vmatpush1.msra.mxu0 0.0
  %1688 = vmatprep.subr.mxu0 0.0
  %1689 = vmatpush1.msra.mxu0 0.0
  %1690 = vmatprep.subr.mxu0 0.0
  %1691 = vmatpush1.msra.mxu0 0.0
  %1692 = vmatprep.subr.mxu0 0.0
  %1693 = vmatpush1.msra.mxu0 0.0
  %1694 = vmatprep.subr.mxu0 0.0
  %1695 = vmatpush1.msra.mxu0 0.0
  %1696 = vmatprep.subr.mxu0 0.0
  %1697 = vmatpush1.msra.mxu0 0.0
  %1698 = vmatprep.subr.mxu0 0.0
  %1699 = vmatpush1.msra.mxu0 0.0
  %1700 = vmatprep.subr.mxu0 0.0
  %1701 = vmatpush1.msra.mxu0 0.0
  %1702 = vmatprep.subr.mxu0 0.0
  %1703 = vmatpush1.msra.mxu0 0.0
  %1704 = vmatprep.subr.mxu0 0.0
  %1705 = vmatpush1.msra.mxu0 0.0
  %1706 = vmatprep.subr.mxu0 0.0
  %1707 = vmatpush1.msra.mxu0 0.0
  %1708 = vmatprep.subr.mxu0 0.0
  %1709 = vmatpush1.msra.mxu0 0.0
  %1710 = vmatprep.subr.mxu0 0.0
  %1711 = vmatpush1.msra.mxu0 0.0
  %1712 = vmatprep.subr.mxu0 0.0
  %1713 = vmatpush1.msra.mxu0 0.0
  %1714 = vmatprep.subr.mxu0 0.0
  %1715 = vmatpush1.msra.mxu0 0.0
  %1716 = vmatprep.mubr.f32.mxu0 0.0
  %1717 = vmatmul.mubr.f32.gmra.mrb[0].mxu0 %v1650
  %v1718 = vpop.f32.mrb[0].mxu0
  %v1719 = vadd.f32 0.0, %v1718
  %v1720 = vpop.f32.mrb[0].mxu0
  %1721 = vdwg.mxu0
  %v1722 = vadd.f32 %v1647, %v1719
  %v1723 = vxor.u32 %v1722, 2147483648
  %v1724 = vmul.f32 %v1723, 1.442695
  %v1725 = vpow.pop %v1724
  %v1726 = vadd.f32 %v1725, 1.0
  %v1727 = vrcp.pop %v1726
  %v1728 = vmul.f32 1.0, %v1727
  %v1729 = vtanh.pop %v1722
  %v1730 = vld [vmem:[#allocation5] sm:$0xff]
  %1732 = vrot.lane.b32.xlu0 %v1730, 32
  %v1733 = vpop.permute.xlu0 %1732
  %v1735 = vmul.f32 %v1728, %v1733
  %1737 = vrot.lane.b32.xlu0 %v1729, 32
  %v1738 = vpop.permute.xlu0 %1737
  %v1740 = vmul.f32 %v1728, %v1738
  %1742 = vrot.lane.b32.xlu0 %v1740, 32
  %v1743 = vpop.permute.xlu0 %1742
  %v1745 = vadd.f32 %v1735, %v1743
  %v1746 = vtanh.pop %v1745
  %1748 = vrot.lane.b32.xlu0 %v1746, 32
  %v1749 = vpop.permute.xlu0 %1748
  %v1751 = vmul.f32 %v1728, %v1749
  %1753 = vrot.lane.b32.xlu0 %v1745, 96
  %v1754 = vpop.permute.xlu0 %1753
  %1756 = vst.msk [vmem:[#allocation5] sm:$0xff] %vm51, %v1754
  %1758 = vrot.lane.b32.xlu0 %v1751, 64
  %v1759 = vpop.permute.xlu0 %1758
  %1761 = vst.msk [vmem:[#allocation4] sm:$0xff] %vm51, %v1759
  %1762 = vst.msk [vmem:[%s663] sm:$0xff] %vm51, %v1759
  %v1763 = vld [vmem:[%s665] sm:$0xff]
  %v1764 = vld [vmem:[#allocation4] sm:$0xff]
  %v1766 = vsel %vm51, %v1764, 0
  %1768 = vmatprep.subr.mxu0 0.0
  %1769 = vmatpush1.msra.mxu0 %v1295
  %1770 = vmatprep.subr.mxu0 0.0
  %1771 = vmatpush1.msra.mxu0 %v1296
  %1772 = vmatprep.subr.mxu0 0.0
  %1773 = vmatpush1.msra.mxu0 %v1297
  %1774 = vmatprep.subr.mxu0 0.0
  %1775 = vmatpush1.msra.mxu0 %v1298
  %1776 = vmatprep.subr.mxu0 0.0
  %1777 = vmatpush1.msra.mxu0 0.0
  %1778 = vmatprep.subr.mxu0 0.0
  %1779 = vmatpush1.msra.mxu0 0.0
  %1780 = vmatprep.subr.mxu0 0.0
  %1781 = vmatpush1.msra.mxu0 0.0
  %1782 = vmatprep.subr.mxu0 0.0
  %1783 = vmatpush1.msra.mxu0 0.0
  %1784 = vmatprep.subr.mxu0 0.0
  %1785 = vmatpush1.msra.mxu0 0.0
  %1786 = vmatprep.subr.mxu0 0.0
  %1787 = vmatpush1.msra.mxu0 0.0
  %1788 = vmatprep.subr.mxu0 0.0
  %1789 = vmatpush1.msra.mxu0 0.0
  %1790 = vmatprep.subr.mxu0 0.0
  %1791 = vmatpush1.msra.mxu0 0.0
  %1792 = vmatprep.subr.mxu0 0.0
  %1793 = vmatpush1.msra.mxu0 0.0
  %1794 = vmatprep.subr.mxu0 0.0
  %1795 = vmatpush1.msra.mxu0 0.0
  %1796 = vmatprep.subr.mxu0 0.0
  %1797 = vmatpush1.msra.mxu0 0.0
  %1798 = vmatprep.subr.mxu0 0.0
  %1799 = vmatpush1.msra.mxu0 0.0
  %1800 = vmatprep.subr.mxu0 0.0
  %1801 = vmatpush1.msra.mxu0 0.0
  %1802 = vmatprep.subr.mxu0 0.0
  %1803 = vmatpush1.msra.mxu0 0.0
  %1804 = vmatprep.subr.mxu0 0.0
  %1805 = vmatpush1.msra.mxu0 0.0
  %1806 = vmatprep.subr.mxu0 0.0
  %1807 = vmatpush1.msra.mxu0 0.0
  %1808 = vmatprep.subr.mxu0 0.0
  %1809 = vmatpush1.msra.mxu0 0.0
  %1810 = vmatprep.subr.mxu0 0.0
  %1811 = vmatpush1.msra.mxu0 0.0
  %1812 = vmatprep.subr.mxu0 0.0
  %1813 = vmatpush1.msra.mxu0 0.0
  %1814 = vmatprep.subr.mxu0 0.0
  %1815 = vmatpush1.msra.mxu0 0.0
  %1816 = vmatprep.subr.mxu0 0.0
  %1817 = vmatpush1.msra.mxu0 0.0
  %1818 = vmatprep.subr.mxu0 0.0
  %1819 = vmatpush1.msra.mxu0 0.0
  %1820 = vmatprep.subr.mxu0 0.0
  %1821 = vmatpush1.msra.mxu0 0.0
  %1822 = vmatprep.subr.mxu0 0.0
  %1823 = vmatpush1.msra.mxu0 0.0
  %1824 = vmatprep.subr.mxu0 0.0
  %1825 = vmatpush1.msra.mxu0 0.0
  %1826 = vmatprep.subr.mxu0 0.0
  %1827 = vmatpush1.msra.mxu0 0.0
  %1828 = vmatprep.subr.mxu0 0.0
  %1829 = vmatpush1.msra.mxu0 0.0
  %1830 = vmatprep.subr.mxu0 0.0
  %1831 = vmatpush1.msra.mxu0 0.0
  %1832 = vmatprep.mubr.f32.mxu0 0.0
  %1833 = vmatmul.mubr.f32.gmra.mrb[0].mxu0 %v1766
  %v1834 = vpop.f32.mrb[0].mxu0
  %v1835 = vadd.f32 0.0, %v1834
  %v1836 = vpop.f32.mrb[0].mxu0
  %1837 = vdwg.mxu0
  %v1838 = vadd.f32 %v1763, %v1835
  %v1839 = vxor.u32 %v1838, 2147483648
  %v1840 = vmul.f32 %v1839, 1.442695
  %v1841 = vpow.pop %v1840
  %v1842 = vadd.f32 %v1841, 1.0
  %v1843 = vrcp.pop %v1842
  %v1844 = vmul.f32 1.0, %v1843
  %v1845 = vtanh.pop %v1838
  %v1846 = vld [vmem:[#allocation5] sm:$0xff]
  %1848 = vrot.lane.b32.xlu0 %v1846, 32
  %v1849 = vpop.permute.xlu0 %1848
  %v1851 = vmul.f32 %v1844, %v1849
  %1853 = vrot.lane.b32.xlu0 %v1845, 32
  %v1854 = vpop.permute.xlu0 %1853
  %v1856 = vmul.f32 %v1844, %v1854
  %1858 = vrot.lane.b32.xlu0 %v1856, 32
  %v1859 = vpop.permute.xlu0 %1858
  %v1861 = vadd.f32 %v1851, %v1859
  %v1862 = vtanh.pop %v1861
  %1864 = vrot.lane.b32.xlu0 %v1862, 32
  %v1865 = vpop.permute.xlu0 %1864
  %v1867 = vmul.f32 %v1844, %v1865
  %1869 = vrot.lane.b32.xlu0 %v1861, 96
  %v1870 = vpop.permute.xlu0 %1869
  %1872 = vst.msk [vmem:[#allocation5] sm:$0xff] %vm51, %v1870
  %1874 = vrot.lane.b32.xlu0 %v1867, 64
  %v1875 = vpop.permute.xlu0 %1874
  %1877 = vst.msk [vmem:[#allocation4] sm:$0xff] %vm51, %v1875
  %1878 = vst.msk [vmem:[%s781] sm:$0xff] %vm51, %v1875
  %v1879 = vld [vmem:[%s783] sm:$0xff]
  %v1880 = vld [vmem:[#allocation4] sm:$0xff]
  %v1882 = vsel %vm51, %v1880, 0
  %1884 = vmatprep.subr.mxu0 0.0
  %1885 = vmatpush1.msra.mxu0 %v1295
  %1886 = vmatprep.subr.mxu0 0.0
  %1887 = vmatpush1.msra.mxu0 %v1296
  %1888 = vmatprep.subr.mxu0 0.0
  %1889 = vmatpush1.msra.mxu0 %v1297
  %1890 = vmatprep.subr.mxu0 0.0
  %1891 = vmatpush1.msra.mxu0 %v1298
  %1892 = vmatprep.subr.mxu0 0.0
  %1893 = vmatpush1.msra.mxu0 0.0
  %1894 = vmatprep.subr.mxu0 0.0
  %1895 = vmatpush1.msra.mxu0 0.0
  %1896 = vmatprep.subr.mxu0 0.0
  %1897 = vmatpush1.msra.mxu0 0.0
  %1898 = vmatprep.subr.mxu0 0.0
  %1899 = vmatpush1.msra.mxu0 0.0
  %1900 = vmatprep.subr.mxu0 0.0
  %1901 = vmatpush1.msra.mxu0 0.0
  %1902 = vmatprep.subr.mxu0 0.0
  %1903 = vmatpush1.msra.mxu0 0.0
  %1904 = vmatprep.subr.mxu0 0.0
  %1905 = vmatpush1.msra.mxu0 0.0
  %1906 = vmatprep.subr.mxu0 0.0
  %1907 = vmatpush1.msra.mxu0 0.0
  %1908 = vmatprep.subr.mxu0 0.0
  %1909 = vmatpush1.msra.mxu0 0.0
  %1910 = vmatprep.subr.mxu0 0.0
  %1911 = vmatpush1.msra.mxu0 0.0
  %1912 = vmatprep.subr.mxu0 0.0
  %1913 = vmatpush1.msra.mxu0 0.0
  %1914 = vmatprep.subr.mxu0 0.0
  %1915 = vmatpush1.msra.mxu0 0.0
  %1916 = vmatprep.subr.mxu0 0.0
  %1917 = vmatpush1.msra.mxu0 0.0
  %1918 = vmatprep.subr.mxu0 0.0
  %1919 = vmatpush1.msra.mxu0 0.0
  %1920 = vmatprep.subr.mxu0 0.0
  %1921 = vmatpush1.msra.mxu0 0.0
  %1922 = vmatprep.subr.mxu0 0.0
  %1923 = vmatpush1.msra.mxu0 0.0
  %1924 = vmatprep.subr.mxu0 0.0
  %1925 = vmatpush1.msra.mxu0 0.0
  %1926 = vmatprep.subr.mxu0 0.0
  %1927 = vmatpush1.msra.mxu0 0.0
  %1928 = vmatprep.subr.mxu0 0.0
  %1929 = vmatpush1.msra.mxu0 0.0
  %1930 = vmatprep.subr.mxu0 0.0
  %1931 = vmatpush1.msra.mxu0 0.0
  %1932 = vmatprep.subr.mxu0 0.0
  %1933 = vmatpush1.msra.mxu0 0.0
  %1934 = vmatprep.subr.mxu0 0.0
  %1935 = vmatpush1.msra.mxu0 0.0
  %1936 = vmatprep.subr.mxu0 0.0
  %1937 = vmatpush1.msra.mxu0 0.0
  %1938 = vmatprep.subr.mxu0 0.0
  %1939 = vmatpush1.msra.mxu0 0.0
  %1940 = vmatprep.subr.mxu0 0.0
  %1941 = vmatpush1.msra.mxu0 0.0
  %1942 = vmatprep.subr.mxu0 0.0
  %1943 = vmatpush1.msra.mxu0 0.0
  %1944 = vmatprep.subr.mxu0 0.0
  %1945 = vmatpush1.msra.mxu0 0.0
  %1946 = vmatprep.subr.mxu0 0.0
  %1947 = vmatpush1.msra.mxu0 0.0
  %1948 = vmatprep.mubr.f32.mxu0 0.0
  %1949 = vmatmul.mubr.f32.gmra.mrb[0].mxu0 %v1882
  %v1950 = vpop.f32.mrb[0].mxu0
  %v1951 = vadd.f32 0.0, %v1950
  %v1952 = vpop.f32.mrb[0].mxu0
  %1953 = vdwg.mxu0
  %v1954 = vadd.f32 %v1879, %v1951
  %v1955 = vxor.u32 %v1954, 2147483648
  %v1956 = vmul.f32 %v1955, 1.442695
  %v1957 = vpow.pop %v1956
  %v1958 = vadd.f32 %v1957, 1.0
  %v1959 = vrcp.pop %v1958
  %v1960 = vmul.f32 1.0, %v1959
  %v1961 = vtanh.pop %v1954
  %v1962 = vld [vmem:[#allocation5] sm:$0xff]
  %1964 = vrot.lane.b32.xlu0 %v1962, 32
  %v1965 = vpop.permute.xlu0 %1964
  %v1967 = vmul.f32 %v1960, %v1965
  %1969 = vrot.lane.b32.xlu0 %v1961, 32
  %v1970 = vpop.permute.xlu0 %1969
  %v1972 = vmul.f32 %v1960, %v1970
  %1974 = vrot.lane.b32.xlu0 %v1972, 32
  %v1975 = vpop.permute.xlu0 %1974
  %v1977 = vadd.f32 %v1967, %v1975
  %v1978 = vtanh.pop %v1977
  %1980 = vrot.lane.b32.xlu0 %v1978, 32
  %v1981 = vpop.permute.xlu0 %1980
  %v1983 = vmul.f32 %v1960, %v1981
  %1985 = vrot.lane.b32.xlu0 %v1977, 96
  %v1986 = vpop.permute.xlu0 %1985
  %1988 = vst.msk [vmem:[#allocation5] sm:$0xff] %vm51, %v1986
  %1990 = vrot.lane.b32.xlu0 %v1983, 64
  %v1991 = vpop.permute.xlu0 %1990
  %1993 = vst.msk [vmem:[#allocation4] sm:$0xff] %vm51, %v1991
  %1994 = vst.msk [vmem:[%s899] sm:$0xff] %vm51, %v1991
  %v1995 = vld [vmem:[%s901] sm:$0xff]
  %v1996 = vld [vmem:[#allocation4] sm:$0xff]
  %v1998 = vsel %vm51, %v1996, 0
  %2000 = vmatprep.subr.mxu0 0.0
  %2001 = vmatpush1.msra.mxu0 %v1295
  %2002 = vmatprep.subr.mxu0 0.0
  %2003 = vmatpush1.msra.mxu0 %v1296
  %2004 = vmatprep.subr.mxu0 0.0
  %2005 = vmatpush1.msra.mxu0 %v1297
  %2006 = vmatprep.subr.mxu0 0.0
  %2007 = vmatpush1.msra.mxu0 %v1298
  %2008 = vmatprep.subr.mxu0 0.0
  %2009 = vmatpush1.msra.mxu0 0.0
  %2010 = vmatprep.subr.mxu0 0.0
  %2011 = vmatpush1.msra.mxu0 0.0
  %2012 = vmatprep.subr.mxu0 0.0
  %2013 = vmatpush1.msra.mxu0 0.0
  %2014 = vmatprep.subr.mxu0 0.0
  %2015 = vmatpush1.msra.mxu0 0.0
  %2016 = vmatprep.subr.mxu0 0.0
  %2017 = vmatpush1.msra.mxu0 0.0
  %2018 = vmatprep.subr.mxu0 0.0
  %2019 = vmatpush1.msra.mxu0 0.0
  %2020 = vmatprep.subr.mxu0 0.0
  %2021 = vmatpush1.msra.mxu0 0.0
  %2022 = vmatprep.subr.mxu0 0.0
  %2023 = vmatpush1.msra.mxu0 0.0
  %2024 = vmatprep.subr.mxu0 0.0
  %2025 = vmatpush1.msra.mxu0 0.0
  %2026 = vmatprep.subr.mxu0 0.0
  %2027 = vmatpush1.msra.mxu0 0.0
  %2028 = vmatprep.subr.mxu0 0.0
  %2029 = vmatpush1.msra.mxu0 0.0
  %2030 = vmatprep.subr.mxu0 0.0
  %2031 = vmatpush1.msra.mxu0 0.0
  %2032 = vmatprep.subr.mxu0 0.0
  %2033 = vmatpush1.msra.mxu0 0.0
  %2034 = vmatprep.subr.mxu0 0.0
  %2035 = vmatpush1.msra.mxu0 0.0
  %2036 = vmatprep.subr.mxu0 0.0
  %2037 = vmatpush1.msra.mxu0 0.0
  %2038 = vmatprep.subr.mxu0 0.0
  %2039 = vmatpush1.msra.mxu0 0.0
  %2040 = vmatprep.subr.mxu0 0.0
  %2041 = vmatpush1.msra.mxu0 0.0
  %2042 = vmatprep.subr.mxu0 0.0
  %2043 = vmatpush1.msra.mxu0 0.0
  %2044 = vmatprep.subr.mxu0 0.0
  %2045 = vmatpush1.msra.mxu0 0.0
  %2046 = vmatprep.subr.mxu0 0.0
  %2047 = vmatpush1.msra.mxu0 0.0
  %2048 = vmatprep.subr.mxu0 0.0
  %2049 = vmatpush1.msra.mxu0 0.0
  %2050 = vmatprep.subr.mxu0 0.0
  %2051 = vmatpush1.msra.mxu0 0.0
  %2052 = vmatprep.subr.mxu0 0.0
  %2053 = vmatpush1.msra.mxu0 0.0
  %2054 = vmatprep.subr.mxu0 0.0
  %2055 = vmatpush1.msra.mxu0 0.0
  %2056 = vmatprep.subr.mxu0 0.0
  %2057 = vmatpush1.msra.mxu0 0.0
  %2058 = vmatprep.subr.mxu0 0.0
  %2059 = vmatpush1.msra.mxu0 0.0
  %2060 = vmatprep.subr.mxu0 0.0
  %2061 = vmatpush1.msra.mxu0 0.0
  %2062 = vmatprep.subr.mxu0 0.0
  %2063 = vmatpush1.msra.mxu0 0.0
  %2064 = vmatprep.mubr.f32.mxu0 0.0
  %2065 = vmatmul.mubr.f32.gmra.mrb[0].mxu0 %v1998
  %v2066 = vpop.f32.mrb[0].mxu0
  %v2067 = vadd.f32 0.0, %v2066
  %v2068 = vpop.f32.mrb[0].mxu0
  %2069 = vdwg.mxu0
  %v2070 = vadd.f32 %v1995, %v2067
  %v2071 = vxor.u32 %v2070, 2147483648
  %v2072 = vmul.f32 %v2071, 1.442695
  %v2073 = vpow.pop %v2072
  %v2074 = vadd.f32 %v2073, 1.0
  %v2075 = vrcp.pop %v2074
  %v2076 = vmul.f32 1.0, %v2075
  %v2077 = vtanh.pop %v2070
  %v2078 = vld [vmem:[#allocation5] sm:$0xff]
  %2080 = vrot.lane.b32.xlu0 %v2078, 32
  %v2081 = vpop.permute.xlu0 %2080
  %v2083 = vmul.f32 %v2076, %v2081
  %2085 = vrot.lane.b32.xlu0 %v2077, 32
  %v2086 = vpop.permute.xlu0 %2085
  %v2088 = vmul.f32 %v2076, %v2086
  %2090 = vrot.lane.b32.xlu0 %v2088, 32
  %v2091 = vpop.permute.xlu0 %2090
  %v2093 = vadd.f32 %v2083, %v2091
  %v2094 = vtanh.pop %v2093
  %2096 = vrot.lane.b32.xlu0 %v2094, 32
  %v2097 = vpop.permute.xlu0 %2096
  %v2099 = vmul.f32 %v2076, %v2097
  %2101 = vrot.lane.b32.xlu0 %v2093, 96
  %v2102 = vpop.permute.xlu0 %2101
  %2104 = vst.msk [vmem:[#allocation5] sm:$0xff] %vm51, %v2102
  %2106 = vrot.lane.b32.xlu0 %v2099, 64
  %v2107 = vpop.permute.xlu0 %2106
  %2109 = vst.msk [vmem:[#allocation4] sm:$0xff] %vm51, %v2107
  %2110 = vst.msk [vmem:[%s1017] sm:$0xff] %vm51, %v2107
  %v2111 = vld [vmem:[%s1019] sm:$0xff]
  %v2112 = vld [vmem:[#allocation4] sm:$0xff]
  %v2114 = vsel %vm51, %v2112, 0
  %2116 = vmatprep.subr.mxu0 0.0
  %2117 = vmatpush1.msra.mxu0 %v1295
  %2118 = vmatprep.subr.mxu0 0.0
  %2119 = vmatpush1.msra.mxu0 %v1296
  %2120 = vmatprep.subr.mxu0 0.0
  %2121 = vmatpush1.msra.mxu0 %v1297
  %2122 = vmatprep.subr.mxu0 0.0
  %2123 = vmatpush1.msra.mxu0 %v1298
  %2124 = vmatprep.subr.mxu0 0.0
  %2125 = vmatpush1.msra.mxu0 0.0
  %2126 = vmatprep.subr.mxu0 0.0
  %2127 = vmatpush1.msra.mxu0 0.0
  %2128 = vmatprep.subr.mxu0 0.0
  %2129 = vmatpush1.msra.mxu0 0.0
  %2130 = vmatprep.subr.mxu0 0.0
  %2131 = vmatpush1.msra.mxu0 0.0
  %2132 = vmatprep.subr.mxu0 0.0
  %2133 = vmatpush1.msra.mxu0 0.0
  %2134 = vmatprep.subr.mxu0 0.0
  %2135 = vmatpush1.msra.mxu0 0.0
  %2136 = vmatprep.subr.mxu0 0.0
  %2137 = vmatpush1.msra.mxu0 0.0
  %2138 = vmatprep.subr.mxu0 0.0
  %2139 = vmatpush1.msra.mxu0 0.0
  %2140 = vmatprep.subr.mxu0 0.0
  %2141 = vmatpush1.msra.mxu0 0.0
  %2142 = vmatprep.subr.mxu0 0.0
  %2143 = vmatpush1.msra.mxu0 0.0
  %2144 = vmatprep.subr.mxu0 0.0
  %2145 = vmatpush1.msra.mxu0 0.0
  %2146 = vmatprep.subr.mxu0 0.0
  %2147 = vmatpush1.msra.mxu0 0.0
  %2148 = vmatprep.subr.mxu0 0.0
  %2149 = vmatpush1.msra.mxu0 0.0
  %2150 = vmatprep.subr.mxu0 0.0
  %2151 = vmatpush1.msra.mxu0 0.0
  %2152 = vmatprep.subr.mxu0 0.0
  %2153 = vmatpush1.msra.mxu0 0.0
  %2154 = vmatprep.subr.mxu0 0.0
  %2155 = vmatpush1.msra.mxu0 0.0
  %2156 = vmatprep.subr.mxu0 0.0
  %2157 = vmatpush1.msra.mxu0 0.0
  %2158 = vmatprep.subr.mxu0 0.0
  %2159 = vmatpush1.msra.mxu0 0.0
  %2160 = vmatprep.subr.mxu0 0.0
  %2161 = vmatpush1.msra.mxu0 0.0
  %2162 = vmatprep.subr.mxu0 0.0
  %2163 = vmatpush1.msra.mxu0 0.0
  %2164 = vmatprep.subr.mxu0 0.0
  %2165 = vmatpush1.msra.mxu0 0.0
  %2166 = vmatprep.subr.mxu0 0.0
  %2167 = vmatpush1.msra.mxu0 0.0
  %2168 = vmatprep.subr.mxu0 0.0
  %2169 = vmatpush1.msra.mxu0 0.0
  %2170 = vmatprep.subr.mxu0 0.0
  %2171 = vmatpush1.msra.mxu0 0.0
  %2172 = vmatprep.subr.mxu0 0.0
  %2173 = vmatpush1.msra.mxu0 0.0
  %2174 = vmatprep.subr.mxu0 0.0
  %2175 = vmatpush1.msra.mxu0 0.0
  %2176 = vmatprep.subr.mxu0 0.0
  %2177 = vmatpush1.msra.mxu0 0.0
  %2178 = vmatprep.subr.mxu0 0.0
  %2179 = vmatpush1.msra.mxu0 0.0
  %2180 = vmatprep.mubr.f32.mxu0 0.0
  %2181 = vmatmul.mubr.f32.gmra.mrb[0].mxu0 %v2114
  %v2182 = vpop.f32.mrb[0].mxu0
  %v2183 = vadd.f32 0.0, %v2182
  %v2184 = vpop.f32.mrb[0].mxu0
  %2185 = vdwg.mxu0
  %v2186 = vadd.f32 %v2111, %v2183
  %v2187 = vxor.u32 %v2186, 2147483648
  %v2188 = vmul.f32 %v2187, 1.442695
  %v2189 = vpow.pop %v2188
  %v2190 = vadd.f32 %v2189, 1.0
  %v2191 = vrcp.pop %v2190
  %v2192 = vmul.f32 1.0, %v2191
  %v2193 = vtanh.pop %v2186
  %v2194 = vld [vmem:[#allocation5] sm:$0xff]
  %2196 = vrot.lane.b32.xlu0 %v2194, 32
  %v2197 = vpop.permute.xlu0 %2196
  %v2199 = vmul.f32 %v2192, %v2197
  %2201 = vrot.lane.b32.xlu0 %v2193, 32
  %v2202 = vpop.permute.xlu0 %2201
  %v2204 = vmul.f32 %v2192, %v2202
  %2206 = vrot.lane.b32.xlu0 %v2204, 32
  %v2207 = vpop.permute.xlu0 %2206
  %v2209 = vadd.f32 %v2199, %v2207
  %v2210 = vtanh.pop %v2209
  %2212 = vrot.lane.b32.xlu0 %v2210, 32
  %v2213 = vpop.permute.xlu0 %2212
  %v2215 = vmul.f32 %v2192, %v2213
  %2217 = vrot.lane.b32.xlu0 %v2209, 96
  %v2218 = vpop.permute.xlu0 %2217
  %2220 = vst.msk [vmem:[#allocation5] sm:$0xff] %vm51, %v2218
  %2222 = vrot.lane.b32.xlu0 %v2215, 64
  %v2223 = vpop.permute.xlu0 %2222
  %2225 = vst.msk [vmem:[#allocation4] sm:$0xff] %vm51, %v2223
  %2226 = vst.msk [vmem:[%s1135] sm:$0xff] %vm51, %v2223
  %v2227 = vld [vmem:[#allocation4] sm:$0xff]
  %v2228 = vld [vmem:[%s7] sm:$0xff]
  %v2229 = vld [vmem:[%s7 + $0x8] sm:$0xff]
  %v2230 = vld [vmem:[%s7 + $0x10] sm:$0xff]
  %v2231 = vld [vmem:[%s7 + $0x18] sm:$0xff]
  %v2232 = vld [vmem:[%s8] sm:$0x1]
  %v2234 = vlaneseq
  %v2235 = vshrl.u32 %v2234, 7
  %v2236 = vsub.s32 0, %v2235
  %v2237 = vrot.slane %v2232, %v2236
  %v2240 = vsel %vm51, %v2227, 0
  %2242 = vmatprep.subr.mxu0 0.0
  %2243 = vmatpush1.msra.mxu0 %v2228
  %2244 = vmatprep.subr.mxu0 0.0
  %2245 = vmatpush1.msra.mxu0 %v2229
  %2246 = vmatprep.subr.mxu0 0.0
  %2247 = vmatpush1.msra.mxu0 %v2230
  %2248 = vmatprep.subr.mxu0 0.0
  %2249 = vmatpush1.msra.mxu0 %v2231
  %2250 = vmatprep.subr.mxu0 0.0
  %2251 = vmatpush1.msra.mxu0 0.0
  %2252 = vmatprep.subr.mxu0 0.0
  %2253 = vmatpush1.msra.mxu0 0.0
  %2254 = vmatprep.subr.mxu0 0.0
  %2255 = vmatpush1.msra.mxu0 0.0
  %2256 = vmatprep.subr.mxu0 0.0
  %2257 = vmatpush1.msra.mxu0 0.0
  %2258 = vmatprep.subr.mxu0 0.0
  %2259 = vmatpush1.msra.mxu0 0.0
  %2260 = vmatprep.subr.mxu0 0.0
  %2261 = vmatpush1.msra.mxu0 0.0
  %2262 = vmatprep.subr.mxu0 0.0
  %2263 = vmatpush1.msra.mxu0 0.0
  %2264 = vmatprep.subr.mxu0 0.0
  %2265 = vmatpush1.msra.mxu0 0.0
  %2266 = vmatprep.subr.mxu0 0.0
  %2267 = vmatpush1.msra.mxu0 0.0
  %2268 = vmatprep.subr.mxu0 0.0
  %2269 = vmatpush1.msra.mxu0 0.0
  %2270 = vmatprep.subr.mxu0 0.0
  %2271 = vmatpush1.msra.mxu0 0.0
  %2272 = vmatprep.subr.mxu0 0.0
  %2273 = vmatpush1.msra.mxu0 0.0
  %2274 = vmatprep.subr.mxu0 0.0
  %2275 = vmatpush1.msra.mxu0 0.0
  %2276 = vmatprep.subr.mxu0 0.0
  %2277 = vmatpush1.msra.mxu0 0.0
  %2278 = vmatprep.subr.mxu0 0.0
  %2279 = vmatpush1.msra.mxu0 0.0
  %2280 = vmatprep.subr.mxu0 0.0
  %2281 = vmatpush1.msra.mxu0 0.0
  %2282 = vmatprep.subr.mxu0 0.0
  %2283 = vmatpush1.msra.mxu0 0.0
  %2284 = vmatprep.subr.mxu0 0.0
  %2285 = vmatpush1.msra.mxu0 0.0
  %2286 = vmatprep.subr.mxu0 0.0
  %2287 = vmatpush1.msra.mxu0 0.0
  %2288 = vmatprep.subr.mxu0 0.0
  %2289 = vmatpush1.msra.mxu0 0.0
  %2290 = vmatprep.subr.mxu0 0.0
  %2291 = vmatpush1.msra.mxu0 0.0
  %2292 = vmatprep.subr.mxu0 0.0
  %2293 = vmatpush1.msra.mxu0 0.0
  %2294 = vmatprep.subr.mxu0 0.0
  %2295 = vmatpush1.msra.mxu0 0.0
  %2296 = vmatprep.subr.mxu0 0.0
  %2297 = vmatpush1.msra.mxu0 0.0
  %2298 = vmatprep.subr.mxu0 0.0
  %2299 = vmatpush1.msra.mxu0 0.0
  %2300 = vmatprep.subr.mxu0 0.0
  %2301 = vmatpush1.msra.mxu0 0.0
  %2302 = vmatprep.subr.mxu0 0.0
  %2303 = vmatpush1.msra.mxu0 0.0
  %2304 = vmatprep.subr.mxu0 0.0
  %2305 = vmatpush1.msra.mxu0 0.0
  %2306 = vmatprep.mubr.f32.mxu0 0.0
  %2307 = vmatmul.mubr.f32.gmra.mrb[0].mxu0 %v2240
  %v2308 = vpop.f32.mrb[0].mxu0
  %v2309 = vadd.f32 %v2237, %v2308
  %v2310 = vpop.f32.mrb[0].mxu0
  %2311 = vdwg.mxu0
  %2312 = vst [vmem:[%s9] sm:$0xff] %v2309
  // Predicated region
  $region38: #{lstm_lm_forward.1} parent=0 // pred_check
    _
  $region39: #{lstm_lm_forward.1} parent=0 // pred_check_branch
    %2314 = sbr.rel (0) target = $region41
  $region40: #{lstm_lm_forward.1} parent=0 // pred_region
    _
  $region41: #{lstm_lm_forward.1} parent=0 // pred_fallthru
    _
  // Predicated region
  $region42: #{lstm_lm_forward.1} parent=0 // pred_check
    _
  $region43: #{lstm_lm_forward.1} parent=0 // pred_check_branch
    %2316 = sbr.rel (0) target = $region45
  $region44: #{lstm_lm_forward.1} parent=0 // pred_region
    _
  $region45: #{lstm_lm_forward.1} parent=0 // pred_fallthru
    _

</llo_original>
